<compile_context>
chip_gen: v5e
topology: v5e:2x2
jax: 0.10.0
libtpu: 0.0.40
codegen_flags: <defaults>
</compile_context>

<pallas_src>
import math
import numpy as np

import jax
import jax.numpy as jnp
from jax import lax
from jax.experimental import pallas as pl
from jax.experimental.pallas import tpu as pltpu

IMG_H = 576
IMG_W = 720
CIRCLE_SIZE = 3
N_POINTS = 8
BLOCK_H = 288              # 2 row blocks; 288 % 8 == 0
N_BLOCKS = IMG_H // BLOCK_H


def _grid_semantics():
    # v7x has 2 TensorCores per chip: explicitly shard the 2 row blocks across
    # cores.  Single-TC chips (v5e/v6e): "arbitrary" (plain 'parallel' has
    # ~zero measured effect there, and the grid is just a serial loop).
    try:
        kind = jax.devices()[0].device_kind.lower()
    except Exception:
        kind = ""
    if "v7" in kind or "tpu7" in kind:
        return (pltpu.CORE_PARALLEL,)
    return ("arbitrary",)


# ----------------------------------------------------------------------------
# Pallas kernel: rasterize the 8 lightmark rectangles into one row block.
# ----------------------------------------------------------------------------
def _rasterize_kernel(bounds_ref, out_ref):
    # bounds_ref: SMEM int32 (32,) = 8 x [row_start, row_end, col_start, col_end]
    # out_ref:    VMEM float32 (BLOCK_H, IMG_W) row block of the image
    row0 = pl.program_id(0) * BLOCK_H
    rows = lax.broadcasted_iota(jnp.int32, (BLOCK_H, 1), 0) + row0   # sublane-only
    cols = lax.broadcasted_iota(jnp.int32, (1, IMG_W), 1)            # lane-only

    # Bit-packed separable membership: all per-point work happens on narrow
    # (BLOCK_H,1) / (1,W) vectors; the only full-block ops are one AND, one
    # compare and one convert.
    row_bits = jnp.zeros((BLOCK_H, 1), jnp.int32)
    col_bits = jnp.zeros((1, IMG_W), jnp.int32)
    for p in range(N_POINTS):                    # static unroll, 8 points
        rs = bounds_ref[4 * p + 0]
        re = bounds_ref[4 * p + 1]
        cs = bounds_ref[4 * p + 2]
        ce = bounds_ref[4 * p + 3]
        bit = jnp.int32(1 << p)
        row_bits = row_bits | jnp.where((rows >= rs) & (rows < re), bit, 0)
        col_bits = col_bits | jnp.where((cols >= cs) & (cols < ce), bit, 0)

    hit = (row_bits & col_bits) != 0             # broadcast -> (BLOCK_H, IMG_W)
    out_ref[...] = hit.astype(jnp.float32)


def rasterize_lightmarks(bounds):
    """bounds: int32 (N_POINTS, 4) -> float32 (IMG_H, IMG_W) lightmark image."""
    bounds_flat = bounds.reshape(-1).astype(jnp.int32)   # (32,) 1-D scalars
    return pl.pallas_call(
        _rasterize_kernel,
        out_shape=jax.ShapeDtypeStruct((IMG_H, IMG_W), jnp.float32),
        grid_spec=pltpu.PrefetchScalarGridSpec(
            num_scalar_prefetch=1,
            grid=(N_BLOCKS,),
            in_specs=[],
            # Last block dim == full array dim satisfies the (8,128) tiling
            # rule; storing 720-wide rows directly avoids a post-kernel slice
            # (a whole extra HBM round trip) at the cost of one masked vst on
            # the final lane group.
            out_specs=pl.BlockSpec((BLOCK_H, IMG_W), lambda i, bounds: (i, 0)),
        ),
        compiler_params=pltpu.CompilerParams(
            dimension_semantics=_grid_semantics()),
        cost_estimate=pl.CostEstimate(
            flops=0,
            transcendentals=0,
            bytes_accessed=IMG_H * IMG_W * 4 + N_POINTS * 4 * 4),
    )(bounds_flat)


# ----------------------------------------------------------------------------
# Plain-JAX glue reproducing LightmarkGenerator.forward semantics.
# ----------------------------------------------------------------------------
def _euler_to_rotmat(theta):
    c0, c1, c2 = jnp.cos(theta[0]), jnp.cos(theta[1]), jnp.cos(theta[2])
    s0, s1, s2 = jnp.sin(theta[0]), jnp.sin(theta[1]), jnp.sin(theta[2])
    one = jnp.float32(1.0)
    zero = jnp.float32(0.0)
    R_x = jnp.stack([jnp.stack([one, zero, zero]),
                     jnp.stack([zero, c0, -s0]),
                     jnp.stack([zero, s0, c0])])
    R_y = jnp.stack([jnp.stack([c1, zero, s1]),
                     jnp.stack([zero, one, zero]),
                     jnp.stack([-s1, zero, c1])])
    R_z = jnp.stack([jnp.stack([c2, -s2, zero]),
                     jnp.stack([s2, c2, zero]),
                     jnp.stack([zero, zero, one])])
    return R_z @ (R_y @ R_x)


def _build_constants():
    kx, ky, u0, v0 = 633.5915, 695.2624, 364.5163, 234.3574
    intrin = np.array([[kx, 0, u0], [0, ky, v0], [0, 0, 1]], dtype=np.float32)

    r_station = 1027.0 + 34.0
    degs = [63.0, 27.0, 333.0, 297.0, 243.0, 207.0, 153.0, 117.0]
    xs = [r_station * math.cos(np.deg2rad(d)) for d in degs]
    ys = [-r_station * math.sin(np.deg2rad(d)) for d in degs]
    Pw = np.array([xs, ys, [0.0] * 8], dtype=np.float64)
    Pw_hom = np.concatenate([Pw, np.ones((1, Pw.shape[1]))], axis=0)
    return jnp.asarray(intrin, jnp.float32), jnp.asarray(Pw_hom, jnp.float32)


def _compute_puv(eulermat, Tmatrix):
    intrin, Pw_hom = _build_constants()
    euler_rad = eulermat * (math.pi / 180.0)
    R = _euler_to_rotmat(euler_rad)
    RT = jnp.concatenate([R, Tmatrix[:, None]], axis=1)
    RT_hom = jnp.concatenate(
        [RT, jnp.array([[0.0, 0.0, 0.0, 1.0]], dtype=RT.dtype)], axis=0)
    Pc_hom = RT_hom @ Pw_hom                       # (4, 8)
    Pc = Pc_hom[0:3, :].astype(jnp.float32)        # (3, 8)
    # TODO(synk): no guard for Pc[2,:] <= 0 (point at/behind camera) -> inf/NaN,
    # matching the PyTorch reference behavior.
    Puv_hom = (intrin @ Pc) / Pc[2, :]             # (3, 8)
    return Puv_hom[0:2, :]                         # (2, 8) pixel coords (u, v)


def _puv_to_bounds(Puv):
    row = Puv[1, :].astype(jnp.int32)
    col = Puv[0, :].astype(jnp.int32)
    row_start = jnp.maximum(row - CIRCLE_SIZE, 0)
    row_end = jnp.minimum(row + CIRCLE_SIZE, IMG_H)
    col_start = jnp.maximum(col - CIRCLE_SIZE, 0)
    col_end = jnp.minimum(col + CIRCLE_SIZE, IMG_W)
    # Match Python/PyTorch slicing semantics for far off-screen points:
    # img[rs:re] with a negative end index wraps around (re -> H + re).
    row_end = jnp.where(row_end < 0, row_end + IMG_H, row_end)
    col_end = jnp.where(col_end < 0, col_end + IMG_W, col_end)
    return jnp.stack([row_start, row_end, col_start, col_end],
                     axis=1).astype(jnp.int32)     # (8, 4)


def lightmark_forward(eulermat, Tmatrix, margin_rand):
    Puv = _compute_puv(eulermat, Tmatrix)
    bounds = _puv_to_bounds(Puv)
    lightmark_img = rasterize_lightmarks(bounds)

    margin = jnp.int32(10) + (margin_rand * 10.0).astype(jnp.int32)
    left = jnp.maximum(jnp.min(Puv[0, :]).astype(jnp.int32) - margin, 0)
    right = jnp.minimum(jnp.max(Puv[0, :]).astype(jnp.int32) + margin, IMG_W)
    top = jnp.maximum(jnp.min(Puv[1, :]).astype(jnp.int32) - margin, 0)
    bottom = jnp.minimum(jnp.max(Puv[1, :]).astype(jnp.int32) + margin, IMG_H)
    bbox = [top, bottom, left, right]
    return lightmark_img, bbox


# ----------------------------------------------------------------------------
# Pure-numpy reference of the rasterization for a correctness check.
# ----------------------------------------------------------------------------
def _rasterize_ref(bounds):
    img = np.zeros((IMG_H, IMG_W), dtype=np.float32)
    for rs, re, cs, ce in np.asarray(bounds):
        img[rs:re, cs:ce] = 1.0
    return img


if __name__ == "__main__":
    key = jax.random.PRNGKey(0)
    k_euler, k_margin = jax.random.split(key)

    # Parameters (shapes match the module's __init__): small deterministic
    # perturbation of the default pose so the rotation math is exercised.
    eulermat = jax.random.uniform(k_euler, (3,), jnp.float32,
                                  minval=-3.0, maxval=3.0)   # degrees
    Tmatrix = jnp.array([0.0, 0.0, 8000.0], dtype=jnp.float32)
    # torch.rand(1) stand-in for the bbox margin randomness (deterministic here).
    margin_rand = jax.random.uniform(k_margin, (), jnp.float32)

    img, bbox = jax.jit(lightmark_forward)(eulermat, Tmatrix, margin_rand)
    img = jax.block_until_ready(img)
    bbox = [int(b) for b in bbox]

    # Cross-check the Pallas rasterization against the numpy reference,
    # built from the exact same integer bounds.
    bounds_np = np.asarray(_puv_to_bounds(_compute_puv(eulermat, Tmatrix)))
    ref = _rasterize_ref(bounds_np)
    np.testing.assert_allclose(np.asarray(img), ref, atol=0, rtol=0)

    assert img.shape == (IMG_H, IMG_W) and img.dtype == jnp.float32
    assert len(bbox) == 4
    assert float(np.asarray(img).sum()) > 0.0   # rectangles actually drawn
    print("KERNEL_OK")
</pallas_src>

<mosaic_0001>
module attributes {stable_mosaic.version = 11 : i64} {
  func.func @_rasterize_kernel(%arg0: i32, %arg1: memref<32xi32, #tpu.memory_space<smem>>, %arg2: memref<288x720xf32, #tpu.memory_space<vmem>>) attributes {dimension_semantics = [#tpu.dimension_semantics<arbitrary>], iteration_bounds = array<i64: 2>, scalar_prefetch = 1 : i64, scratch_operands = 0 : i64, tpu.core_type = #tpu.core_type<tc>, window_params = [{transform_indices = @transform_0, window_bounds = array<i64: 288, 720>}]} {
    %c288_i32 = arith.constant 288 : i32
    %0 = arith.muli %arg0, %c288_i32 : i32
    %1 = tpu.iota {dimensions = array<i32: 0>} : vector<288x1xi32>
    %2 = vector.broadcast %0 : i32 to vector<288x1xi32>
    %3 = arith.addi %1, %2 : vector<288x1xi32>
    %4 = tpu.iota {dimensions = array<i32: 1>} : vector<1x720xi32>
    %c0_i32 = arith.constant 0 : i32
    %5 = vector.broadcast %c0_i32 : i32 to vector<288x1xi32>
    %c0_i32_0 = arith.constant 0 : i32
    %6 = vector.broadcast %c0_i32_0 : i32 to vector<1x720xi32>
    %c0 = arith.constant 0 : index
    %7 = memref.load %arg1[%c0] : memref<32xi32, #tpu.memory_space<smem>>
    %c1 = arith.constant 1 : index
    %8 = memref.load %arg1[%c1] : memref<32xi32, #tpu.memory_space<smem>>
    %c2 = arith.constant 2 : index
    %9 = memref.load %arg1[%c2] : memref<32xi32, #tpu.memory_space<smem>>
    %c3 = arith.constant 3 : index
    %10 = memref.load %arg1[%c3] : memref<32xi32, #tpu.memory_space<smem>>
    %11 = vector.broadcast %7 : i32 to vector<288x1xi32>
    %12 = arith.cmpi sge, %3, %11 : vector<288x1xi32>
    %13 = vector.broadcast %8 : i32 to vector<288x1xi32>
    %14 = arith.cmpi slt, %3, %13 : vector<288x1xi32>
    %15 = arith.andi %12, %14 : vector<288x1xi1>
    %c1_i32 = arith.constant 1 : i32
    %c0_i32_1 = arith.constant 0 : i32
    %16 = vector.broadcast %c1_i32 : i32 to vector<288x1xi32>
    %17 = vector.broadcast %c0_i32_1 : i32 to vector<288x1xi32>
    %18 = arith.select %15, %16, %17 : vector<288x1xi1>, vector<288x1xi32>
    %19 = arith.ori %5, %18 : vector<288x1xi32>
    %20 = vector.broadcast %9 : i32 to vector<1x720xi32>
    %21 = arith.cmpi sge, %4, %20 : vector<1x720xi32>
    %22 = vector.broadcast %10 : i32 to vector<1x720xi32>
    %23 = arith.cmpi slt, %4, %22 : vector<1x720xi32>
    %24 = arith.andi %21, %23 : vector<1x720xi1>
    %c1_i32_2 = arith.constant 1 : i32
    %c0_i32_3 = arith.constant 0 : i32
    %25 = vector.broadcast %c1_i32_2 : i32 to vector<1x720xi32>
    %26 = vector.broadcast %c0_i32_3 : i32 to vector<1x720xi32>
    %27 = arith.select %24, %25, %26 : vector<1x720xi1>, vector<1x720xi32>
    %28 = arith.ori %6, %27 : vector<1x720xi32>
    %c4 = arith.constant 4 : index
    %29 = memref.load %arg1[%c4] : memref<32xi32, #tpu.memory_space<smem>>
    %c5 = arith.constant 5 : index
    %30 = memref.load %arg1[%c5] : memref<32xi32, #tpu.memory_space<smem>>
    %c6 = arith.constant 6 : index
    %31 = memref.load %arg1[%c6] : memref<32xi32, #tpu.memory_space<smem>>
    %c7 = arith.constant 7 : index
    %32 = memref.load %arg1[%c7] : memref<32xi32, #tpu.memory_space<smem>>
    %33 = vector.broadcast %29 : i32 to vector<288x1xi32>
    %34 = arith.cmpi sge, %3, %33 : vector<288x1xi32>
    %35 = vector.broadcast %30 : i32 to vector<288x1xi32>
    %36 = arith.cmpi slt, %3, %35 : vector<288x1xi32>
    %37 = arith.andi %34, %36 : vector<288x1xi1>
    %c2_i32 = arith.constant 2 : i32
    %c0_i32_4 = arith.constant 0 : i32
    %38 = vector.broadcast %c2_i32 : i32 to vector<288x1xi32>
    %39 = vector.broadcast %c0_i32_4 : i32 to vector<288x1xi32>
    %40 = arith.select %37, %38, %39 : vector<288x1xi1>, vector<288x1xi32>
    %41 = arith.ori %19, %40 : vector<288x1xi32>
    %42 = vector.broadcast %31 : i32 to vector<1x720xi32>
    %43 = arith.cmpi sge, %4, %42 : vector<1x720xi32>
    %44 = vector.broadcast %32 : i32 to vector<1x720xi32>
    %45 = arith.cmpi slt, %4, %44 : vector<1x720xi32>
    %46 = arith.andi %43, %45 : vector<1x720xi1>
    %c2_i32_5 = arith.constant 2 : i32
    %c0_i32_6 = arith.constant 0 : i32
    %47 = vector.broadcast %c2_i32_5 : i32 to vector<1x720xi32>
    %48 = vector.broadcast %c0_i32_6 : i32 to vector<1x720xi32>
    %49 = arith.select %46, %47, %48 : vector<1x720xi1>, vector<1x720xi32>
    %50 = arith.ori %28, %49 : vector<1x720xi32>
    %c8 = arith.constant 8 : index
    %51 = memref.load %arg1[%c8] : memref<32xi32, #tpu.memory_space<smem>>
    %c9 = arith.constant 9 : index
    %52 = memref.load %arg1[%c9] : memref<32xi32, #tpu.memory_space<smem>>
    %c10 = arith.constant 10 : index
    %53 = memref.load %arg1[%c10] : memref<32xi32, #tpu.memory_space<smem>>
    %c11 = arith.constant 11 : index
    %54 = memref.load %arg1[%c11] : memref<32xi32, #tpu.memory_space<smem>>
    %55 = vector.broadcast %51 : i32 to vector<288x1xi32>
    %56 = arith.cmpi sge, %3, %55 : vector<288x1xi32>
    %57 = vector.broadcast %52 : i32 to vector<288x1xi32>
    %58 = arith.cmpi slt, %3, %57 : vector<288x1xi32>
    %59 = arith.andi %56, %58 : vector<288x1xi1>
    %c4_i32 = arith.constant 4 : i32
    %c0_i32_7 = arith.constant 0 : i32
    %60 = vector.broadcast %c4_i32 : i32 to vector<288x1xi32>
    %61 = vector.broadcast %c0_i32_7 : i32 to vector<288x1xi32>
    %62 = arith.select %59, %60, %61 : vector<288x1xi1>, vector<288x1xi32>
    %63 = arith.ori %41, %62 : vector<288x1xi32>
    %64 = vector.broadcast %53 : i32 to vector<1x720xi32>
    %65 = arith.cmpi sge, %4, %64 : vector<1x720xi32>
    %66 = vector.broadcast %54 : i32 to vector<1x720xi32>
    %67 = arith.cmpi slt, %4, %66 : vector<1x720xi32>
    %68 = arith.andi %65, %67 : vector<1x720xi1>
    %c4_i32_8 = arith.constant 4 : i32
    %c0_i32_9 = arith.constant 0 : i32
    %69 = vector.broadcast %c4_i32_8 : i32 to vector<1x720xi32>
    %70 = vector.broadcast %c0_i32_9 : i32 to vector<1x720xi32>
    %71 = arith.select %68, %69, %70 : vector<1x720xi1>, vector<1x720xi32>
    %72 = arith.ori %50, %71 : vector<1x720xi32>
    %c12 = arith.constant 12 : index
    %73 = memref.load %arg1[%c12] : memref<32xi32, #tpu.memory_space<smem>>
    %c13 = arith.constant 13 : index
    %74 = memref.load %arg1[%c13] : memref<32xi32, #tpu.memory_space<smem>>
    %c14 = arith.constant 14 : index
    %75 = memref.load %arg1[%c14] : memref<32xi32, #tpu.memory_space<smem>>
    %c15 = arith.constant 15 : index
    %76 = memref.load %arg1[%c15] : memref<32xi32, #tpu.memory_space<smem>>
    %77 = vector.broadcast %73 : i32 to vector<288x1xi32>
    %78 = arith.cmpi sge, %3, %77 : vector<288x1xi32>
    %79 = vector.broadcast %74 : i32 to vector<288x1xi32>
    %80 = arith.cmpi slt, %3, %79 : vector<288x1xi32>
    %81 = arith.andi %78, %80 : vector<288x1xi1>
    %c8_i32 = arith.constant 8 : i32
    %c0_i32_10 = arith.constant 0 : i32
    %82 = vector.broadcast %c8_i32 : i32 to vector<288x1xi32>
    %83 = vector.broadcast %c0_i32_10 : i32 to vector<288x1xi32>
    %84 = arith.select %81, %82, %83 : vector<288x1xi1>, vector<288x1xi32>
    %85 = arith.ori %63, %84 : vector<288x1xi32>
    %86 = vector.broadcast %75 : i32 to vector<1x720xi32>
    %87 = arith.cmpi sge, %4, %86 : vector<1x720xi32>
    %88 = vector.broadcast %76 : i32 to vector<1x720xi32>
    %89 = arith.cmpi slt, %4, %88 : vector<1x720xi32>
    %90 = arith.andi %87, %89 : vector<1x720xi1>
    %c8_i32_11 = arith.constant 8 : i32
    %c0_i32_12 = arith.constant 0 : i32
    %91 = vector.broadcast %c8_i32_11 : i32 to vector<1x720xi32>
    %92 = vector.broadcast %c0_i32_12 : i32 to vector<1x720xi32>
    %93 = arith.select %90, %91, %92 : vector<1x720xi1>, vector<1x720xi32>
    %94 = arith.ori %72, %93 : vector<1x720xi32>
    %c16 = arith.constant 16 : index
    %95 = memref.load %arg1[%c16] : memref<32xi32, #tpu.memory_space<smem>>
    %c17 = arith.constant 17 : index
    %96 = memref.load %arg1[%c17] : memref<32xi32, #tpu.memory_space<smem>>
    %c18 = arith.constant 18 : index
    %97 = memref.load %arg1[%c18] : memref<32xi32, #tpu.memory_space<smem>>
    %c19 = arith.constant 19 : index
    %98 = memref.load %arg1[%c19] : memref<32xi32, #tpu.memory_space<smem>>
    %99 = vector.broadcast %95 : i32 to vector<288x1xi32>
    %100 = arith.cmpi sge, %3, %99 : vector<288x1xi32>
    %101 = vector.broadcast %96 : i32 to vector<288x1xi32>
    %102 = arith.cmpi slt, %3, %101 : vector<288x1xi32>
    %103 = arith.andi %100, %102 : vector<288x1xi1>
    %c16_i32 = arith.constant 16 : i32
    %c0_i32_13 = arith.constant 0 : i32
    %104 = vector.broadcast %c16_i32 : i32 to vector<288x1xi32>
    %105 = vector.broadcast %c0_i32_13 : i32 to vector<288x1xi32>
    %106 = arith.select %103, %104, %105 : vector<288x1xi1>, vector<288x1xi32>
    %107 = arith.ori %85, %106 : vector<288x1xi32>
    %108 = vector.broadcast %97 : i32 to vector<1x720xi32>
    %109 = arith.cmpi sge, %4, %108 : vector<1x720xi32>
    %110 = vector.broadcast %98 : i32 to vector<1x720xi32>
    %111 = arith.cmpi slt, %4, %110 : vector<1x720xi32>
    %112 = arith.andi %109, %111 : vector<1x720xi1>
    %c16_i32_14 = arith.constant 16 : i32
    %c0_i32_15 = arith.constant 0 : i32
    %113 = vector.broadcast %c16_i32_14 : i32 to vector<1x720xi32>
    %114 = vector.broadcast %c0_i32_15 : i32 to vector<1x720xi32>
    %115 = arith.select %112, %113, %114 : vector<1x720xi1>, vector<1x720xi32>
    %116 = arith.ori %94, %115 : vector<1x720xi32>
    %c20 = arith.constant 20 : index
    %117 = memref.load %arg1[%c20] : memref<32xi32, #tpu.memory_space<smem>>
    %c21 = arith.constant 21 : index
    %118 = memref.load %arg1[%c21] : memref<32xi32, #tpu.memory_space<smem>>
    %c22 = arith.constant 22 : index
    %119 = memref.load %arg1[%c22] : memref<32xi32, #tpu.memory_space<smem>>
    %c23 = arith.constant 23 : index
    %120 = memref.load %arg1[%c23] : memref<32xi32, #tpu.memory_space<smem>>
    %121 = vector.broadcast %117 : i32 to vector<288x1xi32>
    %122 = arith.cmpi sge, %3, %121 : vector<288x1xi32>
    %123 = vector.broadcast %118 : i32 to vector<288x1xi32>
    %124 = arith.cmpi slt, %3, %123 : vector<288x1xi32>
    %125 = arith.andi %122, %124 : vector<288x1xi1>
    %c32_i32 = arith.constant 32 : i32
    %c0_i32_16 = arith.constant 0 : i32
    %126 = vector.broadcast %c32_i32 : i32 to vector<288x1xi32>
    %127 = vector.broadcast %c0_i32_16 : i32 to vector<288x1xi32>
    %128 = arith.select %125, %126, %127 : vector<288x1xi1>, vector<288x1xi32>
    %129 = arith.ori %107, %128 : vector<288x1xi32>
    %130 = vector.broadcast %119 : i32 to vector<1x720xi32>
    %131 = arith.cmpi sge, %4, %130 : vector<1x720xi32>
    %132 = vector.broadcast %120 : i32 to vector<1x720xi32>
    %133 = arith.cmpi slt, %4, %132 : vector<1x720xi32>
    %134 = arith.andi %131, %133 : vector<1x720xi1>
    %c32_i32_17 = arith.constant 32 : i32
    %c0_i32_18 = arith.constant 0 : i32
    %135 = vector.broadcast %c32_i32_17 : i32 to vector<1x720xi32>
    %136 = vector.broadcast %c0_i32_18 : i32 to vector<1x720xi32>
    %137 = arith.select %134, %135, %136 : vector<1x720xi1>, vector<1x720xi32>
    %138 = arith.ori %116, %137 : vector<1x720xi32>
    %c24 = arith.constant 24 : index
    %139 = memref.load %arg1[%c24] : memref<32xi32, #tpu.memory_space<smem>>
    %c25 = arith.constant 25 : index
    %140 = memref.load %arg1[%c25] : memref<32xi32, #tpu.memory_space<smem>>
    %c26 = arith.constant 26 : index
    %141 = memref.load %arg1[%c26] : memref<32xi32, #tpu.memory_space<smem>>
    %c27 = arith.constant 27 : index
    %142 = memref.load %arg1[%c27] : memref<32xi32, #tpu.memory_space<smem>>
    %143 = vector.broadcast %139 : i32 to vector<288x1xi32>
    %144 = arith.cmpi sge, %3, %143 : vector<288x1xi32>
    %145 = vector.broadcast %140 : i32 to vector<288x1xi32>
    %146 = arith.cmpi slt, %3, %145 : vector<288x1xi32>
    %147 = arith.andi %144, %146 : vector<288x1xi1>
    %c64_i32 = arith.constant 64 : i32
    %c0_i32_19 = arith.constant 0 : i32
    %148 = vector.broadcast %c64_i32 : i32 to vector<288x1xi32>
    %149 = vector.broadcast %c0_i32_19 : i32 to vector<288x1xi32>
    %150 = arith.select %147, %148, %149 : vector<288x1xi1>, vector<288x1xi32>
    %151 = arith.ori %129, %150 : vector<288x1xi32>
    %152 = vector.broadcast %141 : i32 to vector<1x720xi32>
    %153 = arith.cmpi sge, %4, %152 : vector<1x720xi32>
    %154 = vector.broadcast %142 : i32 to vector<1x720xi32>
    %155 = arith.cmpi slt, %4, %154 : vector<1x720xi32>
    %156 = arith.andi %153, %155 : vector<1x720xi1>
    %c64_i32_20 = arith.constant 64 : i32
    %c0_i32_21 = arith.constant 0 : i32
    %157 = vector.broadcast %c64_i32_20 : i32 to vector<1x720xi32>
    %158 = vector.broadcast %c0_i32_21 : i32 to vector<1x720xi32>
    %159 = arith.select %156, %157, %158 : vector<1x720xi1>, vector<1x720xi32>
    %160 = arith.ori %138, %159 : vector<1x720xi32>
    %c28 = arith.constant 28 : index
    %161 = memref.load %arg1[%c28] : memref<32xi32, #tpu.memory_space<smem>>
    %c29 = arith.constant 29 : index
    %162 = memref.load %arg1[%c29] : memref<32xi32, #tpu.memory_space<smem>>
    %c30 = arith.constant 30 : index
    %163 = memref.load %arg1[%c30] : memref<32xi32, #tpu.memory_space<smem>>
    %c31 = arith.constant 31 : index
    %164 = memref.load %arg1[%c31] : memref<32xi32, #tpu.memory_space<smem>>
    %165 = vector.broadcast %161 : i32 to vector<288x1xi32>
    %166 = arith.cmpi sge, %3, %165 : vector<288x1xi32>
    %167 = vector.broadcast %162 : i32 to vector<288x1xi32>
    %168 = arith.cmpi slt, %3, %167 : vector<288x1xi32>
    %169 = arith.andi %166, %168 : vector<288x1xi1>
    %c128_i32 = arith.constant 128 : i32
    %c0_i32_22 = arith.constant 0 : i32
    %170 = vector.broadcast %c128_i32 : i32 to vector<288x1xi32>
    %171 = vector.broadcast %c0_i32_22 : i32 to vector<288x1xi32>
    %172 = arith.select %169, %170, %171 : vector<288x1xi1>, vector<288x1xi32>
    %173 = arith.ori %151, %172 : vector<288x1xi32>
    %174 = vector.broadcast %163 : i32 to vector<1x720xi32>
    %175 = arith.cmpi sge, %4, %174 : vector<1x720xi32>
    %176 = vector.broadcast %164 : i32 to vector<1x720xi32>
    %177 = arith.cmpi slt, %4, %176 : vector<1x720xi32>
    %178 = arith.andi %175, %177 : vector<1x720xi1>
    %c128_i32_23 = arith.constant 128 : i32
    %c0_i32_24 = arith.constant 0 : i32
    %179 = vector.broadcast %c128_i32_23 : i32 to vector<1x720xi32>
    %180 = vector.broadcast %c0_i32_24 : i32 to vector<1x720xi32>
    %181 = arith.select %178, %179, %180 : vector<1x720xi1>, vector<1x720xi32>
    %182 = arith.ori %160, %181 : vector<1x720xi32>
    %183 = vector.broadcast %173 : vector<288x1xi32> to vector<288x720xi32>
    %184 = vector.broadcast %182 : vector<1x720xi32> to vector<288x720xi32>
    %185 = arith.andi %183, %184 : vector<288x720xi32>
    %c0_i32_25 = arith.constant 0 : i32
    %186 = vector.broadcast %c0_i32_25 : i32 to vector<288x720xi32>
    %187 = arith.cmpi ne, %185, %186 : vector<288x720xi32>
    %188 = arith.extui %187 : vector<288x720xi1> to vector<288x720xi32>
    %189 = arith.sitofp %188 : vector<288x720xi32> to vector<288x720xf32>
    %c0_26 = arith.constant 0 : index
    %c0_27 = arith.constant 0 : index
    %190 = vector.load %arg2[%c0_26, %c0_27] : memref<288x720xf32, #tpu.memory_space<vmem>>, vector<288x720xf32>
    tpu.vector_store %arg2[%c0_26, %c0_27], %189 {strides = array<i32>} : memref<288x720xf32, #tpu.memory_space<vmem>>, vector<288x720xf32>,
    return
  }
  func.func @transform_0(%arg0: i32, %arg1: memref<32xi32, #tpu.memory_space<smem>>) -> (i32, i32) {
    %c0_i32 = arith.constant 0 : i32
    %c0_i32_0 = arith.constant 0 : i32
    return %arg0, %c0_i32 : i32, i32
  }
}

</mosaic_0001>

<llo_original>
// kernel: lightmark_forward.1
$region0: #{lightmark_forward.1}
  #allocation0 [shape = 'u32[]', space=smem, size = 0x4, offset = 0x4, fixed_abs, tag = 'smem constant byte address 0x4 - core index']
  #allocation1 [shape = 'u32[72,128]{1,0:T(1,128)}', space=vmem, size = 0x9000, scoped, tag = 'internal scratch']
  #allocation2 [shape = 's32[1]{0}', space=sflag, size = 0x4, scoped, tag = 'scoped memory for lightmark_forward.1']
  #allocation3 [shape = 'u8[512]{0}', space=smem, size = 0x200, scoped, tag = 'prefetched SMEM operand 0']
  %s0 = inlined_call_operand.vmem [shape: s32[32], index: 0, kind: input, shape index: {}]
  %s1 = inlined_call_operand.hbm [shape: f32[576,720], index: 1, kind: output, shape index: {}]
  %s2 = sld [smem:[#allocation0]]
  $region25: #{lightmark_forward.1} parent=0
    _
  %s4 = ssub.s32 1, %s2
  %s5 = scalar_select 0, %s4, %s2
  %s7 = sshll.u32 %s0, 4
  %s8 = int_to_ptr.vmem [resolvable:$true] %s7
  %10 = dma.vmem_to_smem %s8, 16, [#allocation3], [#allocation2]
  %12 = dma.done [#allocation2], 16
  %13 = sfence
  $region1: #{lightmark_forward.1} parent=0
    #allocation4 [shape = 'u8[1769472]{0}', space=vmem, size = 0x1b0000, scoped, tag = 'output window, operand 0']
    #allocation5 [shape = 's32[2]{0}', space=sflag, size = 0x8, scoped, tag = 'scoped memory for lightmark_forward.1']
    %14 = vsyncpa [#allocation5], 0
    %s15 = scalar_lea.sflag [#allocation5], 1
    %16 = vsyncpa %s15, 0
    loop: start=0, step=1, limit=3
    $region2: #{lightmark_forward.1} parent=1 // loop_pre_header
      _
    $region3: #{lightmark_forward.1} parent=1 // loop_header
      %s18 = sphi 0, %s22
      %p19 = scmp.ge.s32.totalorder %s18, 3
      %s27 = sphi 0, %s29
      %s30 = sphi 0, %s27
      %s40 = sphi 0, %s30
    $region4: #{lightmark_forward.1} parent=1 // loop_header_branch
      %21 = sbr.rel (%p19) target = $region8
    $region5: #{lightmark_forward.1} parent=1 // loop_body
      %s23 = ssub.s32 %s18, 1
      %s24 = sadd.s32 %s18, 1
      %s25 = ssub.s32 %s18, %s24
      %p26 = scmp.eq.s32.totalorder %s25, 0
      %s28 = sadd.s32 %s27, 1
      %s29 = scalar_select %p26, %s27, %s28
      %p31 = pneg %p26
      %p32 = scmp.eq.s32.totalorder %s18, 1
      %p33 = por %p31, %p32
      %p34 = scmp.ne.s32.totalorder %s27, %s30
      %p35 = scmp.eq.s32.totalorder %s18, 0
      %p36 = por %p34, %p35
      %p37 = scmp.ne.s32.totalorder %s27, %s30
      %p38 = scmp.eq.s32.totalorder %s23, 1
      %p39 = por %p37, %p38
      %p41 = scmp.ne.s32.totalorder %s30, %s40
      %p42 = scmp.eq.s32.totalorder %s23, 0
      %p43 = por %p41, %p42
      %p44 = scmp.lt.s32.totalorder %s18, 2
      // Predicated region
      $region9: #{lightmark_forward.1} parent=5 // pred_check
        %p45 = pneg %p44
      $region10: #{lightmark_forward.1} parent=5 // pred_check_branch
        %47 = sbr.rel (%p45) target = $region12
      $region11: #{lightmark_forward.1} parent=5 // pred_region
        %p48 = pneg %p36
        %p49 = pneg %p33
        %s50 = sand.u32 %s27, 1
        %s51 = scalar_lea.sflag [#allocation5], %s50
        %s52 = sand.u32 %s27, 1
        %s53 = smul.addr %s52, 1728
        %s54 = scalar_lea.vmem [#allocation4], %s53
        %s55 = smul.u32 36, %s18
        %s56 = smul.u32 %s18, 288
        %v57 = vlaneseq
        %v58 = vshrl.u32 %v57, 7
        %v59 = vadd.s32 %v58, 8
        %v60 = vadd.s32 %v58, 16
        %v61 = vadd.s32 %v58, 24
        %v62 = vadd.s32 %v58, 32
        %v63 = vadd.s32 %v58, 40
        %v64 = vadd.s32 %v58, 48
        %v65 = vadd.s32 %v58, 56
        %v66 = vadd.s32 %v58, 64
        %v67 = vadd.s32 %v58, 72
        %v68 = vadd.s32 %v58, 80
        %v69 = vadd.s32 %v58, 88
        %v70 = vadd.s32 %v58, 96
        %v71 = vadd.s32 %v58, 104
        %v72 = vadd.s32 %v58, 112
        %v73 = vadd.s32 %v58, 120
        %v74 = vadd.s32 %v58, 128
        %v75 = vadd.s32 %v58, 136
        %v76 = vadd.s32 %v58, 144
        %v77 = vadd.s32 %v58, 152
        %v78 = vadd.s32 %v58, 160
        %v79 = vadd.s32 %v58, 168
        %v80 = vadd.s32 %v58, 176
        %v81 = vadd.s32 %v58, 184
        %v82 = vadd.s32 %v58, 192
        %v83 = vadd.s32 %v58, 200
        %v84 = vadd.s32 %v58, 208
        %v85 = vadd.s32 %v58, 216
        %v86 = vadd.s32 %v58, 224
        %v87 = vadd.s32 %v58, 232
        %v88 = vadd.s32 %v58, 240
        %v89 = vadd.s32 %v58, 248
        %v90 = vadd.s32 %v58, 256
        %v91 = vadd.s32 %v58, 264
        %v92 = vadd.s32 %v58, 272
        %v93 = vadd.s32 %v58, 280
        %v94 = vstv %s56
        %v95 = vadd.s32 %v58, %v94
        %v96 = vadd.s32 %v59, %v94
        %v97 = vadd.s32 %v60, %v94
        %v98 = vadd.s32 %v61, %v94
        %v99 = vadd.s32 %v62, %v94
        %v100 = vadd.s32 %v63, %v94
        %v101 = vadd.s32 %v64, %v94
        %v102 = vadd.s32 %v65, %v94
        %v103 = vadd.s32 %v66, %v94
        %v104 = vadd.s32 %v67, %v94
        %v105 = vadd.s32 %v68, %v94
        %v106 = vadd.s32 %v69, %v94
        %v107 = vadd.s32 %v70, %v94
        %v108 = vadd.s32 %v71, %v94
        %v109 = vadd.s32 %v72, %v94
        %v110 = vadd.s32 %v73, %v94
        %v111 = vadd.s32 %v74, %v94
        %v112 = vadd.s32 %v75, %v94
        %v113 = vadd.s32 %v76, %v94
        %v114 = vadd.s32 %v77, %v94
        %v115 = vadd.s32 %v78, %v94
        %v116 = vadd.s32 %v79, %v94
        %v117 = vadd.s32 %v80, %v94
        %v118 = vadd.s32 %v81, %v94
        %v119 = vadd.s32 %v82, %v94
        %v120 = vadd.s32 %v83, %v94
        %v121 = vadd.s32 %v84, %v94
        %v122 = vadd.s32 %v85, %v94
        %v123 = vadd.s32 %v86, %v94
        %v124 = vadd.s32 %v87, %v94
        %v125 = vadd.s32 %v88, %v94
        %v126 = vadd.s32 %v89, %v94
        %v127 = vadd.s32 %v90, %v94
        %v128 = vadd.s32 %v91, %v94
        %v129 = vadd.s32 %v92, %v94
        %v130 = vadd.s32 %v93, %v94
        %v131 = vlaneseq
        %v132 = vand.u32 %v131, 127
        %v133 = vadd.s32 %v132, 128
        %v134 = vadd.s32 %v132, 256
        %v135 = vadd.s32 %v132, 384
        %v136 = vadd.s32 %v132, 512
        %v137 = vadd.s32 %v132, 640
        %s138 = sld [smem:[#allocation3]]
        %s139 = sld [smem:[#allocation3 + $0x1]]
        %s140 = sld [smem:[#allocation3 + $0x2]]
        %s141 = sld [smem:[#allocation3 + $0x3]]
        %v142 = vstv %s138
        %vm143 = vcmp.ge.s32.totalorder %v95, %v142
        %vm144 = vcmp.ge.s32.totalorder %v96, %v142
        %vm145 = vcmp.ge.s32.totalorder %v97, %v142
        %vm146 = vcmp.ge.s32.totalorder %v98, %v142
        %vm147 = vcmp.ge.s32.totalorder %v99, %v142
        %vm148 = vcmp.ge.s32.totalorder %v100, %v142
        %vm149 = vcmp.ge.s32.totalorder %v101, %v142
        %vm150 = vcmp.ge.s32.totalorder %v102, %v142
        %vm151 = vcmp.ge.s32.totalorder %v103, %v142
        %vm152 = vcmp.ge.s32.totalorder %v104, %v142
        %vm153 = vcmp.ge.s32.totalorder %v105, %v142
        %vm154 = vcmp.ge.s32.totalorder %v106, %v142
        %vm155 = vcmp.ge.s32.totalorder %v107, %v142
        %vm156 = vcmp.ge.s32.totalorder %v108, %v142
        %vm157 = vcmp.ge.s32.totalorder %v109, %v142
        %vm158 = vcmp.ge.s32.totalorder %v110, %v142
        %vm159 = vcmp.ge.s32.totalorder %v111, %v142
        %vm160 = vcmp.ge.s32.totalorder %v112, %v142
        %vm161 = vcmp.ge.s32.totalorder %v113, %v142
        %vm162 = vcmp.ge.s32.totalorder %v114, %v142
        %vm163 = vcmp.ge.s32.totalorder %v115, %v142
        %vm164 = vcmp.ge.s32.totalorder %v116, %v142
        %vm165 = vcmp.ge.s32.totalorder %v117, %v142
        %vm166 = vcmp.ge.s32.totalorder %v118, %v142
        %vm167 = vcmp.ge.s32.totalorder %v119, %v142
        %vm168 = vcmp.ge.s32.totalorder %v120, %v142
        %vm169 = vcmp.ge.s32.totalorder %v121, %v142
        %vm170 = vcmp.ge.s32.totalorder %v122, %v142
        %vm171 = vcmp.ge.s32.totalorder %v123, %v142
        %vm172 = vcmp.ge.s32.totalorder %v124, %v142
        %vm173 = vcmp.ge.s32.totalorder %v125, %v142
        %vm174 = vcmp.ge.s32.totalorder %v126, %v142
        %vm175 = vcmp.ge.s32.totalorder %v127, %v142
        %vm176 = vcmp.ge.s32.totalorder %v128, %v142
        %vm177 = vcmp.ge.s32.totalorder %v129, %v142
        %vm178 = vcmp.ge.s32.totalorder %v130, %v142
        %v179 = vstv %s139
        %vm180 = vcmp.lt.s32.totalorder %v95, %v179
        %vm181 = vcmp.lt.s32.totalorder %v96, %v179
        %vm182 = vcmp.lt.s32.totalorder %v97, %v179
        %vm183 = vcmp.lt.s32.totalorder %v98, %v179
        %vm184 = vcmp.lt.s32.totalorder %v99, %v179
        %vm185 = vcmp.lt.s32.totalorder %v100, %v179
        %vm186 = vcmp.lt.s32.totalorder %v101, %v179
        %vm187 = vcmp.lt.s32.totalorder %v102, %v179
        %vm188 = vcmp.lt.s32.totalorder %v103, %v179
        %vm189 = vcmp.lt.s32.totalorder %v104, %v179
        %vm190 = vcmp.lt.s32.totalorder %v105, %v179
        %vm191 = vcmp.lt.s32.totalorder %v106, %v179
        %vm192 = vcmp.lt.s32.totalorder %v107, %v179
        %vm193 = vcmp.lt.s32.totalorder %v108, %v179
        %vm194 = vcmp.lt.s32.totalorder %v109, %v179
        %vm195 = vcmp.lt.s32.totalorder %v110, %v179
        %vm196 = vcmp.lt.s32.totalorder %v111, %v179
        %vm197 = vcmp.lt.s32.totalorder %v112, %v179
        %vm198 = vcmp.lt.s32.totalorder %v113, %v179
        %vm199 = vcmp.lt.s32.totalorder %v114, %v179
        %vm200 = vcmp.lt.s32.totalorder %v115, %v179
        %vm201 = vcmp.lt.s32.totalorder %v116, %v179
        %vm202 = vcmp.lt.s32.totalorder %v117, %v179
        %vm203 = vcmp.lt.s32.totalorder %v118, %v179
        %vm204 = vcmp.lt.s32.totalorder %v119, %v179
        %vm205 = vcmp.lt.s32.totalorder %v120, %v179
        %vm206 = vcmp.lt.s32.totalorder %v121, %v179
        %vm207 = vcmp.lt.s32.totalorder %v122, %v179
        %vm208 = vcmp.lt.s32.totalorder %v123, %v179
        %vm209 = vcmp.lt.s32.totalorder %v124, %v179
        %vm210 = vcmp.lt.s32.totalorder %v125, %v179
        %vm211 = vcmp.lt.s32.totalorder %v126, %v179
        %vm212 = vcmp.lt.s32.totalorder %v127, %v179
        %vm213 = vcmp.lt.s32.totalorder %v128, %v179
        %vm214 = vcmp.lt.s32.totalorder %v129, %v179
        %vm215 = vcmp.lt.s32.totalorder %v130, %v179
        %vm216 = vmand %vm143, %vm180
        %vm217 = vmand %vm144, %vm181
        %vm218 = vmand %vm145, %vm182
        %vm219 = vmand %vm146, %vm183
        %vm220 = vmand %vm147, %vm184
        %vm221 = vmand %vm148, %vm185
        %vm222 = vmand %vm149, %vm186
        %vm223 = vmand %vm150, %vm187
        %vm224 = vmand %vm151, %vm188
        %vm225 = vmand %vm152, %vm189
        %vm226 = vmand %vm153, %vm190
        %vm227 = vmand %vm154, %vm191
        %vm228 = vmand %vm155, %vm192
        %vm229 = vmand %vm156, %vm193
        %vm230 = vmand %vm157, %vm194
        %vm231 = vmand %vm158, %vm195
        %vm232 = vmand %vm159, %vm196
        %vm233 = vmand %vm160, %vm197
        %vm234 = vmand %vm161, %vm198
        %vm235 = vmand %vm162, %vm199
        %vm236 = vmand %vm163, %vm200
        %vm237 = vmand %vm164, %vm201
        %vm238 = vmand %vm165, %vm202
        %vm239 = vmand %vm166, %vm203
        %vm240 = vmand %vm167, %vm204
        %vm241 = vmand %vm168, %vm205
        %vm242 = vmand %vm169, %vm206
        %vm243 = vmand %vm170, %vm207
        %vm244 = vmand %vm171, %vm208
        %vm245 = vmand %vm172, %vm209
        %vm246 = vmand %vm173, %vm210
        %vm247 = vmand %vm174, %vm211
        %vm248 = vmand %vm175, %vm212
        %vm249 = vmand %vm176, %vm213
        %vm250 = vmand %vm177, %vm214
        %vm251 = vmand %vm178, %vm215
        %v252 = vsel %vm216, 1, 0
        %v253 = vsel %vm217, 1, 0
        %v254 = vsel %vm218, 1, 0
        %v255 = vsel %vm219, 1, 0
        %v256 = vsel %vm220, 1, 0
        %v257 = vsel %vm221, 1, 0
        %v258 = vsel %vm222, 1, 0
        %v259 = vsel %vm223, 1, 0
        %v260 = vsel %vm224, 1, 0
        %v261 = vsel %vm225, 1, 0
        %v262 = vsel %vm226, 1, 0
        %v263 = vsel %vm227, 1, 0
        %v264 = vsel %vm228, 1, 0
        %v265 = vsel %vm229, 1, 0
        %v266 = vsel %vm230, 1, 0
        %v267 = vsel %vm231, 1, 0
        %v268 = vsel %vm232, 1, 0
        %v269 = vsel %vm233, 1, 0
        %v270 = vsel %vm234, 1, 0
        %v271 = vsel %vm235, 1, 0
        %v272 = vsel %vm236, 1, 0
        %v273 = vsel %vm237, 1, 0
        %v274 = vsel %vm238, 1, 0
        %v275 = vsel %vm239, 1, 0
        %v276 = vsel %vm240, 1, 0
        %v277 = vsel %vm241, 1, 0
        %v278 = vsel %vm242, 1, 0
        %v279 = vsel %vm243, 1, 0
        %v280 = vsel %vm244, 1, 0
        %v281 = vsel %vm245, 1, 0
        %v282 = vsel %vm246, 1, 0
        %v283 = vsel %vm247, 1, 0
        %v284 = vsel %vm248, 1, 0
        %v285 = vsel %vm249, 1, 0
        %v286 = vsel %vm250, 1, 0
        %v287 = vsel %vm251, 1, 0
        %v288 = vstv %s140
        %vm289 = vcmp.ge.s32.totalorder %v132, %v288
        %vm290 = vcmp.ge.s32.totalorder %v133, %v288
        %vm291 = vcmp.ge.s32.totalorder %v134, %v288
        %vm292 = vcmp.ge.s32.totalorder %v135, %v288
        %vm293 = vcmp.ge.s32.totalorder %v136, %v288
        %vm294 = vcmp.ge.s32.totalorder %v137, %v288
        %v295 = vstv %s141
        %vm296 = vcmp.lt.s32.totalorder %v132, %v295
        %vm297 = vcmp.lt.s32.totalorder %v133, %v295
        %vm298 = vcmp.lt.s32.totalorder %v134, %v295
        %vm299 = vcmp.lt.s32.totalorder %v135, %v295
        %vm300 = vcmp.lt.s32.totalorder %v136, %v295
        %vm301 = vcmp.lt.s32.totalorder %v137, %v295
        %vm302 = vmand %vm289, %vm296
        %vm303 = vmand %vm290, %vm297
        %vm304 = vmand %vm291, %vm298
        %vm305 = vmand %vm292, %vm299
        %vm306 = vmand %vm293, %vm300
        %vm307 = vmand %vm294, %vm301
        %v308 = vsel %vm302, 1, 0
        %v309 = vsel %vm303, 1, 0
        %v310 = vsel %vm304, 1, 0
        %v311 = vsel %vm305, 1, 0
        %v312 = vsel %vm306, 1, 0
        %v313 = vsel %vm307, 1, 0
        %s314 = sld [smem:[#allocation3 + $0x4]]
        %s315 = sld [smem:[#allocation3 + $0x5]]
        %s316 = sld [smem:[#allocation3 + $0x6]]
        %s317 = sld [smem:[#allocation3 + $0x7]]
        %v318 = vstv %s314
        %vm319 = vcmp.ge.s32.totalorder %v95, %v318
        %vm320 = vcmp.ge.s32.totalorder %v96, %v318
        %vm321 = vcmp.ge.s32.totalorder %v97, %v318
        %vm322 = vcmp.ge.s32.totalorder %v98, %v318
        %vm323 = vcmp.ge.s32.totalorder %v99, %v318
        %vm324 = vcmp.ge.s32.totalorder %v100, %v318
        %vm325 = vcmp.ge.s32.totalorder %v101, %v318
        %vm326 = vcmp.ge.s32.totalorder %v102, %v318
        %vm327 = vcmp.ge.s32.totalorder %v103, %v318
        %vm328 = vcmp.ge.s32.totalorder %v104, %v318
        %vm329 = vcmp.ge.s32.totalorder %v105, %v318
        %vm330 = vcmp.ge.s32.totalorder %v106, %v318
        %vm331 = vcmp.ge.s32.totalorder %v107, %v318
        %vm332 = vcmp.ge.s32.totalorder %v108, %v318
        %vm333 = vcmp.ge.s32.totalorder %v109, %v318
        %vm334 = vcmp.ge.s32.totalorder %v110, %v318
        %vm335 = vcmp.ge.s32.totalorder %v111, %v318
        %vm336 = vcmp.ge.s32.totalorder %v112, %v318
        %vm337 = vcmp.ge.s32.totalorder %v113, %v318
        %vm338 = vcmp.ge.s32.totalorder %v114, %v318
        %vm339 = vcmp.ge.s32.totalorder %v115, %v318
        %vm340 = vcmp.ge.s32.totalorder %v116, %v318
        %vm341 = vcmp.ge.s32.totalorder %v117, %v318
        %vm342 = vcmp.ge.s32.totalorder %v118, %v318
        %vm343 = vcmp.ge.s32.totalorder %v119, %v318
        %vm344 = vcmp.ge.s32.totalorder %v120, %v318
        %vm345 = vcmp.ge.s32.totalorder %v121, %v318
        %vm346 = vcmp.ge.s32.totalorder %v122, %v318
        %vm347 = vcmp.ge.s32.totalorder %v123, %v318
        %vm348 = vcmp.ge.s32.totalorder %v124, %v318
        %vm349 = vcmp.ge.s32.totalorder %v125, %v318
        %vm350 = vcmp.ge.s32.totalorder %v126, %v318
        %vm351 = vcmp.ge.s32.totalorder %v127, %v318
        %vm352 = vcmp.ge.s32.totalorder %v128, %v318
        %vm353 = vcmp.ge.s32.totalorder %v129, %v318
        %vm354 = vcmp.ge.s32.totalorder %v130, %v318
        %v355 = vstv %s315
        %vm356 = vcmp.lt.s32.totalorder %v95, %v355
        %vm357 = vcmp.lt.s32.totalorder %v96, %v355
        %vm358 = vcmp.lt.s32.totalorder %v97, %v355
        %vm359 = vcmp.lt.s32.totalorder %v98, %v355
        %vm360 = vcmp.lt.s32.totalorder %v99, %v355
        %vm361 = vcmp.lt.s32.totalorder %v100, %v355
        %vm362 = vcmp.lt.s32.totalorder %v101, %v355
        %vm363 = vcmp.lt.s32.totalorder %v102, %v355
        %vm364 = vcmp.lt.s32.totalorder %v103, %v355
        %vm365 = vcmp.lt.s32.totalorder %v104, %v355
        %vm366 = vcmp.lt.s32.totalorder %v105, %v355
        %vm367 = vcmp.lt.s32.totalorder %v106, %v355
        %vm368 = vcmp.lt.s32.totalorder %v107, %v355
        %vm369 = vcmp.lt.s32.totalorder %v108, %v355
        %vm370 = vcmp.lt.s32.totalorder %v109, %v355
        %vm371 = vcmp.lt.s32.totalorder %v110, %v355
        %vm372 = vcmp.lt.s32.totalorder %v111, %v355
        %vm373 = vcmp.lt.s32.totalorder %v112, %v355
        %vm374 = vcmp.lt.s32.totalorder %v113, %v355
        %vm375 = vcmp.lt.s32.totalorder %v114, %v355
        %vm376 = vcmp.lt.s32.totalorder %v115, %v355
        %vm377 = vcmp.lt.s32.totalorder %v116, %v355
        %vm378 = vcmp.lt.s32.totalorder %v117, %v355
        %vm379 = vcmp.lt.s32.totalorder %v118, %v355
        %vm380 = vcmp.lt.s32.totalorder %v119, %v355
        %vm381 = vcmp.lt.s32.totalorder %v120, %v355
        %vm382 = vcmp.lt.s32.totalorder %v121, %v355
        %vm383 = vcmp.lt.s32.totalorder %v122, %v355
        %vm384 = vcmp.lt.s32.totalorder %v123, %v355
        %vm385 = vcmp.lt.s32.totalorder %v124, %v355
        %vm386 = vcmp.lt.s32.totalorder %v125, %v355
        %vm387 = vcmp.lt.s32.totalorder %v126, %v355
        %vm388 = vcmp.lt.s32.totalorder %v127, %v355
        %vm389 = vcmp.lt.s32.totalorder %v128, %v355
        %vm390 = vcmp.lt.s32.totalorder %v129, %v355
        %vm391 = vcmp.lt.s32.totalorder %v130, %v355
        %vm392 = vmand %vm319, %vm356
        %vm393 = vmand %vm320, %vm357
        %vm394 = vmand %vm321, %vm358
        %vm395 = vmand %vm322, %vm359
        %vm396 = vmand %vm323, %vm360
        %vm397 = vmand %vm324, %vm361
        %vm398 = vmand %vm325, %vm362
        %vm399 = vmand %vm326, %vm363
        %vm400 = vmand %vm327, %vm364
        %vm401 = vmand %vm328, %vm365
        %vm402 = vmand %vm329, %vm366
        %vm403 = vmand %vm330, %vm367
        %vm404 = vmand %vm331, %vm368
        %vm405 = vmand %vm332, %vm369
        %vm406 = vmand %vm333, %vm370
        %vm407 = vmand %vm334, %vm371
        %vm408 = vmand %vm335, %vm372
        %vm409 = vmand %vm336, %vm373
        %vm410 = vmand %vm337, %vm374
        %vm411 = vmand %vm338, %vm375
        %vm412 = vmand %vm339, %vm376
        %vm413 = vmand %vm340, %vm377
        %vm414 = vmand %vm341, %vm378
        %vm415 = vmand %vm342, %vm379
        %vm416 = vmand %vm343, %vm380
        %vm417 = vmand %vm344, %vm381
        %vm418 = vmand %vm345, %vm382
        %vm419 = vmand %vm346, %vm383
        %vm420 = vmand %vm347, %vm384
        %vm421 = vmand %vm348, %vm385
        %vm422 = vmand %vm349, %vm386
        %vm423 = vmand %vm350, %vm387
        %vm424 = vmand %vm351, %vm388
        %vm425 = vmand %vm352, %vm389
        %vm426 = vmand %vm353, %vm390
        %vm427 = vmand %vm354, %vm391
        %v428 = vsel %vm392, 2, 0
        %v429 = vsel %vm393, 2, 0
        %v430 = vsel %vm394, 2, 0
        %v431 = vsel %vm395, 2, 0
        %v432 = vsel %vm396, 2, 0
        %v433 = vsel %vm397, 2, 0
        %v434 = vsel %vm398, 2, 0
        %v435 = vsel %vm399, 2, 0
        %v436 = vsel %vm400, 2, 0
        %v437 = vsel %vm401, 2, 0
        %v438 = vsel %vm402, 2, 0
        %v439 = vsel %vm403, 2, 0
        %v440 = vsel %vm404, 2, 0
        %v441 = vsel %vm405, 2, 0
        %v442 = vsel %vm406, 2, 0
        %v443 = vsel %vm407, 2, 0
        %v444 = vsel %vm408, 2, 0
        %v445 = vsel %vm409, 2, 0
        %v446 = vsel %vm410, 2, 0
        %v447 = vsel %vm411, 2, 0
        %v448 = vsel %vm412, 2, 0
        %v449 = vsel %vm413, 2, 0
        %v450 = vsel %vm414, 2, 0
        %v451 = vsel %vm415, 2, 0
        %v452 = vsel %vm416, 2, 0
        %v453 = vsel %vm417, 2, 0
        %v454 = vsel %vm418, 2, 0
        %v455 = vsel %vm419, 2, 0
        %v456 = vsel %vm420, 2, 0
        %v457 = vsel %vm421, 2, 0
        %v458 = vsel %vm422, 2, 0
        %v459 = vsel %vm423, 2, 0
        %v460 = vsel %vm424, 2, 0
        %v461 = vsel %vm425, 2, 0
        %v462 = vsel %vm426, 2, 0
        %v463 = vsel %vm427, 2, 0
        %v464 = vor.u32 %v252, %v428
        %v465 = vor.u32 %v253, %v429
        %v466 = vor.u32 %v254, %v430
        %v467 = vor.u32 %v255, %v431
        %v468 = vor.u32 %v256, %v432
        %v469 = vor.u32 %v257, %v433
        %v470 = vor.u32 %v258, %v434
        %v471 = vor.u32 %v259, %v435
        %v472 = vor.u32 %v260, %v436
        %v473 = vor.u32 %v261, %v437
        %v474 = vor.u32 %v262, %v438
        %v475 = vor.u32 %v263, %v439
        %v476 = vor.u32 %v264, %v440
        %v477 = vor.u32 %v265, %v441
        %v478 = vor.u32 %v266, %v442
        %v479 = vor.u32 %v267, %v443
        %v480 = vor.u32 %v268, %v444
        %v481 = vor.u32 %v269, %v445
        %v482 = vor.u32 %v270, %v446
        %v483 = vor.u32 %v271, %v447
        %v484 = vor.u32 %v272, %v448
        %v485 = vor.u32 %v273, %v449
        %v486 = vor.u32 %v274, %v450
        %v487 = vor.u32 %v275, %v451
        %v488 = vor.u32 %v276, %v452
        %v489 = vor.u32 %v277, %v453
        %v490 = vor.u32 %v278, %v454
        %v491 = vor.u32 %v279, %v455
        %v492 = vor.u32 %v280, %v456
        %v493 = vor.u32 %v281, %v457
        %v494 = vor.u32 %v282, %v458
        %v495 = vor.u32 %v283, %v459
        %v496 = vor.u32 %v284, %v460
        %v497 = vor.u32 %v285, %v461
        %v498 = vor.u32 %v286, %v462
        %v499 = vor.u32 %v287, %v463
        %v500 = vstv %s316
        %vm501 = vcmp.ge.s32.totalorder %v132, %v500
        %vm502 = vcmp.ge.s32.totalorder %v133, %v500
        %vm503 = vcmp.ge.s32.totalorder %v134, %v500
        %vm504 = vcmp.ge.s32.totalorder %v135, %v500
        %vm505 = vcmp.ge.s32.totalorder %v136, %v500
        %vm506 = vcmp.ge.s32.totalorder %v137, %v500
        %v507 = vstv %s317
        %vm508 = vcmp.lt.s32.totalorder %v132, %v507
        %vm509 = vcmp.lt.s32.totalorder %v133, %v507
        %vm510 = vcmp.lt.s32.totalorder %v134, %v507
        %vm511 = vcmp.lt.s32.totalorder %v135, %v507
        %vm512 = vcmp.lt.s32.totalorder %v136, %v507
        %vm513 = vcmp.lt.s32.totalorder %v137, %v507
        %vm514 = vmand %vm501, %vm508
        %vm515 = vmand %vm502, %vm509
        %vm516 = vmand %vm503, %vm510
        %vm517 = vmand %vm504, %vm511
        %vm518 = vmand %vm505, %vm512
        %vm519 = vmand %vm506, %vm513
        %v520 = vsel %vm514, 2, 0
        %v521 = vsel %vm515, 2, 0
        %v522 = vsel %vm516, 2, 0
        %v523 = vsel %vm517, 2, 0
        %v524 = vsel %vm518, 2, 0
        %v525 = vsel %vm519, 2, 0
        %v526 = vor.u32 %v308, %v520
        %v527 = vor.u32 %v309, %v521
        %v528 = vor.u32 %v310, %v522
        %v529 = vor.u32 %v311, %v523
        %v530 = vor.u32 %v312, %v524
        %v531 = vor.u32 %v313, %v525
        %s532 = sld [smem:[#allocation3 + $0x8]]
        %s533 = sld [smem:[#allocation3 + $0x9]]
        %s534 = sld [smem:[#allocation3 + $0xa]]
        %s535 = sld [smem:[#allocation3 + $0xb]]
        %v536 = vstv %s532
        %vm537 = vcmp.ge.s32.totalorder %v95, %v536
        %vm538 = vcmp.ge.s32.totalorder %v96, %v536
        %vm539 = vcmp.ge.s32.totalorder %v97, %v536
        %vm540 = vcmp.ge.s32.totalorder %v98, %v536
        %vm541 = vcmp.ge.s32.totalorder %v99, %v536
        %vm542 = vcmp.ge.s32.totalorder %v100, %v536
        %vm543 = vcmp.ge.s32.totalorder %v101, %v536
        %vm544 = vcmp.ge.s32.totalorder %v102, %v536
        %vm545 = vcmp.ge.s32.totalorder %v103, %v536
        %vm546 = vcmp.ge.s32.totalorder %v104, %v536
        %vm547 = vcmp.ge.s32.totalorder %v105, %v536
        %vm548 = vcmp.ge.s32.totalorder %v106, %v536
        %vm549 = vcmp.ge.s32.totalorder %v107, %v536
        %vm550 = vcmp.ge.s32.totalorder %v108, %v536
        %vm551 = vcmp.ge.s32.totalorder %v109, %v536
        %vm552 = vcmp.ge.s32.totalorder %v110, %v536
        %vm553 = vcmp.ge.s32.totalorder %v111, %v536
        %vm554 = vcmp.ge.s32.totalorder %v112, %v536
        %vm555 = vcmp.ge.s32.totalorder %v113, %v536
        %vm556 = vcmp.ge.s32.totalorder %v114, %v536
        %vm557 = vcmp.ge.s32.totalorder %v115, %v536
        %vm558 = vcmp.ge.s32.totalorder %v116, %v536
        %vm559 = vcmp.ge.s32.totalorder %v117, %v536
        %vm560 = vcmp.ge.s32.totalorder %v118, %v536
        %vm561 = vcmp.ge.s32.totalorder %v119, %v536
        %vm562 = vcmp.ge.s32.totalorder %v120, %v536
        %vm563 = vcmp.ge.s32.totalorder %v121, %v536
        %vm564 = vcmp.ge.s32.totalorder %v122, %v536
        %vm565 = vcmp.ge.s32.totalorder %v123, %v536
        %vm566 = vcmp.ge.s32.totalorder %v124, %v536
        %vm567 = vcmp.ge.s32.totalorder %v125, %v536
        %vm568 = vcmp.ge.s32.totalorder %v126, %v536
        %vm569 = vcmp.ge.s32.totalorder %v127, %v536
        %vm570 = vcmp.ge.s32.totalorder %v128, %v536
        %vm571 = vcmp.ge.s32.totalorder %v129, %v536
        %vm572 = vcmp.ge.s32.totalorder %v130, %v536
        %v573 = vstv %s533
        %vm574 = vcmp.lt.s32.totalorder %v95, %v573
        %vm575 = vcmp.lt.s32.totalorder %v96, %v573
        %vm576 = vcmp.lt.s32.totalorder %v97, %v573
        %vm577 = vcmp.lt.s32.totalorder %v98, %v573
        %vm578 = vcmp.lt.s32.totalorder %v99, %v573
        %vm579 = vcmp.lt.s32.totalorder %v100, %v573
        %vm580 = vcmp.lt.s32.totalorder %v101, %v573
        %vm581 = vcmp.lt.s32.totalorder %v102, %v573
        %vm582 = vcmp.lt.s32.totalorder %v103, %v573
        %vm583 = vcmp.lt.s32.totalorder %v104, %v573
        %vm584 = vcmp.lt.s32.totalorder %v105, %v573
        %vm585 = vcmp.lt.s32.totalorder %v106, %v573
        %vm586 = vcmp.lt.s32.totalorder %v107, %v573
        %vm587 = vcmp.lt.s32.totalorder %v108, %v573
        %vm588 = vcmp.lt.s32.totalorder %v109, %v573
        %vm589 = vcmp.lt.s32.totalorder %v110, %v573
        %vm590 = vcmp.lt.s32.totalorder %v111, %v573
        %vm591 = vcmp.lt.s32.totalorder %v112, %v573
        %vm592 = vcmp.lt.s32.totalorder %v113, %v573
        %vm593 = vcmp.lt.s32.totalorder %v114, %v573
        %vm594 = vcmp.lt.s32.totalorder %v115, %v573
        %vm595 = vcmp.lt.s32.totalorder %v116, %v573
        %vm596 = vcmp.lt.s32.totalorder %v117, %v573
        %vm597 = vcmp.lt.s32.totalorder %v118, %v573
        %vm598 = vcmp.lt.s32.totalorder %v119, %v573
        %vm599 = vcmp.lt.s32.totalorder %v120, %v573
        %vm600 = vcmp.lt.s32.totalorder %v121, %v573
        %vm601 = vcmp.lt.s32.totalorder %v122, %v573
        %vm602 = vcmp.lt.s32.totalorder %v123, %v573
        %vm603 = vcmp.lt.s32.totalorder %v124, %v573
        %vm604 = vcmp.lt.s32.totalorder %v125, %v573
        %vm605 = vcmp.lt.s32.totalorder %v126, %v573
        %vm606 = vcmp.lt.s32.totalorder %v127, %v573
        %vm607 = vcmp.lt.s32.totalorder %v128, %v573
        %vm608 = vcmp.lt.s32.totalorder %v129, %v573
        %vm609 = vcmp.lt.s32.totalorder %v130, %v573
        %vm610 = vmand %vm537, %vm574
        %vm611 = vmand %vm538, %vm575
        %vm612 = vmand %vm539, %vm576
        %vm613 = vmand %vm540, %vm577
        %vm614 = vmand %vm541, %vm578
        %vm615 = vmand %vm542, %vm579
        %vm616 = vmand %vm543, %vm580
        %vm617 = vmand %vm544, %vm581
        %vm618 = vmand %vm545, %vm582
        %vm619 = vmand %vm546, %vm583
        %vm620 = vmand %vm547, %vm584
        %vm621 = vmand %vm548, %vm585
        %vm622 = vmand %vm549, %vm586
        %vm623 = vmand %vm550, %vm587
        %vm624 = vmand %vm551, %vm588
        %vm625 = vmand %vm552, %vm589
        %vm626 = vmand %vm553, %vm590
        %vm627 = vmand %vm554, %vm591
        %vm628 = vmand %vm555, %vm592
        %vm629 = vmand %vm556, %vm593
        %vm630 = vmand %vm557, %vm594
        %vm631 = vmand %vm558, %vm595
        %vm632 = vmand %vm559, %vm596
        %vm633 = vmand %vm560, %vm597
        %vm634 = vmand %vm561, %vm598
        %vm635 = vmand %vm562, %vm599
        %vm636 = vmand %vm563, %vm600
        %vm637 = vmand %vm564, %vm601
        %vm638 = vmand %vm565, %vm602
        %vm639 = vmand %vm566, %vm603
        %vm640 = vmand %vm567, %vm604
        %vm641 = vmand %vm568, %vm605
        %vm642 = vmand %vm569, %vm606
        %vm643 = vmand %vm570, %vm607
        %vm644 = vmand %vm571, %vm608
        %vm645 = vmand %vm572, %vm609
        %v646 = vsel %vm610, 4, 0
        %v647 = vsel %vm611, 4, 0
        %v648 = vsel %vm612, 4, 0
        %v649 = vsel %vm613, 4, 0
        %v650 = vsel %vm614, 4, 0
        %v651 = vsel %vm615, 4, 0
        %v652 = vsel %vm616, 4, 0
        %v653 = vsel %vm617, 4, 0
        %v654 = vsel %vm618, 4, 0
        %v655 = vsel %vm619, 4, 0
        %v656 = vsel %vm620, 4, 0
        %v657 = vsel %vm621, 4, 0
        %v658 = vsel %vm622, 4, 0
        %v659 = vsel %vm623, 4, 0
        %v660 = vsel %vm624, 4, 0
        %v661 = vsel %vm625, 4, 0
        %v662 = vsel %vm626, 4, 0
        %v663 = vsel %vm627, 4, 0
        %v664 = vsel %vm628, 4, 0
        %v665 = vsel %vm629, 4, 0
        %v666 = vsel %vm630, 4, 0
        %v667 = vsel %vm631, 4, 0
        %v668 = vsel %vm632, 4, 0
        %v669 = vsel %vm633, 4, 0
        %v670 = vsel %vm634, 4, 0
        %v671 = vsel %vm635, 4, 0
        %v672 = vsel %vm636, 4, 0
        %v673 = vsel %vm637, 4, 0
        %v674 = vsel %vm638, 4, 0
        %v675 = vsel %vm639, 4, 0
        %v676 = vsel %vm640, 4, 0
        %v677 = vsel %vm641, 4, 0
        %v678 = vsel %vm642, 4, 0
        %v679 = vsel %vm643, 4, 0
        %v680 = vsel %vm644, 4, 0
        %v681 = vsel %vm645, 4, 0
        %v682 = vor.u32 %v464, %v646
        %v683 = vor.u32 %v465, %v647
        %v684 = vor.u32 %v466, %v648
        %v685 = vor.u32 %v467, %v649
        %v686 = vor.u32 %v468, %v650
        %v687 = vor.u32 %v469, %v651
        %v688 = vor.u32 %v470, %v652
        %v689 = vor.u32 %v471, %v653
        %v690 = vor.u32 %v472, %v654
        %v691 = vor.u32 %v473, %v655
        %v692 = vor.u32 %v474, %v656
        %v693 = vor.u32 %v475, %v657
        %v694 = vor.u32 %v476, %v658
        %v695 = vor.u32 %v477, %v659
        %v696 = vor.u32 %v478, %v660
        %v697 = vor.u32 %v479, %v661
        %v698 = vor.u32 %v480, %v662
        %v699 = vor.u32 %v481, %v663
        %v700 = vor.u32 %v482, %v664
        %v701 = vor.u32 %v483, %v665
        %v702 = vor.u32 %v484, %v666
        %v703 = vor.u32 %v485, %v667
        %v704 = vor.u32 %v486, %v668
        %v705 = vor.u32 %v487, %v669
        %v706 = vor.u32 %v488, %v670
        %v707 = vor.u32 %v489, %v671
        %v708 = vor.u32 %v490, %v672
        %v709 = vor.u32 %v491, %v673
        %v710 = vor.u32 %v492, %v674
        %v711 = vor.u32 %v493, %v675
        %v712 = vor.u32 %v494, %v676
        %v713 = vor.u32 %v495, %v677
        %v714 = vor.u32 %v496, %v678
        %v715 = vor.u32 %v497, %v679
        %v716 = vor.u32 %v498, %v680
        %v717 = vor.u32 %v499, %v681
        %v718 = vstv %s534
        %vm719 = vcmp.ge.s32.totalorder %v132, %v718
        %vm720 = vcmp.ge.s32.totalorder %v133, %v718
        %vm721 = vcmp.ge.s32.totalorder %v134, %v718
        %vm722 = vcmp.ge.s32.totalorder %v135, %v718
        %vm723 = vcmp.ge.s32.totalorder %v136, %v718
        %vm724 = vcmp.ge.s32.totalorder %v137, %v718
        %v725 = vstv %s535
        %vm726 = vcmp.lt.s32.totalorder %v132, %v725
        %vm727 = vcmp.lt.s32.totalorder %v133, %v725
        %vm728 = vcmp.lt.s32.totalorder %v134, %v725
        %vm729 = vcmp.lt.s32.totalorder %v135, %v725
        %vm730 = vcmp.lt.s32.totalorder %v136, %v725
        %vm731 = vcmp.lt.s32.totalorder %v137, %v725
        %vm732 = vmand %vm719, %vm726
        %vm733 = vmand %vm720, %vm727
        %vm734 = vmand %vm721, %vm728
        %vm735 = vmand %vm722, %vm729
        %vm736 = vmand %vm723, %vm730
        %vm737 = vmand %vm724, %vm731
        %v738 = vsel %vm732, 4, 0
        %v739 = vsel %vm733, 4, 0
        %v740 = vsel %vm734, 4, 0
        %v741 = vsel %vm735, 4, 0
        %v742 = vsel %vm736, 4, 0
        %v743 = vsel %vm737, 4, 0
        %v744 = vor.u32 %v526, %v738
        %v745 = vor.u32 %v527, %v739
        %v746 = vor.u32 %v528, %v740
        %v747 = vor.u32 %v529, %v741
        %v748 = vor.u32 %v530, %v742
        %v749 = vor.u32 %v531, %v743
        %s750 = sld [smem:[#allocation3 + $0xc]]
        %s751 = sld [smem:[#allocation3 + $0xd]]
        %s752 = sld [smem:[#allocation3 + $0xe]]
        %s753 = sld [smem:[#allocation3 + $0xf]]
        %v754 = vstv %s750
        %vm755 = vcmp.ge.s32.totalorder %v95, %v754
        %vm756 = vcmp.ge.s32.totalorder %v96, %v754
        %vm757 = vcmp.ge.s32.totalorder %v97, %v754
        %vm758 = vcmp.ge.s32.totalorder %v98, %v754
        %vm759 = vcmp.ge.s32.totalorder %v99, %v754
        %vm760 = vcmp.ge.s32.totalorder %v100, %v754
        %vm761 = vcmp.ge.s32.totalorder %v101, %v754
        %vm762 = vcmp.ge.s32.totalorder %v102, %v754
        %vm763 = vcmp.ge.s32.totalorder %v103, %v754
        %vm764 = vcmp.ge.s32.totalorder %v104, %v754
        %vm765 = vcmp.ge.s32.totalorder %v105, %v754
        %vm766 = vcmp.ge.s32.totalorder %v106, %v754
        %vm767 = vcmp.ge.s32.totalorder %v107, %v754
        %vm768 = vcmp.ge.s32.totalorder %v108, %v754
        %vm769 = vcmp.ge.s32.totalorder %v109, %v754
        %vm770 = vcmp.ge.s32.totalorder %v110, %v754
        %vm771 = vcmp.ge.s32.totalorder %v111, %v754
        %vm772 = vcmp.ge.s32.totalorder %v112, %v754
        %vm773 = vcmp.ge.s32.totalorder %v113, %v754
        %vm774 = vcmp.ge.s32.totalorder %v114, %v754
        %vm775 = vcmp.ge.s32.totalorder %v115, %v754
        %vm776 = vcmp.ge.s32.totalorder %v116, %v754
        %vm777 = vcmp.ge.s32.totalorder %v117, %v754
        %vm778 = vcmp.ge.s32.totalorder %v118, %v754
        %vm779 = vcmp.ge.s32.totalorder %v119, %v754
        %vm780 = vcmp.ge.s32.totalorder %v120, %v754
        %vm781 = vcmp.ge.s32.totalorder %v121, %v754
        %vm782 = vcmp.ge.s32.totalorder %v122, %v754
        %vm783 = vcmp.ge.s32.totalorder %v123, %v754
        %vm784 = vcmp.ge.s32.totalorder %v124, %v754
        %vm785 = vcmp.ge.s32.totalorder %v125, %v754
        %vm786 = vcmp.ge.s32.totalorder %v126, %v754
        %vm787 = vcmp.ge.s32.totalorder %v127, %v754
        %vm788 = vcmp.ge.s32.totalorder %v128, %v754
        %vm789 = vcmp.ge.s32.totalorder %v129, %v754
        %vm790 = vcmp.ge.s32.totalorder %v130, %v754
        %v791 = vstv %s751
        %vm792 = vcmp.lt.s32.totalorder %v95, %v791
        %vm793 = vcmp.lt.s32.totalorder %v96, %v791
        %vm794 = vcmp.lt.s32.totalorder %v97, %v791
        %vm795 = vcmp.lt.s32.totalorder %v98, %v791
        %vm796 = vcmp.lt.s32.totalorder %v99, %v791
        %vm797 = vcmp.lt.s32.totalorder %v100, %v791
        %vm798 = vcmp.lt.s32.totalorder %v101, %v791
        %vm799 = vcmp.lt.s32.totalorder %v102, %v791
        %vm800 = vcmp.lt.s32.totalorder %v103, %v791
        %vm801 = vcmp.lt.s32.totalorder %v104, %v791
        %vm802 = vcmp.lt.s32.totalorder %v105, %v791
        %vm803 = vcmp.lt.s32.totalorder %v106, %v791
        %vm804 = vcmp.lt.s32.totalorder %v107, %v791
        %vm805 = vcmp.lt.s32.totalorder %v108, %v791
        %vm806 = vcmp.lt.s32.totalorder %v109, %v791
        %vm807 = vcmp.lt.s32.totalorder %v110, %v791
        %vm808 = vcmp.lt.s32.totalorder %v111, %v791
        %vm809 = vcmp.lt.s32.totalorder %v112, %v791
        %vm810 = vcmp.lt.s32.totalorder %v113, %v791
        %vm811 = vcmp.lt.s32.totalorder %v114, %v791
        %vm812 = vcmp.lt.s32.totalorder %v115, %v791
        %vm813 = vcmp.lt.s32.totalorder %v116, %v791
        %vm814 = vcmp.lt.s32.totalorder %v117, %v791
        %vm815 = vcmp.lt.s32.totalorder %v118, %v791
        %vm816 = vcmp.lt.s32.totalorder %v119, %v791
        %vm817 = vcmp.lt.s32.totalorder %v120, %v791
        %vm818 = vcmp.lt.s32.totalorder %v121, %v791
        %vm819 = vcmp.lt.s32.totalorder %v122, %v791
        %vm820 = vcmp.lt.s32.totalorder %v123, %v791
        %vm821 = vcmp.lt.s32.totalorder %v124, %v791
        %vm822 = vcmp.lt.s32.totalorder %v125, %v791
        %vm823 = vcmp.lt.s32.totalorder %v126, %v791
        %vm824 = vcmp.lt.s32.totalorder %v127, %v791
        %vm825 = vcmp.lt.s32.totalorder %v128, %v791
        %vm826 = vcmp.lt.s32.totalorder %v129, %v791
        %vm827 = vcmp.lt.s32.totalorder %v130, %v791
        %vm828 = vmand %vm755, %vm792
        %vm829 = vmand %vm756, %vm793
        %vm830 = vmand %vm757, %vm794
        %vm831 = vmand %vm758, %vm795
        %vm832 = vmand %vm759, %vm796
        %vm833 = vmand %vm760, %vm797
        %vm834 = vmand %vm761, %vm798
        %vm835 = vmand %vm762, %vm799
        %vm836 = vmand %vm763, %vm800
        %vm837 = vmand %vm764, %vm801
        %vm838 = vmand %vm765, %vm802
        %vm839 = vmand %vm766, %vm803
        %vm840 = vmand %vm767, %vm804
        %vm841 = vmand %vm768, %vm805
        %vm842 = vmand %vm769, %vm806
        %vm843 = vmand %vm770, %vm807
        %vm844 = vmand %vm771, %vm808
        %vm845 = vmand %vm772, %vm809
        %vm846 = vmand %vm773, %vm810
        %vm847 = vmand %vm774, %vm811
        %vm848 = vmand %vm775, %vm812
        %vm849 = vmand %vm776, %vm813
        %vm850 = vmand %vm777, %vm814
        %vm851 = vmand %vm778, %vm815
        %vm852 = vmand %vm779, %vm816
        %vm853 = vmand %vm780, %vm817
        %vm854 = vmand %vm781, %vm818
        %vm855 = vmand %vm782, %vm819
        %vm856 = vmand %vm783, %vm820
        %vm857 = vmand %vm784, %vm821
        %vm858 = vmand %vm785, %vm822
        %vm859 = vmand %vm786, %vm823
        %vm860 = vmand %vm787, %vm824
        %vm861 = vmand %vm788, %vm825
        %vm862 = vmand %vm789, %vm826
        %vm863 = vmand %vm790, %vm827
        %v864 = vsel %vm828, 8, 0
        %v865 = vsel %vm829, 8, 0
        %v866 = vsel %vm830, 8, 0
        %v867 = vsel %vm831, 8, 0
        %v868 = vsel %vm832, 8, 0
        %v869 = vsel %vm833, 8, 0
        %v870 = vsel %vm834, 8, 0
        %v871 = vsel %vm835, 8, 0
        %v872 = vsel %vm836, 8, 0
        %v873 = vsel %vm837, 8, 0
        %v874 = vsel %vm838, 8, 0
        %v875 = vsel %vm839, 8, 0
        %v876 = vsel %vm840, 8, 0
        %v877 = vsel %vm841, 8, 0
        %v878 = vsel %vm842, 8, 0
        %v879 = vsel %vm843, 8, 0
        %v880 = vsel %vm844, 8, 0
        %v881 = vsel %vm845, 8, 0
        %v882 = vsel %vm846, 8, 0
        %v883 = vsel %vm847, 8, 0
        %v884 = vsel %vm848, 8, 0
        %v885 = vsel %vm849, 8, 0
        %v886 = vsel %vm850, 8, 0
        %v887 = vsel %vm851, 8, 0
        %v888 = vsel %vm852, 8, 0
        %v889 = vsel %vm853, 8, 0
        %v890 = vsel %vm854, 8, 0
        %v891 = vsel %vm855, 8, 0
        %v892 = vsel %vm856, 8, 0
        %v893 = vsel %vm857, 8, 0
        %v894 = vsel %vm858, 8, 0
        %v895 = vsel %vm859, 8, 0
        %v896 = vsel %vm860, 8, 0
        %v897 = vsel %vm861, 8, 0
        %v898 = vsel %vm862, 8, 0
        %v899 = vsel %vm863, 8, 0
        %v900 = vor.u32 %v682, %v864
        %v901 = vor.u32 %v683, %v865
        %v902 = vor.u32 %v684, %v866
        %v903 = vor.u32 %v685, %v867
        %v904 = vor.u32 %v686, %v868
        %v905 = vor.u32 %v687, %v869
        %v906 = vor.u32 %v688, %v870
        %v907 = vor.u32 %v689, %v871
        %v908 = vor.u32 %v690, %v872
        %v909 = vor.u32 %v691, %v873
        %v910 = vor.u32 %v692, %v874
        %v911 = vor.u32 %v693, %v875
        %v912 = vor.u32 %v694, %v876
        %v913 = vor.u32 %v695, %v877
        %v914 = vor.u32 %v696, %v878
        %v915 = vor.u32 %v697, %v879
        %v916 = vor.u32 %v698, %v880
        %v917 = vor.u32 %v699, %v881
        %v918 = vor.u32 %v700, %v882
        %v919 = vor.u32 %v701, %v883
        %v920 = vor.u32 %v702, %v884
        %v921 = vor.u32 %v703, %v885
        %v922 = vor.u32 %v704, %v886
        %v923 = vor.u32 %v705, %v887
        %v924 = vor.u32 %v706, %v888
        %v925 = vor.u32 %v707, %v889
        %v926 = vor.u32 %v708, %v890
        %v927 = vor.u32 %v709, %v891
        %v928 = vor.u32 %v710, %v892
        %v929 = vor.u32 %v711, %v893
        %v930 = vor.u32 %v712, %v894
        %v931 = vor.u32 %v713, %v895
        %v932 = vor.u32 %v714, %v896
        %v933 = vor.u32 %v715, %v897
        %v934 = vor.u32 %v716, %v898
        %v935 = vor.u32 %v717, %v899
        %v936 = vstv %s752
        %vm937 = vcmp.ge.s32.totalorder %v132, %v936
        %vm938 = vcmp.ge.s32.totalorder %v133, %v936
        %vm939 = vcmp.ge.s32.totalorder %v134, %v936
        %vm940 = vcmp.ge.s32.totalorder %v135, %v936
        %vm941 = vcmp.ge.s32.totalorder %v136, %v936
        %vm942 = vcmp.ge.s32.totalorder %v137, %v936
        %v943 = vstv %s753
        %vm944 = vcmp.lt.s32.totalorder %v132, %v943
        %vm945 = vcmp.lt.s32.totalorder %v133, %v943
        %vm946 = vcmp.lt.s32.totalorder %v134, %v943
        %vm947 = vcmp.lt.s32.totalorder %v135, %v943
        %vm948 = vcmp.lt.s32.totalorder %v136, %v943
        %vm949 = vcmp.lt.s32.totalorder %v137, %v943
        %vm950 = vmand %vm937, %vm944
        %vm951 = vmand %vm938, %vm945
        %vm952 = vmand %vm939, %vm946
        %vm953 = vmand %vm940, %vm947
        %vm954 = vmand %vm941, %vm948
        %vm955 = vmand %vm942, %vm949
        %v956 = vsel %vm950, 8, 0
        %v957 = vsel %vm951, 8, 0
        %v958 = vsel %vm952, 8, 0
        %v959 = vsel %vm953, 8, 0
        %v960 = vsel %vm954, 8, 0
        %v961 = vsel %vm955, 8, 0
        %v962 = vor.u32 %v744, %v956
        %v963 = vor.u32 %v745, %v957
        %v964 = vor.u32 %v746, %v958
        %v965 = vor.u32 %v747, %v959
        %v966 = vor.u32 %v748, %v960
        %v967 = vor.u32 %v749, %v961
        %s968 = sld [smem:[#allocation3 + $0x10]]
        %s969 = sld [smem:[#allocation3 + $0x11]]
        %s970 = sld [smem:[#allocation3 + $0x12]]
        %s971 = sld [smem:[#allocation3 + $0x13]]
        %v972 = vstv %s968
        %vm973 = vcmp.ge.s32.totalorder %v95, %v972
        %vm974 = vcmp.ge.s32.totalorder %v96, %v972
        %vm975 = vcmp.ge.s32.totalorder %v97, %v972
        %vm976 = vcmp.ge.s32.totalorder %v98, %v972
        %vm977 = vcmp.ge.s32.totalorder %v99, %v972
        %vm978 = vcmp.ge.s32.totalorder %v100, %v972
        %vm979 = vcmp.ge.s32.totalorder %v101, %v972
        %vm980 = vcmp.ge.s32.totalorder %v102, %v972
        %vm981 = vcmp.ge.s32.totalorder %v103, %v972
        %vm982 = vcmp.ge.s32.totalorder %v104, %v972
        %vm983 = vcmp.ge.s32.totalorder %v105, %v972
        %vm984 = vcmp.ge.s32.totalorder %v106, %v972
        %vm985 = vcmp.ge.s32.totalorder %v107, %v972
        %vm986 = vcmp.ge.s32.totalorder %v108, %v972
        %vm987 = vcmp.ge.s32.totalorder %v109, %v972
        %vm988 = vcmp.ge.s32.totalorder %v110, %v972
        %vm989 = vcmp.ge.s32.totalorder %v111, %v972
        %vm990 = vcmp.ge.s32.totalorder %v112, %v972
        %vm991 = vcmp.ge.s32.totalorder %v113, %v972
        %vm992 = vcmp.ge.s32.totalorder %v114, %v972
        %vm993 = vcmp.ge.s32.totalorder %v115, %v972
        %vm994 = vcmp.ge.s32.totalorder %v116, %v972
        %vm995 = vcmp.ge.s32.totalorder %v117, %v972
        %vm996 = vcmp.ge.s32.totalorder %v118, %v972
        %vm997 = vcmp.ge.s32.totalorder %v119, %v972
        %vm998 = vcmp.ge.s32.totalorder %v120, %v972
        %vm999 = vcmp.ge.s32.totalorder %v121, %v972
        %vm1000 = vcmp.ge.s32.totalorder %v122, %v972
        %vm1001 = vcmp.ge.s32.totalorder %v123, %v972
        %vm1002 = vcmp.ge.s32.totalorder %v124, %v972
        %vm1003 = vcmp.ge.s32.totalorder %v125, %v972
        %vm1004 = vcmp.ge.s32.totalorder %v126, %v972
        %vm1005 = vcmp.ge.s32.totalorder %v127, %v972
        %vm1006 = vcmp.ge.s32.totalorder %v128, %v972
        %vm1007 = vcmp.ge.s32.totalorder %v129, %v972
        %vm1008 = vcmp.ge.s32.totalorder %v130, %v972
        %v1009 = vstv %s969
        %vm1010 = vcmp.lt.s32.totalorder %v95, %v1009
        %vm1011 = vcmp.lt.s32.totalorder %v96, %v1009
        %vm1012 = vcmp.lt.s32.totalorder %v97, %v1009
        %vm1013 = vcmp.lt.s32.totalorder %v98, %v1009
        %vm1014 = vcmp.lt.s32.totalorder %v99, %v1009
        %vm1015 = vcmp.lt.s32.totalorder %v100, %v1009
        %vm1016 = vcmp.lt.s32.totalorder %v101, %v1009
        %vm1017 = vcmp.lt.s32.totalorder %v102, %v1009
        %vm1018 = vcmp.lt.s32.totalorder %v103, %v1009
        %vm1019 = vcmp.lt.s32.totalorder %v104, %v1009
        %vm1020 = vcmp.lt.s32.totalorder %v105, %v1009
        %vm1021 = vcmp.lt.s32.totalorder %v106, %v1009
        %vm1022 = vcmp.lt.s32.totalorder %v107, %v1009
        %vm1023 = vcmp.lt.s32.totalorder %v108, %v1009
        %vm1024 = vcmp.lt.s32.totalorder %v109, %v1009
        %vm1025 = vcmp.lt.s32.totalorder %v110, %v1009
        %vm1026 = vcmp.lt.s32.totalorder %v111, %v1009
        %vm1027 = vcmp.lt.s32.totalorder %v112, %v1009
        %vm1028 = vcmp.lt.s32.totalorder %v113, %v1009
        %vm1029 = vcmp.lt.s32.totalorder %v114, %v1009
        %vm1030 = vcmp.lt.s32.totalorder %v115, %v1009
        %vm1031 = vcmp.lt.s32.totalorder %v116, %v1009
        %vm1032 = vcmp.lt.s32.totalorder %v117, %v1009
        %vm1033 = vcmp.lt.s32.totalorder %v118, %v1009
        %vm1034 = vcmp.lt.s32.totalorder %v119, %v1009
        %vm1035 = vcmp.lt.s32.totalorder %v120, %v1009
        %vm1036 = vcmp.lt.s32.totalorder %v121, %v1009
        %vm1037 = vcmp.lt.s32.totalorder %v122, %v1009
        %vm1038 = vcmp.lt.s32.totalorder %v123, %v1009
        %vm1039 = vcmp.lt.s32.totalorder %v124, %v1009
        %vm1040 = vcmp.lt.s32.totalorder %v125, %v1009
        %vm1041 = vcmp.lt.s32.totalorder %v126, %v1009
        %vm1042 = vcmp.lt.s32.totalorder %v127, %v1009
        %vm1043 = vcmp.lt.s32.totalorder %v128, %v1009
        %vm1044 = vcmp.lt.s32.totalorder %v129, %v1009
        %vm1045 = vcmp.lt.s32.totalorder %v130, %v1009
        %vm1046 = vmand %vm973, %vm1010
        %vm1047 = vmand %vm974, %vm1011
        %vm1048 = vmand %vm975, %vm1012
        %vm1049 = vmand %vm976, %vm1013
        %vm1050 = vmand %vm977, %vm1014
        %vm1051 = vmand %vm978, %vm1015
        %vm1052 = vmand %vm979, %vm1016
        %vm1053 = vmand %vm980, %vm1017
        %vm1054 = vmand %vm981, %vm1018
        %vm1055 = vmand %vm982, %vm1019
        %vm1056 = vmand %vm983, %vm1020
        %vm1057 = vmand %vm984, %vm1021
        %vm1058 = vmand %vm985, %vm1022
        %vm1059 = vmand %vm986, %vm1023
        %vm1060 = vmand %vm987, %vm1024
        %vm1061 = vmand %vm988, %vm1025
        %vm1062 = vmand %vm989, %vm1026
        %vm1063 = vmand %vm990, %vm1027
        %vm1064 = vmand %vm991, %vm1028
        %vm1065 = vmand %vm992, %vm1029
        %vm1066 = vmand %vm993, %vm1030
        %vm1067 = vmand %vm994, %vm1031
        %vm1068 = vmand %vm995, %vm1032
        %vm1069 = vmand %vm996, %vm1033
        %vm1070 = vmand %vm997, %vm1034
        %vm1071 = vmand %vm998, %vm1035
        %vm1072 = vmand %vm999, %vm1036
        %vm1073 = vmand %vm1000, %vm1037
        %vm1074 = vmand %vm1001, %vm1038
        %vm1075 = vmand %vm1002, %vm1039
        %vm1076 = vmand %vm1003, %vm1040
        %vm1077 = vmand %vm1004, %vm1041
        %vm1078 = vmand %vm1005, %vm1042
        %vm1079 = vmand %vm1006, %vm1043
        %vm1080 = vmand %vm1007, %vm1044
        %vm1081 = vmand %vm1008, %vm1045
        %v1082 = vsel %vm1046, 16, 0
        %v1083 = vsel %vm1047, 16, 0
        %v1084 = vsel %vm1048, 16, 0
        %v1085 = vsel %vm1049, 16, 0
        %v1086 = vsel %vm1050, 16, 0
        %v1087 = vsel %vm1051, 16, 0
        %v1088 = vsel %vm1052, 16, 0
        %v1089 = vsel %vm1053, 16, 0
        %v1090 = vsel %vm1054, 16, 0
        %v1091 = vsel %vm1055, 16, 0
        %v1092 = vsel %vm1056, 16, 0
        %v1093 = vsel %vm1057, 16, 0
        %v1094 = vsel %vm1058, 16, 0
        %v1095 = vsel %vm1059, 16, 0
        %v1096 = vsel %vm1060, 16, 0
        %v1097 = vsel %vm1061, 16, 0
        %v1098 = vsel %vm1062, 16, 0
        %v1099 = vsel %vm1063, 16, 0
        %v1100 = vsel %vm1064, 16, 0
        %v1101 = vsel %vm1065, 16, 0
        %v1102 = vsel %vm1066, 16, 0
        %v1103 = vsel %vm1067, 16, 0
        %v1104 = vsel %vm1068, 16, 0
        %v1105 = vsel %vm1069, 16, 0
        %v1106 = vsel %vm1070, 16, 0
        %v1107 = vsel %vm1071, 16, 0
        %v1108 = vsel %vm1072, 16, 0
        %v1109 = vsel %vm1073, 16, 0
        %v1110 = vsel %vm1074, 16, 0
        %v1111 = vsel %vm1075, 16, 0
        %v1112 = vsel %vm1076, 16, 0
        %v1113 = vsel %vm1077, 16, 0
        %v1114 = vsel %vm1078, 16, 0
        %v1115 = vsel %vm1079, 16, 0
        %v1116 = vsel %vm1080, 16, 0
        %v1117 = vsel %vm1081, 16, 0
        %v1118 = vor.u32 %v900, %v1082
        %v1119 = vor.u32 %v901, %v1083
        %v1120 = vor.u32 %v902, %v1084
        %v1121 = vor.u32 %v903, %v1085
        %v1122 = vor.u32 %v904, %v1086
        %v1123 = vor.u32 %v905, %v1087
        %v1124 = vor.u32 %v906, %v1088
        %v1125 = vor.u32 %v907, %v1089
        %v1126 = vor.u32 %v908, %v1090
        %v1127 = vor.u32 %v909, %v1091
        %v1128 = vor.u32 %v910, %v1092
        %v1129 = vor.u32 %v911, %v1093
        %v1130 = vor.u32 %v912, %v1094
        %v1131 = vor.u32 %v913, %v1095
        %v1132 = vor.u32 %v914, %v1096
        %v1133 = vor.u32 %v915, %v1097
        %v1134 = vor.u32 %v916, %v1098
        %v1135 = vor.u32 %v917, %v1099
        %v1136 = vor.u32 %v918, %v1100
        %v1137 = vor.u32 %v919, %v1101
        %v1138 = vor.u32 %v920, %v1102
        %v1139 = vor.u32 %v921, %v1103
        %v1140 = vor.u32 %v922, %v1104
        %v1141 = vor.u32 %v923, %v1105
        %v1142 = vor.u32 %v924, %v1106
        %v1143 = vor.u32 %v925, %v1107
        %v1144 = vor.u32 %v926, %v1108
        %v1145 = vor.u32 %v927, %v1109
        %v1146 = vor.u32 %v928, %v1110
        %v1147 = vor.u32 %v929, %v1111
        %v1148 = vor.u32 %v930, %v1112
        %v1149 = vor.u32 %v931, %v1113
        %v1150 = vor.u32 %v932, %v1114
        %v1151 = vor.u32 %v933, %v1115
        %v1152 = vor.u32 %v934, %v1116
        %v1153 = vor.u32 %v935, %v1117
        %v1154 = vstv %s970
        %vm1155 = vcmp.ge.s32.totalorder %v132, %v1154
        %vm1156 = vcmp.ge.s32.totalorder %v133, %v1154
        %vm1157 = vcmp.ge.s32.totalorder %v134, %v1154
        %vm1158 = vcmp.ge.s32.totalorder %v135, %v1154
        %vm1159 = vcmp.ge.s32.totalorder %v136, %v1154
        %vm1160 = vcmp.ge.s32.totalorder %v137, %v1154
        %v1161 = vstv %s971
        %vm1162 = vcmp.lt.s32.totalorder %v132, %v1161
        %vm1163 = vcmp.lt.s32.totalorder %v133, %v1161
        %vm1164 = vcmp.lt.s32.totalorder %v134, %v1161
        %vm1165 = vcmp.lt.s32.totalorder %v135, %v1161
        %vm1166 = vcmp.lt.s32.totalorder %v136, %v1161
        %vm1167 = vcmp.lt.s32.totalorder %v137, %v1161
        %vm1168 = vmand %vm1155, %vm1162
        %vm1169 = vmand %vm1156, %vm1163
        %vm1170 = vmand %vm1157, %vm1164
        %vm1171 = vmand %vm1158, %vm1165
        %vm1172 = vmand %vm1159, %vm1166
        %vm1173 = vmand %vm1160, %vm1167
        %v1174 = vsel %vm1168, 16, 0
        %v1175 = vsel %vm1169, 16, 0
        %v1176 = vsel %vm1170, 16, 0
        %v1177 = vsel %vm1171, 16, 0
        %v1178 = vsel %vm1172, 16, 0
        %v1179 = vsel %vm1173, 16, 0
        %v1180 = vor.u32 %v962, %v1174
        %v1181 = vor.u32 %v963, %v1175
        %v1182 = vor.u32 %v964, %v1176
        %v1183 = vor.u32 %v965, %v1177
        %v1184 = vor.u32 %v966, %v1178
        %v1185 = vor.u32 %v967, %v1179
        %s1186 = sld [smem:[#allocation3 + $0x14]]
        %s1187 = sld [smem:[#allocation3 + $0x15]]
        %s1188 = sld [smem:[#allocation3 + $0x16]]
        %s1189 = sld [smem:[#allocation3 + $0x17]]
        %v1190 = vstv %s1186
        %vm1191 = vcmp.ge.s32.totalorder %v95, %v1190
        %vm1192 = vcmp.ge.s32.totalorder %v96, %v1190
        %vm1193 = vcmp.ge.s32.totalorder %v97, %v1190
        %vm1194 = vcmp.ge.s32.totalorder %v98, %v1190
        %vm1195 = vcmp.ge.s32.totalorder %v99, %v1190
        %vm1196 = vcmp.ge.s32.totalorder %v100, %v1190
        %vm1197 = vcmp.ge.s32.totalorder %v101, %v1190
        %vm1198 = vcmp.ge.s32.totalorder %v102, %v1190
        %vm1199 = vcmp.ge.s32.totalorder %v103, %v1190
        %vm1200 = vcmp.ge.s32.totalorder %v104, %v1190
        %vm1201 = vcmp.ge.s32.totalorder %v105, %v1190
        %vm1202 = vcmp.ge.s32.totalorder %v106, %v1190
        %vm1203 = vcmp.ge.s32.totalorder %v107, %v1190
        %vm1204 = vcmp.ge.s32.totalorder %v108, %v1190
        %vm1205 = vcmp.ge.s32.totalorder %v109, %v1190
        %vm1206 = vcmp.ge.s32.totalorder %v110, %v1190
        %vm1207 = vcmp.ge.s32.totalorder %v111, %v1190
        %vm1208 = vcmp.ge.s32.totalorder %v112, %v1190
        %vm1209 = vcmp.ge.s32.totalorder %v113, %v1190
        %vm1210 = vcmp.ge.s32.totalorder %v114, %v1190
        %vm1211 = vcmp.ge.s32.totalorder %v115, %v1190
        %vm1212 = vcmp.ge.s32.totalorder %v116, %v1190
        %vm1213 = vcmp.ge.s32.totalorder %v117, %v1190
        %vm1214 = vcmp.ge.s32.totalorder %v118, %v1190
        %vm1215 = vcmp.ge.s32.totalorder %v119, %v1190
        %vm1216 = vcmp.ge.s32.totalorder %v120, %v1190
        %vm1217 = vcmp.ge.s32.totalorder %v121, %v1190
        %vm1218 = vcmp.ge.s32.totalorder %v122, %v1190
        %vm1219 = vcmp.ge.s32.totalorder %v123, %v1190
        %vm1220 = vcmp.ge.s32.totalorder %v124, %v1190
        %vm1221 = vcmp.ge.s32.totalorder %v125, %v1190
        %vm1222 = vcmp.ge.s32.totalorder %v126, %v1190
        %vm1223 = vcmp.ge.s32.totalorder %v127, %v1190
        %vm1224 = vcmp.ge.s32.totalorder %v128, %v1190
        %vm1225 = vcmp.ge.s32.totalorder %v129, %v1190
        %vm1226 = vcmp.ge.s32.totalorder %v130, %v1190
        %v1227 = vstv %s1187
        %vm1228 = vcmp.lt.s32.totalorder %v95, %v1227
        %vm1229 = vcmp.lt.s32.totalorder %v96, %v1227
        %vm1230 = vcmp.lt.s32.totalorder %v97, %v1227
        %vm1231 = vcmp.lt.s32.totalorder %v98, %v1227
        %vm1232 = vcmp.lt.s32.totalorder %v99, %v1227
        %vm1233 = vcmp.lt.s32.totalorder %v100, %v1227
        %vm1234 = vcmp.lt.s32.totalorder %v101, %v1227
        %vm1235 = vcmp.lt.s32.totalorder %v102, %v1227
        %vm1236 = vcmp.lt.s32.totalorder %v103, %v1227
        %vm1237 = vcmp.lt.s32.totalorder %v104, %v1227
        %vm1238 = vcmp.lt.s32.totalorder %v105, %v1227
        %vm1239 = vcmp.lt.s32.totalorder %v106, %v1227
        %vm1240 = vcmp.lt.s32.totalorder %v107, %v1227
        %vm1241 = vcmp.lt.s32.totalorder %v108, %v1227
        %vm1242 = vcmp.lt.s32.totalorder %v109, %v1227
        %vm1243 = vcmp.lt.s32.totalorder %v110, %v1227
        %vm1244 = vcmp.lt.s32.totalorder %v111, %v1227
        %vm1245 = vcmp.lt.s32.totalorder %v112, %v1227
        %vm1246 = vcmp.lt.s32.totalorder %v113, %v1227
        %vm1247 = vcmp.lt.s32.totalorder %v114, %v1227
        %vm1248 = vcmp.lt.s32.totalorder %v115, %v1227
        %vm1249 = vcmp.lt.s32.totalorder %v116, %v1227
        %vm1250 = vcmp.lt.s32.totalorder %v117, %v1227
        %vm1251 = vcmp.lt.s32.totalorder %v118, %v1227
        %vm1252 = vcmp.lt.s32.totalorder %v119, %v1227
        %vm1253 = vcmp.lt.s32.totalorder %v120, %v1227
        %vm1254 = vcmp.lt.s32.totalorder %v121, %v1227
        %vm1255 = vcmp.lt.s32.totalorder %v122, %v1227
        %vm1256 = vcmp.lt.s32.totalorder %v123, %v1227
        %vm1257 = vcmp.lt.s32.totalorder %v124, %v1227
        %vm1258 = vcmp.lt.s32.totalorder %v125, %v1227
        %vm1259 = vcmp.lt.s32.totalorder %v126, %v1227
        %vm1260 = vcmp.lt.s32.totalorder %v127, %v1227
        %vm1261 = vcmp.lt.s32.totalorder %v128, %v1227
        %vm1262 = vcmp.lt.s32.totalorder %v129, %v1227
        %vm1263 = vcmp.lt.s32.totalorder %v130, %v1227
        %vm1264 = vmand %vm1191, %vm1228
        %vm1265 = vmand %vm1192, %vm1229
        %vm1266 = vmand %vm1193, %vm1230
        %vm1267 = vmand %vm1194, %vm1231
        %vm1268 = vmand %vm1195, %vm1232
        %vm1269 = vmand %vm1196, %vm1233
        %vm1270 = vmand %vm1197, %vm1234
        %vm1271 = vmand %vm1198, %vm1235
        %vm1272 = vmand %vm1199, %vm1236
        %vm1273 = vmand %vm1200, %vm1237
        %vm1274 = vmand %vm1201, %vm1238
        %vm1275 = vmand %vm1202, %vm1239
        %vm1276 = vmand %vm1203, %vm1240
        %vm1277 = vmand %vm1204, %vm1241
        %vm1278 = vmand %vm1205, %vm1242
        %vm1279 = vmand %vm1206, %vm1243
        %vm1280 = vmand %vm1207, %vm1244
        %vm1281 = vmand %vm1208, %vm1245
        %vm1282 = vmand %vm1209, %vm1246
        %vm1283 = vmand %vm1210, %vm1247
        %vm1284 = vmand %vm1211, %vm1248
        %vm1285 = vmand %vm1212, %vm1249
        %vm1286 = vmand %vm1213, %vm1250
        %vm1287 = vmand %vm1214, %vm1251
        %vm1288 = vmand %vm1215, %vm1252
        %vm1289 = vmand %vm1216, %vm1253
        %vm1290 = vmand %vm1217, %vm1254
        %vm1291 = vmand %vm1218, %vm1255
        %vm1292 = vmand %vm1219, %vm1256
        %vm1293 = vmand %vm1220, %vm1257
        %vm1294 = vmand %vm1221, %vm1258
        %vm1295 = vmand %vm1222, %vm1259
        %vm1296 = vmand %vm1223, %vm1260
        %vm1297 = vmand %vm1224, %vm1261
        %vm1298 = vmand %vm1225, %vm1262
        %vm1299 = vmand %vm1226, %vm1263
        %v1300 = vsel %vm1264, 32, 0
        %v1301 = vsel %vm1265, 32, 0
        %v1302 = vsel %vm1266, 32, 0
        %v1303 = vsel %vm1267, 32, 0
        %v1304 = vsel %vm1268, 32, 0
        %v1305 = vsel %vm1269, 32, 0
        %v1306 = vsel %vm1270, 32, 0
        %v1307 = vsel %vm1271, 32, 0
        %v1308 = vsel %vm1272, 32, 0
        %v1309 = vsel %vm1273, 32, 0
        %v1310 = vsel %vm1274, 32, 0
        %v1311 = vsel %vm1275, 32, 0
        %v1312 = vsel %vm1276, 32, 0
        %v1313 = vsel %vm1277, 32, 0
        %v1314 = vsel %vm1278, 32, 0
        %v1315 = vsel %vm1279, 32, 0
        %v1316 = vsel %vm1280, 32, 0
        %v1317 = vsel %vm1281, 32, 0
        %v1318 = vsel %vm1282, 32, 0
        %v1319 = vsel %vm1283, 32, 0
        %v1320 = vsel %vm1284, 32, 0
        %v1321 = vsel %vm1285, 32, 0
        %v1322 = vsel %vm1286, 32, 0
        %v1323 = vsel %vm1287, 32, 0
        %v1324 = vsel %vm1288, 32, 0
        %v1325 = vsel %vm1289, 32, 0
        %v1326 = vsel %vm1290, 32, 0
        %v1327 = vsel %vm1291, 32, 0
        %v1328 = vsel %vm1292, 32, 0
        %v1329 = vsel %vm1293, 32, 0
        %v1330 = vsel %vm1294, 32, 0
        %v1331 = vsel %vm1295, 32, 0
        %v1332 = vsel %vm1296, 32, 0
        %v1333 = vsel %vm1297, 32, 0
        %v1334 = vsel %vm1298, 32, 0
        %v1335 = vsel %vm1299, 32, 0
        %v1336 = vor.u32 %v1118, %v1300
        %v1337 = vor.u32 %v1119, %v1301
        %v1338 = vor.u32 %v1120, %v1302
        %v1339 = vor.u32 %v1121, %v1303
        %v1340 = vor.u32 %v1122, %v1304
        %v1341 = vor.u32 %v1123, %v1305
        %v1342 = vor.u32 %v1124, %v1306
        %v1343 = vor.u32 %v1125, %v1307
        %v1344 = vor.u32 %v1126, %v1308
        %v1345 = vor.u32 %v1127, %v1309
        %v1346 = vor.u32 %v1128, %v1310
        %v1347 = vor.u32 %v1129, %v1311
        %v1348 = vor.u32 %v1130, %v1312
        %v1349 = vor.u32 %v1131, %v1313
        %v1350 = vor.u32 %v1132, %v1314
        %v1351 = vor.u32 %v1133, %v1315
        %v1352 = vor.u32 %v1134, %v1316
        %v1353 = vor.u32 %v1135, %v1317
        %v1354 = vor.u32 %v1136, %v1318
        %v1355 = vor.u32 %v1137, %v1319
        %v1356 = vor.u32 %v1138, %v1320
        %v1357 = vor.u32 %v1139, %v1321
        %v1358 = vor.u32 %v1140, %v1322
        %v1359 = vor.u32 %v1141, %v1323
        %v1360 = vor.u32 %v1142, %v1324
        %v1361 = vor.u32 %v1143, %v1325
        %v1362 = vor.u32 %v1144, %v1326
        %v1363 = vor.u32 %v1145, %v1327
        %v1364 = vor.u32 %v1146, %v1328
        %v1365 = vor.u32 %v1147, %v1329
        %v1366 = vor.u32 %v1148, %v1330
        %v1367 = vor.u32 %v1149, %v1331
        %v1368 = vor.u32 %v1150, %v1332
        %v1369 = vor.u32 %v1151, %v1333
        %v1370 = vor.u32 %v1152, %v1334
        %v1371 = vor.u32 %v1153, %v1335
        %v1372 = vstv %s1188
        %vm1373 = vcmp.ge.s32.totalorder %v132, %v1372
        %vm1374 = vcmp.ge.s32.totalorder %v133, %v1372
        %vm1375 = vcmp.ge.s32.totalorder %v134, %v1372
        %vm1376 = vcmp.ge.s32.totalorder %v135, %v1372
        %vm1377 = vcmp.ge.s32.totalorder %v136, %v1372
        %vm1378 = vcmp.ge.s32.totalorder %v137, %v1372
        %v1379 = vstv %s1189
        %vm1380 = vcmp.lt.s32.totalorder %v132, %v1379
        %vm1381 = vcmp.lt.s32.totalorder %v133, %v1379
        %vm1382 = vcmp.lt.s32.totalorder %v134, %v1379
        %vm1383 = vcmp.lt.s32.totalorder %v135, %v1379
        %vm1384 = vcmp.lt.s32.totalorder %v136, %v1379
        %vm1385 = vcmp.lt.s32.totalorder %v137, %v1379
        %vm1386 = vmand %vm1373, %vm1380
        %vm1387 = vmand %vm1374, %vm1381
        %vm1388 = vmand %vm1375, %vm1382
        %vm1389 = vmand %vm1376, %vm1383
        %vm1390 = vmand %vm1377, %vm1384
        %vm1391 = vmand %vm1378, %vm1385
        %v1392 = vsel %vm1386, 32, 0
        %v1393 = vsel %vm1387, 32, 0
        %v1394 = vsel %vm1388, 32, 0
        %v1395 = vsel %vm1389, 32, 0
        %v1396 = vsel %vm1390, 32, 0
        %v1397 = vsel %vm1391, 32, 0
        %v1398 = vor.u32 %v1180, %v1392
        %v1399 = vor.u32 %v1181, %v1393
        %v1400 = vor.u32 %v1182, %v1394
        %v1401 = vor.u32 %v1183, %v1395
        %v1402 = vor.u32 %v1184, %v1396
        %v1403 = vor.u32 %v1185, %v1397
        %s1404 = sld [smem:[#allocation3 + $0x18]]
        %s1405 = sld [smem:[#allocation3 + $0x19]]
        %s1406 = sld [smem:[#allocation3 + $0x1a]]
        %s1407 = sld [smem:[#allocation3 + $0x1b]]
        %v1408 = vstv %s1404
        %vm1409 = vcmp.ge.s32.totalorder %v95, %v1408
        %vm1410 = vcmp.ge.s32.totalorder %v96, %v1408
        %vm1411 = vcmp.ge.s32.totalorder %v97, %v1408
        %vm1412 = vcmp.ge.s32.totalorder %v98, %v1408
        %vm1413 = vcmp.ge.s32.totalorder %v99, %v1408
        %vm1414 = vcmp.ge.s32.totalorder %v100, %v1408
        %vm1415 = vcmp.ge.s32.totalorder %v101, %v1408
        %vm1416 = vcmp.ge.s32.totalorder %v102, %v1408
        %vm1417 = vcmp.ge.s32.totalorder %v103, %v1408
        %vm1418 = vcmp.ge.s32.totalorder %v104, %v1408
        %vm1419 = vcmp.ge.s32.totalorder %v105, %v1408
        %vm1420 = vcmp.ge.s32.totalorder %v106, %v1408
        %vm1421 = vcmp.ge.s32.totalorder %v107, %v1408
        %vm1422 = vcmp.ge.s32.totalorder %v108, %v1408
        %vm1423 = vcmp.ge.s32.totalorder %v109, %v1408
        %vm1424 = vcmp.ge.s32.totalorder %v110, %v1408
        %vm1425 = vcmp.ge.s32.totalorder %v111, %v1408
        %vm1426 = vcmp.ge.s32.totalorder %v112, %v1408
        %vm1427 = vcmp.ge.s32.totalorder %v113, %v1408
        %vm1428 = vcmp.ge.s32.totalorder %v114, %v1408
        %vm1429 = vcmp.ge.s32.totalorder %v115, %v1408
        %vm1430 = vcmp.ge.s32.totalorder %v116, %v1408
        %vm1431 = vcmp.ge.s32.totalorder %v117, %v1408
        %vm1432 = vcmp.ge.s32.totalorder %v118, %v1408
        %vm1433 = vcmp.ge.s32.totalorder %v119, %v1408
        %vm1434 = vcmp.ge.s32.totalorder %v120, %v1408
        %vm1435 = vcmp.ge.s32.totalorder %v121, %v1408
        %vm1436 = vcmp.ge.s32.totalorder %v122, %v1408
        %vm1437 = vcmp.ge.s32.totalorder %v123, %v1408
        %vm1438 = vcmp.ge.s32.totalorder %v124, %v1408
        %vm1439 = vcmp.ge.s32.totalorder %v125, %v1408
        %vm1440 = vcmp.ge.s32.totalorder %v126, %v1408
        %vm1441 = vcmp.ge.s32.totalorder %v127, %v1408
        %vm1442 = vcmp.ge.s32.totalorder %v128, %v1408
        %vm1443 = vcmp.ge.s32.totalorder %v129, %v1408
        %vm1444 = vcmp.ge.s32.totalorder %v130, %v1408
        %v1445 = vstv %s1405
        %vm1446 = vcmp.lt.s32.totalorder %v95, %v1445
        %vm1447 = vcmp.lt.s32.totalorder %v96, %v1445
        %vm1448 = vcmp.lt.s32.totalorder %v97, %v1445
        %vm1449 = vcmp.lt.s32.totalorder %v98, %v1445
        %vm1450 = vcmp.lt.s32.totalorder %v99, %v1445
        %vm1451 = vcmp.lt.s32.totalorder %v100, %v1445
        %vm1452 = vcmp.lt.s32.totalorder %v101, %v1445
        %vm1453 = vcmp.lt.s32.totalorder %v102, %v1445
        %vm1454 = vcmp.lt.s32.totalorder %v103, %v1445
        %vm1455 = vcmp.lt.s32.totalorder %v104, %v1445
        %vm1456 = vcmp.lt.s32.totalorder %v105, %v1445
        %vm1457 = vcmp.lt.s32.totalorder %v106, %v1445
        %vm1458 = vcmp.lt.s32.totalorder %v107, %v1445
        %vm1459 = vcmp.lt.s32.totalorder %v108, %v1445
        %vm1460 = vcmp.lt.s32.totalorder %v109, %v1445
        %vm1461 = vcmp.lt.s32.totalorder %v110, %v1445
        %vm1462 = vcmp.lt.s32.totalorder %v111, %v1445
        %vm1463 = vcmp.lt.s32.totalorder %v112, %v1445
        %vm1464 = vcmp.lt.s32.totalorder %v113, %v1445
        %vm1465 = vcmp.lt.s32.totalorder %v114, %v1445
        %vm1466 = vcmp.lt.s32.totalorder %v115, %v1445
        %vm1467 = vcmp.lt.s32.totalorder %v116, %v1445
        %vm1468 = vcmp.lt.s32.totalorder %v117, %v1445
        %vm1469 = vcmp.lt.s32.totalorder %v118, %v1445
        %vm1470 = vcmp.lt.s32.totalorder %v119, %v1445
        %vm1471 = vcmp.lt.s32.totalorder %v120, %v1445
        %vm1472 = vcmp.lt.s32.totalorder %v121, %v1445
        %vm1473 = vcmp.lt.s32.totalorder %v122, %v1445
        %vm1474 = vcmp.lt.s32.totalorder %v123, %v1445
        %vm1475 = vcmp.lt.s32.totalorder %v124, %v1445
        %vm1476 = vcmp.lt.s32.totalorder %v125, %v1445
        %vm1477 = vcmp.lt.s32.totalorder %v126, %v1445
        %vm1478 = vcmp.lt.s32.totalorder %v127, %v1445
        %vm1479 = vcmp.lt.s32.totalorder %v128, %v1445
        %vm1480 = vcmp.lt.s32.totalorder %v129, %v1445
        %vm1481 = vcmp.lt.s32.totalorder %v130, %v1445
        %vm1482 = vmand %vm1409, %vm1446
        %vm1483 = vmand %vm1410, %vm1447
        %vm1484 = vmand %vm1411, %vm1448
        %vm1485 = vmand %vm1412, %vm1449
        %vm1486 = vmand %vm1413, %vm1450
        %vm1487 = vmand %vm1414, %vm1451
        %vm1488 = vmand %vm1415, %vm1452
        %vm1489 = vmand %vm1416, %vm1453
        %vm1490 = vmand %vm1417, %vm1454
        %vm1491 = vmand %vm1418, %vm1455
        %vm1492 = vmand %vm1419, %vm1456
        %vm1493 = vmand %vm1420, %vm1457
        %vm1494 = vmand %vm1421, %vm1458
        %vm1495 = vmand %vm1422, %vm1459
        %vm1496 = vmand %vm1423, %vm1460
        %vm1497 = vmand %vm1424, %vm1461
        %vm1498 = vmand %vm1425, %vm1462
        %vm1499 = vmand %vm1426, %vm1463
        %vm1500 = vmand %vm1427, %vm1464
        %vm1501 = vmand %vm1428, %vm1465
        %vm1502 = vmand %vm1429, %vm1466
        %vm1503 = vmand %vm1430, %vm1467
        %vm1504 = vmand %vm1431, %vm1468
        %vm1505 = vmand %vm1432, %vm1469
        %vm1506 = vmand %vm1433, %vm1470
        %vm1507 = vmand %vm1434, %vm1471
        %vm1508 = vmand %vm1435, %vm1472
        %vm1509 = vmand %vm1436, %vm1473
        %vm1510 = vmand %vm1437, %vm1474
        %vm1511 = vmand %vm1438, %vm1475
        %vm1512 = vmand %vm1439, %vm1476
        %vm1513 = vmand %vm1440, %vm1477
        %vm1514 = vmand %vm1441, %vm1478
        %vm1515 = vmand %vm1442, %vm1479
        %vm1516 = vmand %vm1443, %vm1480
        %vm1517 = vmand %vm1444, %vm1481
        %v1518 = vsel %vm1482, 64, 0
        %v1519 = vsel %vm1483, 64, 0
        %v1520 = vsel %vm1484, 64, 0
        %v1521 = vsel %vm1485, 64, 0
        %v1522 = vsel %vm1486, 64, 0
        %v1523 = vsel %vm1487, 64, 0
        %v1524 = vsel %vm1488, 64, 0
        %v1525 = vsel %vm1489, 64, 0
        %v1526 = vsel %vm1490, 64, 0
        %v1527 = vsel %vm1491, 64, 0
        %v1528 = vsel %vm1492, 64, 0
        %v1529 = vsel %vm1493, 64, 0
        %v1530 = vsel %vm1494, 64, 0
        %v1531 = vsel %vm1495, 64, 0
        %v1532 = vsel %vm1496, 64, 0
        %v1533 = vsel %vm1497, 64, 0
        %v1534 = vsel %vm1498, 64, 0
        %v1535 = vsel %vm1499, 64, 0
        %v1536 = vsel %vm1500, 64, 0
        %v1537 = vsel %vm1501, 64, 0
        %v1538 = vsel %vm1502, 64, 0
        %v1539 = vsel %vm1503, 64, 0
        %v1540 = vsel %vm1504, 64, 0
        %v1541 = vsel %vm1505, 64, 0
        %v1542 = vsel %vm1506, 64, 0
        %v1543 = vsel %vm1507, 64, 0
        %v1544 = vsel %vm1508, 64, 0
        %v1545 = vsel %vm1509, 64, 0
        %v1546 = vsel %vm1510, 64, 0
        %v1547 = vsel %vm1511, 64, 0
        %v1548 = vsel %vm1512, 64, 0
        %v1549 = vsel %vm1513, 64, 0
        %v1550 = vsel %vm1514, 64, 0
        %v1551 = vsel %vm1515, 64, 0
        %v1552 = vsel %vm1516, 64, 0
        %v1553 = vsel %vm1517, 64, 0
        %v1554 = vor.u32 %v1336, %v1518
        %v1555 = vor.u32 %v1337, %v1519
        %v1556 = vor.u32 %v1338, %v1520
        %v1557 = vor.u32 %v1339, %v1521
        %v1558 = vor.u32 %v1340, %v1522
        %v1559 = vor.u32 %v1341, %v1523
        %v1560 = vor.u32 %v1342, %v1524
        %v1561 = vor.u32 %v1343, %v1525
        %v1562 = vor.u32 %v1344, %v1526
        %v1563 = vor.u32 %v1345, %v1527
        %v1564 = vor.u32 %v1346, %v1528
        %v1565 = vor.u32 %v1347, %v1529
        %v1566 = vor.u32 %v1348, %v1530
        %v1567 = vor.u32 %v1349, %v1531
        %v1568 = vor.u32 %v1350, %v1532
        %v1569 = vor.u32 %v1351, %v1533
        %v1570 = vor.u32 %v1352, %v1534
        %v1571 = vor.u32 %v1353, %v1535
        %v1572 = vor.u32 %v1354, %v1536
        %v1573 = vor.u32 %v1355, %v1537
        %v1574 = vor.u32 %v1356, %v1538
        %v1575 = vor.u32 %v1357, %v1539
        %v1576 = vor.u32 %v1358, %v1540
        %v1577 = vor.u32 %v1359, %v1541
        %v1578 = vor.u32 %v1360, %v1542
        %v1579 = vor.u32 %v1361, %v1543
        %v1580 = vor.u32 %v1362, %v1544
        %v1581 = vor.u32 %v1363, %v1545
        %v1582 = vor.u32 %v1364, %v1546
        %v1583 = vor.u32 %v1365, %v1547
        %v1584 = vor.u32 %v1366, %v1548
        %v1585 = vor.u32 %v1367, %v1549
        %v1586 = vor.u32 %v1368, %v1550
        %v1587 = vor.u32 %v1369, %v1551
        %v1588 = vor.u32 %v1370, %v1552
        %v1589 = vor.u32 %v1371, %v1553
        %v1590 = vstv %s1406
        %vm1591 = vcmp.ge.s32.totalorder %v132, %v1590
        %vm1592 = vcmp.ge.s32.totalorder %v133, %v1590
        %vm1593 = vcmp.ge.s32.totalorder %v134, %v1590
        %vm1594 = vcmp.ge.s32.totalorder %v135, %v1590
        %vm1595 = vcmp.ge.s32.totalorder %v136, %v1590
        %vm1596 = vcmp.ge.s32.totalorder %v137, %v1590
        %v1597 = vstv %s1407
        %vm1598 = vcmp.lt.s32.totalorder %v132, %v1597
        %vm1599 = vcmp.lt.s32.totalorder %v133, %v1597
        %vm1600 = vcmp.lt.s32.totalorder %v134, %v1597
        %vm1601 = vcmp.lt.s32.totalorder %v135, %v1597
        %vm1602 = vcmp.lt.s32.totalorder %v136, %v1597
        %vm1603 = vcmp.lt.s32.totalorder %v137, %v1597
        %vm1604 = vmand %vm1591, %vm1598
        %vm1605 = vmand %vm1592, %vm1599
        %vm1606 = vmand %vm1593, %vm1600
        %vm1607 = vmand %vm1594, %vm1601
        %vm1608 = vmand %vm1595, %vm1602
        %vm1609 = vmand %vm1596, %vm1603
        %v1610 = vsel %vm1604, 64, 0
        %v1611 = vsel %vm1605, 64, 0
        %v1612 = vsel %vm1606, 64, 0
        %v1613 = vsel %vm1607, 64, 0
        %v1614 = vsel %vm1608, 64, 0
        %v1615 = vsel %vm1609, 64, 0
        %v1616 = vor.u32 %v1398, %v1610
        %v1617 = vor.u32 %v1399, %v1611
        %v1618 = vor.u32 %v1400, %v1612
        %v1619 = vor.u32 %v1401, %v1613
        %v1620 = vor.u32 %v1402, %v1614
        %v1621 = vor.u32 %v1403, %v1615
        %s1622 = sld [smem:[#allocation3 + $0x1c]]
        %s1623 = sld [smem:[#allocation3 + $0x1d]]
        %s1624 = sld [smem:[#allocation3 + $0x1e]]
        %s1625 = sld [smem:[#allocation3 + $0x1f]]
        %v1626 = vstv %s1622
        %vm1627 = vcmp.ge.s32.totalorder %v95, %v1626
        %vm1628 = vcmp.ge.s32.totalorder %v96, %v1626
        %vm1629 = vcmp.ge.s32.totalorder %v97, %v1626
        %vm1630 = vcmp.ge.s32.totalorder %v98, %v1626
        %vm1631 = vcmp.ge.s32.totalorder %v99, %v1626
        %vm1632 = vcmp.ge.s32.totalorder %v100, %v1626
        %vm1633 = vcmp.ge.s32.totalorder %v101, %v1626
        %vm1634 = vcmp.ge.s32.totalorder %v102, %v1626
        %vm1635 = vcmp.ge.s32.totalorder %v103, %v1626
        %vm1636 = vcmp.ge.s32.totalorder %v104, %v1626
        %vm1637 = vcmp.ge.s32.totalorder %v105, %v1626
        %vm1638 = vcmp.ge.s32.totalorder %v106, %v1626
        %vm1639 = vcmp.ge.s32.totalorder %v107, %v1626
        %vm1640 = vcmp.ge.s32.totalorder %v108, %v1626
        %vm1641 = vcmp.ge.s32.totalorder %v109, %v1626
        %vm1642 = vcmp.ge.s32.totalorder %v110, %v1626
        %vm1643 = vcmp.ge.s32.totalorder %v111, %v1626
        %vm1644 = vcmp.ge.s32.totalorder %v112, %v1626
        %vm1645 = vcmp.ge.s32.totalorder %v113, %v1626
        %vm1646 = vcmp.ge.s32.totalorder %v114, %v1626
        %vm1647 = vcmp.ge.s32.totalorder %v115, %v1626
        %vm1648 = vcmp.ge.s32.totalorder %v116, %v1626
        %vm1649 = vcmp.ge.s32.totalorder %v117, %v1626
        %vm1650 = vcmp.ge.s32.totalorder %v118, %v1626
        %vm1651 = vcmp.ge.s32.totalorder %v119, %v1626
        %vm1652 = vcmp.ge.s32.totalorder %v120, %v1626
        %vm1653 = vcmp.ge.s32.totalorder %v121, %v1626
        %vm1654 = vcmp.ge.s32.totalorder %v122, %v1626
        %vm1655 = vcmp.ge.s32.totalorder %v123, %v1626
        %vm1656 = vcmp.ge.s32.totalorder %v124, %v1626
        %vm1657 = vcmp.ge.s32.totalorder %v125, %v1626
        %vm1658 = vcmp.ge.s32.totalorder %v126, %v1626
        %vm1659 = vcmp.ge.s32.totalorder %v127, %v1626
        %vm1660 = vcmp.ge.s32.totalorder %v128, %v1626
        %vm1661 = vcmp.ge.s32.totalorder %v129, %v1626
        %vm1662 = vcmp.ge.s32.totalorder %v130, %v1626
        %v1663 = vstv %s1623
        %vm1664 = vcmp.lt.s32.totalorder %v95, %v1663
        %vm1665 = vcmp.lt.s32.totalorder %v96, %v1663
        %vm1666 = vcmp.lt.s32.totalorder %v97, %v1663
        %vm1667 = vcmp.lt.s32.totalorder %v98, %v1663
        %vm1668 = vcmp.lt.s32.totalorder %v99, %v1663
        %vm1669 = vcmp.lt.s32.totalorder %v100, %v1663
        %vm1670 = vcmp.lt.s32.totalorder %v101, %v1663
        %vm1671 = vcmp.lt.s32.totalorder %v102, %v1663
        %vm1672 = vcmp.lt.s32.totalorder %v103, %v1663
        %vm1673 = vcmp.lt.s32.totalorder %v104, %v1663
        %vm1674 = vcmp.lt.s32.totalorder %v105, %v1663
        %vm1675 = vcmp.lt.s32.totalorder %v106, %v1663
        %vm1676 = vcmp.lt.s32.totalorder %v107, %v1663
        %vm1677 = vcmp.lt.s32.totalorder %v108, %v1663
        %vm1678 = vcmp.lt.s32.totalorder %v109, %v1663
        %vm1679 = vcmp.lt.s32.totalorder %v110, %v1663
        %vm1680 = vcmp.lt.s32.totalorder %v111, %v1663
        %vm1681 = vcmp.lt.s32.totalorder %v112, %v1663
        %vm1682 = vcmp.lt.s32.totalorder %v113, %v1663
        %vm1683 = vcmp.lt.s32.totalorder %v114, %v1663
        %vm1684 = vcmp.lt.s32.totalorder %v115, %v1663
        %vm1685 = vcmp.lt.s32.totalorder %v116, %v1663
        %vm1686 = vcmp.lt.s32.totalorder %v117, %v1663
        %vm1687 = vcmp.lt.s32.totalorder %v118, %v1663
        %vm1688 = vcmp.lt.s32.totalorder %v119, %v1663
        %vm1689 = vcmp.lt.s32.totalorder %v120, %v1663
        %vm1690 = vcmp.lt.s32.totalorder %v121, %v1663
        %vm1691 = vcmp.lt.s32.totalorder %v122, %v1663
        %vm1692 = vcmp.lt.s32.totalorder %v123, %v1663
        %vm1693 = vcmp.lt.s32.totalorder %v124, %v1663
        %vm1694 = vcmp.lt.s32.totalorder %v125, %v1663
        %vm1695 = vcmp.lt.s32.totalorder %v126, %v1663
        %vm1696 = vcmp.lt.s32.totalorder %v127, %v1663
        %vm1697 = vcmp.lt.s32.totalorder %v128, %v1663
        %vm1698 = vcmp.lt.s32.totalorder %v129, %v1663
        %vm1699 = vcmp.lt.s32.totalorder %v130, %v1663
        %vm1700 = vmand %vm1627, %vm1664
        %vm1701 = vmand %vm1628, %vm1665
        %vm1702 = vmand %vm1629, %vm1666
        %vm1703 = vmand %vm1630, %vm1667
        %vm1704 = vmand %vm1631, %vm1668
        %vm1705 = vmand %vm1632, %vm1669
        %vm1706 = vmand %vm1633, %vm1670
        %vm1707 = vmand %vm1634, %vm1671
        %vm1708 = vmand %vm1635, %vm1672
        %vm1709 = vmand %vm1636, %vm1673
        %vm1710 = vmand %vm1637, %vm1674
        %vm1711 = vmand %vm1638, %vm1675
        %vm1712 = vmand %vm1639, %vm1676
        %vm1713 = vmand %vm1640, %vm1677
        %vm1714 = vmand %vm1641, %vm1678
        %vm1715 = vmand %vm1642, %vm1679
        %vm1716 = vmand %vm1643, %vm1680
        %vm1717 = vmand %vm1644, %vm1681
        %vm1718 = vmand %vm1645, %vm1682
        %vm1719 = vmand %vm1646, %vm1683
        %vm1720 = vmand %vm1647, %vm1684
        %vm1721 = vmand %vm1648, %vm1685
        %vm1722 = vmand %vm1649, %vm1686
        %vm1723 = vmand %vm1650, %vm1687
        %vm1724 = vmand %vm1651, %vm1688
        %vm1725 = vmand %vm1652, %vm1689
        %vm1726 = vmand %vm1653, %vm1690
        %vm1727 = vmand %vm1654, %vm1691
        %vm1728 = vmand %vm1655, %vm1692
        %vm1729 = vmand %vm1656, %vm1693
        %vm1730 = vmand %vm1657, %vm1694
        %vm1731 = vmand %vm1658, %vm1695
        %vm1732 = vmand %vm1659, %vm1696
        %vm1733 = vmand %vm1660, %vm1697
        %vm1734 = vmand %vm1661, %vm1698
        %vm1735 = vmand %vm1662, %vm1699
        %v1736 = vsel %vm1700, 128, 0
        %v1737 = vsel %vm1701, 128, 0
        %v1738 = vsel %vm1702, 128, 0
        %v1739 = vsel %vm1703, 128, 0
        %v1740 = vsel %vm1704, 128, 0
        %v1741 = vsel %vm1705, 128, 0
        %v1742 = vsel %vm1706, 128, 0
        %v1743 = vsel %vm1707, 128, 0
        %v1744 = vsel %vm1708, 128, 0
        %v1745 = vsel %vm1709, 128, 0
        %v1746 = vsel %vm1710, 128, 0
        %v1747 = vsel %vm1711, 128, 0
        %v1748 = vsel %vm1712, 128, 0
        %v1749 = vsel %vm1713, 128, 0
        %v1750 = vsel %vm1714, 128, 0
        %v1751 = vsel %vm1715, 128, 0
        %v1752 = vsel %vm1716, 128, 0
        %v1753 = vsel %vm1717, 128, 0
        %v1754 = vsel %vm1718, 128, 0
        %v1755 = vsel %vm1719, 128, 0
        %v1756 = vsel %vm1720, 128, 0
        %v1757 = vsel %vm1721, 128, 0
        %v1758 = vsel %vm1722, 128, 0
        %v1759 = vsel %vm1723, 128, 0
        %v1760 = vsel %vm1724, 128, 0
        %v1761 = vsel %vm1725, 128, 0
        %v1762 = vsel %vm1726, 128, 0
        %v1763 = vsel %vm1727, 128, 0
        %v1764 = vsel %vm1728, 128, 0
        %v1765 = vsel %vm1729, 128, 0
        %v1766 = vsel %vm1730, 128, 0
        %v1767 = vsel %vm1731, 128, 0
        %v1768 = vsel %vm1732, 128, 0
        %v1769 = vsel %vm1733, 128, 0
        %v1770 = vsel %vm1734, 128, 0
        %v1771 = vsel %vm1735, 128, 0
        %v1772 = vor.u32 %v1554, %v1736
        %v1773 = vor.u32 %v1555, %v1737
        %v1774 = vor.u32 %v1556, %v1738
        %v1775 = vor.u32 %v1557, %v1739
        %v1776 = vor.u32 %v1558, %v1740
        %v1777 = vor.u32 %v1559, %v1741
        %v1778 = vor.u32 %v1560, %v1742
        %v1779 = vor.u32 %v1561, %v1743
        %v1780 = vor.u32 %v1562, %v1744
        %v1781 = vor.u32 %v1563, %v1745
        %v1782 = vor.u32 %v1564, %v1746
        %v1783 = vor.u32 %v1565, %v1747
        %v1784 = vor.u32 %v1566, %v1748
        %v1785 = vor.u32 %v1567, %v1749
        %v1786 = vor.u32 %v1568, %v1750
        %v1787 = vor.u32 %v1569, %v1751
        %v1788 = vor.u32 %v1570, %v1752
        %v1789 = vor.u32 %v1571, %v1753
        %v1790 = vor.u32 %v1572, %v1754
        %v1791 = vor.u32 %v1573, %v1755
        %v1792 = vor.u32 %v1574, %v1756
        %v1793 = vor.u32 %v1575, %v1757
        %v1794 = vor.u32 %v1576, %v1758
        %v1795 = vor.u32 %v1577, %v1759
        %v1796 = vor.u32 %v1578, %v1760
        %v1797 = vor.u32 %v1579, %v1761
        %v1798 = vor.u32 %v1580, %v1762
        %v1799 = vor.u32 %v1581, %v1763
        %v1800 = vor.u32 %v1582, %v1764
        %v1801 = vor.u32 %v1583, %v1765
        %v1802 = vor.u32 %v1584, %v1766
        %v1803 = vor.u32 %v1585, %v1767
        %v1804 = vor.u32 %v1586, %v1768
        %v1805 = vor.u32 %v1587, %v1769
        %v1806 = vor.u32 %v1588, %v1770
        %v1807 = vor.u32 %v1589, %v1771
        %v1808 = vstv %s1624
        %vm1809 = vcmp.ge.s32.totalorder %v132, %v1808
        %vm1810 = vcmp.ge.s32.totalorder %v133, %v1808
        %vm1811 = vcmp.ge.s32.totalorder %v134, %v1808
        %vm1812 = vcmp.ge.s32.totalorder %v135, %v1808
        %vm1813 = vcmp.ge.s32.totalorder %v136, %v1808
        %vm1814 = vcmp.ge.s32.totalorder %v137, %v1808
        %v1815 = vstv %s1625
        %vm1816 = vcmp.lt.s32.totalorder %v132, %v1815
        %vm1817 = vcmp.lt.s32.totalorder %v133, %v1815
        %vm1818 = vcmp.lt.s32.totalorder %v134, %v1815
        %vm1819 = vcmp.lt.s32.totalorder %v135, %v1815
        %vm1820 = vcmp.lt.s32.totalorder %v136, %v1815
        %vm1821 = vcmp.lt.s32.totalorder %v137, %v1815
        %vm1822 = vmand %vm1809, %vm1816
        %vm1823 = vmand %vm1810, %vm1817
        %vm1824 = vmand %vm1811, %vm1818
        %vm1825 = vmand %vm1812, %vm1819
        %vm1826 = vmand %vm1813, %vm1820
        %vm1827 = vmand %vm1814, %vm1821
        %v1828 = vsel %vm1822, 128, 0
        %v1829 = vsel %vm1823, 128, 0
        %v1830 = vsel %vm1824, 128, 0
        %v1831 = vsel %vm1825, 128, 0
        %v1832 = vsel %vm1826, 128, 0
        %v1833 = vsel %vm1827, 128, 0
        %v1834 = vor.u32 %v1616, %v1828
        %v1835 = vor.u32 %v1617, %v1829
        %v1836 = vor.u32 %v1618, %v1830
        %v1837 = vor.u32 %v1619, %v1831
        %v1838 = vor.u32 %v1620, %v1832
        %v1839 = vor.u32 %v1621, %v1833
        %v1840 = vand.u32 %v1772, %v1834
        %v1841 = vand.u32 %v1772, %v1835
        %v1842 = vand.u32 %v1772, %v1836
        %v1843 = vand.u32 %v1772, %v1837
        %v1844 = vand.u32 %v1772, %v1838
        %v1845 = vand.u32 %v1772, %v1839
        %v1846 = vand.u32 %v1773, %v1834
        %v1847 = vand.u32 %v1773, %v1835
        %v1848 = vand.u32 %v1773, %v1836
        %v1849 = vand.u32 %v1773, %v1837
        %v1850 = vand.u32 %v1773, %v1838
        %v1851 = vand.u32 %v1773, %v1839
        %v1852 = vand.u32 %v1774, %v1834
        %v1853 = vand.u32 %v1774, %v1835
        %v1854 = vand.u32 %v1774, %v1836
        %v1855 = vand.u32 %v1774, %v1837
        %v1856 = vand.u32 %v1774, %v1838
        %v1857 = vand.u32 %v1774, %v1839
        %v1858 = vand.u32 %v1775, %v1834
        %v1859 = vand.u32 %v1775, %v1835
        %v1860 = vand.u32 %v1775, %v1836
        %v1861 = vand.u32 %v1775, %v1837
        %v1862 = vand.u32 %v1775, %v1838
        %v1863 = vand.u32 %v1775, %v1839
        %v1864 = vand.u32 %v1776, %v1834
        %v1865 = vand.u32 %v1776, %v1835
        %v1866 = vand.u32 %v1776, %v1836
        %v1867 = vand.u32 %v1776, %v1837
        %v1868 = vand.u32 %v1776, %v1838
        %v1869 = vand.u32 %v1776, %v1839
        %v1870 = vand.u32 %v1777, %v1834
        %v1871 = vand.u32 %v1777, %v1835
        %v1872 = vand.u32 %v1777, %v1836
        %v1873 = vand.u32 %v1777, %v1837
        %v1874 = vand.u32 %v1777, %v1838
        %v1875 = vand.u32 %v1777, %v1839
        %v1876 = vand.u32 %v1778, %v1834
        %v1877 = vand.u32 %v1778, %v1835
        %v1878 = vand.u32 %v1778, %v1836
        %v1879 = vand.u32 %v1778, %v1837
        %v1880 = vand.u32 %v1778, %v1838
        %v1881 = vand.u32 %v1778, %v1839
        %v1882 = vand.u32 %v1779, %v1834
        %v1883 = vand.u32 %v1779, %v1835
        %v1884 = vand.u32 %v1779, %v1836
        %v1885 = vand.u32 %v1779, %v1837
        %v1886 = vand.u32 %v1779, %v1838
        %v1887 = vand.u32 %v1779, %v1839
        %v1888 = vand.u32 %v1780, %v1834
        %v1889 = vand.u32 %v1780, %v1835
        %v1890 = vand.u32 %v1780, %v1836
        %v1891 = vand.u32 %v1780, %v1837
        %v1892 = vand.u32 %v1780, %v1838
        %v1893 = vand.u32 %v1780, %v1839
        %v1894 = vand.u32 %v1781, %v1834
        %v1895 = vand.u32 %v1781, %v1835
        %v1896 = vand.u32 %v1781, %v1836
        %v1897 = vand.u32 %v1781, %v1837
        %v1898 = vand.u32 %v1781, %v1838
        %v1899 = vand.u32 %v1781, %v1839
        %v1900 = vand.u32 %v1782, %v1834
        %v1901 = vand.u32 %v1782, %v1835
        %v1902 = vand.u32 %v1782, %v1836
        %v1903 = vand.u32 %v1782, %v1837
        %v1904 = vand.u32 %v1782, %v1838
        %v1905 = vand.u32 %v1782, %v1839
        %v1906 = vand.u32 %v1783, %v1834
        %v1907 = vand.u32 %v1783, %v1835
        %v1908 = vand.u32 %v1783, %v1836
        %v1909 = vand.u32 %v1783, %v1837
        %v1910 = vand.u32 %v1783, %v1838
        %v1911 = vand.u32 %v1783, %v1839
        %v1912 = vand.u32 %v1784, %v1834
        %v1913 = vand.u32 %v1784, %v1835
        %v1914 = vand.u32 %v1784, %v1836
        %v1915 = vand.u32 %v1784, %v1837
        %v1916 = vand.u32 %v1784, %v1838
        %v1917 = vand.u32 %v1784, %v1839
        %v1918 = vand.u32 %v1785, %v1834
        %v1919 = vand.u32 %v1785, %v1835
        %v1920 = vand.u32 %v1785, %v1836
        %v1921 = vand.u32 %v1785, %v1837
        %v1922 = vand.u32 %v1785, %v1838
        %v1923 = vand.u32 %v1785, %v1839
        %v1924 = vand.u32 %v1786, %v1834
        %v1925 = vand.u32 %v1786, %v1835
        %v1926 = vand.u32 %v1786, %v1836
        %v1927 = vand.u32 %v1786, %v1837
        %v1928 = vand.u32 %v1786, %v1838
        %v1929 = vand.u32 %v1786, %v1839
        %v1930 = vand.u32 %v1787, %v1834
        %v1931 = vand.u32 %v1787, %v1835
        %v1932 = vand.u32 %v1787, %v1836
        %v1933 = vand.u32 %v1787, %v1837
        %v1934 = vand.u32 %v1787, %v1838
        %v1935 = vand.u32 %v1787, %v1839
        %v1936 = vand.u32 %v1788, %v1834
        %v1937 = vand.u32 %v1788, %v1835
        %v1938 = vand.u32 %v1788, %v1836
        %v1939 = vand.u32 %v1788, %v1837
        %v1940 = vand.u32 %v1788, %v1838
        %v1941 = vand.u32 %v1788, %v1839
        %v1942 = vand.u32 %v1789, %v1834
        %v1943 = vand.u32 %v1789, %v1835
        %v1944 = vand.u32 %v1789, %v1836
        %v1945 = vand.u32 %v1789, %v1837
        %v1946 = vand.u32 %v1789, %v1838
        %v1947 = vand.u32 %v1789, %v1839
        %v1948 = vand.u32 %v1790, %v1834
        %v1949 = vand.u32 %v1790, %v1835
        %v1950 = vand.u32 %v1790, %v1836
        %v1951 = vand.u32 %v1790, %v1837
        %v1952 = vand.u32 %v1790, %v1838
        %v1953 = vand.u32 %v1790, %v1839
        %v1954 = vand.u32 %v1791, %v1834
        %v1955 = vand.u32 %v1791, %v1835
        %v1956 = vand.u32 %v1791, %v1836
        %v1957 = vand.u32 %v1791, %v1837
        %v1958 = vand.u32 %v1791, %v1838
        %v1959 = vand.u32 %v1791, %v1839
        %v1960 = vand.u32 %v1792, %v1834
        %v1961 = vand.u32 %v1792, %v1835
        %v1962 = vand.u32 %v1792, %v1836
        %v1963 = vand.u32 %v1792, %v1837
        %v1964 = vand.u32 %v1792, %v1838
        %v1965 = vand.u32 %v1792, %v1839
        %v1966 = vand.u32 %v1793, %v1834
        %v1967 = vand.u32 %v1793, %v1835
        %v1968 = vand.u32 %v1793, %v1836
        %v1969 = vand.u32 %v1793, %v1837
        %v1970 = vand.u32 %v1793, %v1838
        %v1971 = vand.u32 %v1793, %v1839
        %v1972 = vand.u32 %v1794, %v1834
        %v1973 = vand.u32 %v1794, %v1835
        %v1974 = vand.u32 %v1794, %v1836
        %v1975 = vand.u32 %v1794, %v1837
        %v1976 = vand.u32 %v1794, %v1838
        %v1977 = vand.u32 %v1794, %v1839
        %v1978 = vand.u32 %v1795, %v1834
        %v1979 = vand.u32 %v1795, %v1835
        %v1980 = vand.u32 %v1795, %v1836
        %v1981 = vand.u32 %v1795, %v1837
        %v1982 = vand.u32 %v1795, %v1838
        %v1983 = vand.u32 %v1795, %v1839
        %v1984 = vand.u32 %v1796, %v1834
        %v1985 = vand.u32 %v1796, %v1835
        %v1986 = vand.u32 %v1796, %v1836
        %v1987 = vand.u32 %v1796, %v1837
        %v1988 = vand.u32 %v1796, %v1838
        %v1989 = vand.u32 %v1796, %v1839
        %v1990 = vand.u32 %v1797, %v1834
        %v1991 = vand.u32 %v1797, %v1835
        %v1992 = vand.u32 %v1797, %v1836
        %v1993 = vand.u32 %v1797, %v1837
        %v1994 = vand.u32 %v1797, %v1838
        %v1995 = vand.u32 %v1797, %v1839
        %v1996 = vand.u32 %v1798, %v1834
        %v1997 = vand.u32 %v1798, %v1835
        %v1998 = vand.u32 %v1798, %v1836
        %v1999 = vand.u32 %v1798, %v1837
        %v2000 = vand.u32 %v1798, %v1838
        %v2001 = vand.u32 %v1798, %v1839
        %v2002 = vand.u32 %v1799, %v1834
        %v2003 = vand.u32 %v1799, %v1835
        %v2004 = vand.u32 %v1799, %v1836
        %v2005 = vand.u32 %v1799, %v1837
        %v2006 = vand.u32 %v1799, %v1838
        %v2007 = vand.u32 %v1799, %v1839
        %v2008 = vand.u32 %v1800, %v1834
        %v2009 = vand.u32 %v1800, %v1835
        %v2010 = vand.u32 %v1800, %v1836
        %v2011 = vand.u32 %v1800, %v1837
        %v2012 = vand.u32 %v1800, %v1838
        %v2013 = vand.u32 %v1800, %v1839
        %v2014 = vand.u32 %v1801, %v1834
        %v2015 = vand.u32 %v1801, %v1835
        %v2016 = vand.u32 %v1801, %v1836
        %v2017 = vand.u32 %v1801, %v1837
        %v2018 = vand.u32 %v1801, %v1838
        %v2019 = vand.u32 %v1801, %v1839
        %v2020 = vand.u32 %v1802, %v1834
        %v2021 = vand.u32 %v1802, %v1835
        %v2022 = vand.u32 %v1802, %v1836
        %v2023 = vand.u32 %v1802, %v1837
        %v2024 = vand.u32 %v1802, %v1838
        %v2025 = vand.u32 %v1802, %v1839
        %v2026 = vand.u32 %v1803, %v1834
        %v2027 = vand.u32 %v1803, %v1835
        %v2028 = vand.u32 %v1803, %v1836
        %v2029 = vand.u32 %v1803, %v1837
        %v2030 = vand.u32 %v1803, %v1838
        %v2031 = vand.u32 %v1803, %v1839
        %v2032 = vand.u32 %v1804, %v1834
        %v2033 = vand.u32 %v1804, %v1835
        %v2034 = vand.u32 %v1804, %v1836
        %v2035 = vand.u32 %v1804, %v1837
        %v2036 = vand.u32 %v1804, %v1838
        %v2037 = vand.u32 %v1804, %v1839
        %v2038 = vand.u32 %v1805, %v1834
        %v2039 = vand.u32 %v1805, %v1835
        %v2040 = vand.u32 %v1805, %v1836
        %v2041 = vand.u32 %v1805, %v1837
        %v2042 = vand.u32 %v1805, %v1838
        %v2043 = vand.u32 %v1805, %v1839
        %v2044 = vand.u32 %v1806, %v1834
        %v2045 = vand.u32 %v1806, %v1835
        %v2046 = vand.u32 %v1806, %v1836
        %v2047 = vand.u32 %v1806, %v1837
        %v2048 = vand.u32 %v1806, %v1838
        %v2049 = vand.u32 %v1806, %v1839
        %v2050 = vand.u32 %v1807, %v1834
        %v2051 = vand.u32 %v1807, %v1835
        %v2052 = vand.u32 %v1807, %v1836
        %v2053 = vand.u32 %v1807, %v1837
        %v2054 = vand.u32 %v1807, %v1838
        %v2055 = vand.u32 %v1807, %v1839
        %vm2056 = vcmp.ne.s32.totalorder %v1840, 0
        %vm2057 = vcmp.ne.s32.totalorder %v1841, 0
        %vm2058 = vcmp.ne.s32.totalorder %v1842, 0
        %vm2059 = vcmp.ne.s32.totalorder %v1843, 0
        %vm2060 = vcmp.ne.s32.totalorder %v1844, 0
        %vm2061 = vcmp.ne.s32.totalorder %v1845, 0
        %vm2062 = vcmp.ne.s32.totalorder %v1846, 0
        %vm2063 = vcmp.ne.s32.totalorder %v1847, 0
        %vm2064 = vcmp.ne.s32.totalorder %v1848, 0
        %vm2065 = vcmp.ne.s32.totalorder %v1849, 0
        %vm2066 = vcmp.ne.s32.totalorder %v1850, 0
        %vm2067 = vcmp.ne.s32.totalorder %v1851, 0
        %vm2068 = vcmp.ne.s32.totalorder %v1852, 0
        %vm2069 = vcmp.ne.s32.totalorder %v1853, 0
        %vm2070 = vcmp.ne.s32.totalorder %v1854, 0
        %vm2071 = vcmp.ne.s32.totalorder %v1855, 0
        %vm2072 = vcmp.ne.s32.totalorder %v1856, 0
        %vm2073 = vcmp.ne.s32.totalorder %v1857, 0
        %vm2074 = vcmp.ne.s32.totalorder %v1858, 0
        %vm2075 = vcmp.ne.s32.totalorder %v1859, 0
        %vm2076 = vcmp.ne.s32.totalorder %v1860, 0
        %vm2077 = vcmp.ne.s32.totalorder %v1861, 0
        %vm2078 = vcmp.ne.s32.totalorder %v1862, 0
        %vm2079 = vcmp.ne.s32.totalorder %v1863, 0
        %vm2080 = vcmp.ne.s32.totalorder %v1864, 0
        %vm2081 = vcmp.ne.s32.totalorder %v1865, 0
        %vm2082 = vcmp.ne.s32.totalorder %v1866, 0
        %vm2083 = vcmp.ne.s32.totalorder %v1867, 0
        %vm2084 = vcmp.ne.s32.totalorder %v1868, 0
        %vm2085 = vcmp.ne.s32.totalorder %v1869, 0
        %vm2086 = vcmp.ne.s32.totalorder %v1870, 0
        %vm2087 = vcmp.ne.s32.totalorder %v1871, 0
        %vm2088 = vcmp.ne.s32.totalorder %v1872, 0
        %vm2089 = vcmp.ne.s32.totalorder %v1873, 0
        %vm2090 = vcmp.ne.s32.totalorder %v1874, 0
        %vm2091 = vcmp.ne.s32.totalorder %v1875, 0
        %vm2092 = vcmp.ne.s32.totalorder %v1876, 0
        %vm2093 = vcmp.ne.s32.totalorder %v1877, 0
        %vm2094 = vcmp.ne.s32.totalorder %v1878, 0
        %vm2095 = vcmp.ne.s32.totalorder %v1879, 0
        %vm2096 = vcmp.ne.s32.totalorder %v1880, 0
        %vm2097 = vcmp.ne.s32.totalorder %v1881, 0
        %vm2098 = vcmp.ne.s32.totalorder %v1882, 0
        %vm2099 = vcmp.ne.s32.totalorder %v1883, 0
        %vm2100 = vcmp.ne.s32.totalorder %v1884, 0
        %vm2101 = vcmp.ne.s32.totalorder %v1885, 0
        %vm2102 = vcmp.ne.s32.totalorder %v1886, 0
        %vm2103 = vcmp.ne.s32.totalorder %v1887, 0
        %vm2104 = vcmp.ne.s32.totalorder %v1888, 0
        %vm2105 = vcmp.ne.s32.totalorder %v1889, 0
        %vm2106 = vcmp.ne.s32.totalorder %v1890, 0
        %vm2107 = vcmp.ne.s32.totalorder %v1891, 0
        %vm2108 = vcmp.ne.s32.totalorder %v1892, 0
        %vm2109 = vcmp.ne.s32.totalorder %v1893, 0
        %vm2110 = vcmp.ne.s32.totalorder %v1894, 0
        %vm2111 = vcmp.ne.s32.totalorder %v1895, 0
        %vm2112 = vcmp.ne.s32.totalorder %v1896, 0
        %vm2113 = vcmp.ne.s32.totalorder %v1897, 0
        %vm2114 = vcmp.ne.s32.totalorder %v1898, 0
        %vm2115 = vcmp.ne.s32.totalorder %v1899, 0
        %vm2116 = vcmp.ne.s32.totalorder %v1900, 0
        %vm2117 = vcmp.ne.s32.totalorder %v1901, 0
        %vm2118 = vcmp.ne.s32.totalorder %v1902, 0
        %vm2119 = vcmp.ne.s32.totalorder %v1903, 0
        %vm2120 = vcmp.ne.s32.totalorder %v1904, 0
        %vm2121 = vcmp.ne.s32.totalorder %v1905, 0
        %vm2122 = vcmp.ne.s32.totalorder %v1906, 0
        %vm2123 = vcmp.ne.s32.totalorder %v1907, 0
        %vm2124 = vcmp.ne.s32.totalorder %v1908, 0
        %vm2125 = vcmp.ne.s32.totalorder %v1909, 0
        %vm2126 = vcmp.ne.s32.totalorder %v1910, 0
        %vm2127 = vcmp.ne.s32.totalorder %v1911, 0
        %vm2128 = vcmp.ne.s32.totalorder %v1912, 0
        %vm2129 = vcmp.ne.s32.totalorder %v1913, 0
        %vm2130 = vcmp.ne.s32.totalorder %v1914, 0
        %vm2131 = vcmp.ne.s32.totalorder %v1915, 0
        %vm2132 = vcmp.ne.s32.totalorder %v1916, 0
        %vm2133 = vcmp.ne.s32.totalorder %v1917, 0
        %vm2134 = vcmp.ne.s32.totalorder %v1918, 0
        %vm2135 = vcmp.ne.s32.totalorder %v1919, 0
        %vm2136 = vcmp.ne.s32.totalorder %v1920, 0
        %vm2137 = vcmp.ne.s32.totalorder %v1921, 0
        %vm2138 = vcmp.ne.s32.totalorder %v1922, 0
        %vm2139 = vcmp.ne.s32.totalorder %v1923, 0
        %vm2140 = vcmp.ne.s32.totalorder %v1924, 0
        %vm2141 = vcmp.ne.s32.totalorder %v1925, 0
        %vm2142 = vcmp.ne.s32.totalorder %v1926, 0
        %vm2143 = vcmp.ne.s32.totalorder %v1927, 0
        %vm2144 = vcmp.ne.s32.totalorder %v1928, 0
        %vm2145 = vcmp.ne.s32.totalorder %v1929, 0
        %vm2146 = vcmp.ne.s32.totalorder %v1930, 0
        %vm2147 = vcmp.ne.s32.totalorder %v1931, 0
        %vm2148 = vcmp.ne.s32.totalorder %v1932, 0
        %vm2149 = vcmp.ne.s32.totalorder %v1933, 0
        %vm2150 = vcmp.ne.s32.totalorder %v1934, 0
        %vm2151 = vcmp.ne.s32.totalorder %v1935, 0
        %vm2152 = vcmp.ne.s32.totalorder %v1936, 0
        %vm2153 = vcmp.ne.s32.totalorder %v1937, 0
        %vm2154 = vcmp.ne.s32.totalorder %v1938, 0
        %vm2155 = vcmp.ne.s32.totalorder %v1939, 0
        %vm2156 = vcmp.ne.s32.totalorder %v1940, 0
        %vm2157 = vcmp.ne.s32.totalorder %v1941, 0
        %vm2158 = vcmp.ne.s32.totalorder %v1942, 0
        %vm2159 = vcmp.ne.s32.totalorder %v1943, 0
        %vm2160 = vcmp.ne.s32.totalorder %v1944, 0
        %vm2161 = vcmp.ne.s32.totalorder %v1945, 0
        %vm2162 = vcmp.ne.s32.totalorder %v1946, 0
        %vm2163 = vcmp.ne.s32.totalorder %v1947, 0
        %vm2164 = vcmp.ne.s32.totalorder %v1948, 0
        %vm2165 = vcmp.ne.s32.totalorder %v1949, 0
        %vm2166 = vcmp.ne.s32.totalorder %v1950, 0
        %vm2167 = vcmp.ne.s32.totalorder %v1951, 0
        %vm2168 = vcmp.ne.s32.totalorder %v1952, 0
        %vm2169 = vcmp.ne.s32.totalorder %v1953, 0
        %vm2170 = vcmp.ne.s32.totalorder %v1954, 0
        %vm2171 = vcmp.ne.s32.totalorder %v1955, 0
        %vm2172 = vcmp.ne.s32.totalorder %v1956, 0
        %vm2173 = vcmp.ne.s32.totalorder %v1957, 0
        %vm2174 = vcmp.ne.s32.totalorder %v1958, 0
        %vm2175 = vcmp.ne.s32.totalorder %v1959, 0
        %vm2176 = vcmp.ne.s32.totalorder %v1960, 0
        %vm2177 = vcmp.ne.s32.totalorder %v1961, 0
        %vm2178 = vcmp.ne.s32.totalorder %v1962, 0
        %vm2179 = vcmp.ne.s32.totalorder %v1963, 0
        %vm2180 = vcmp.ne.s32.totalorder %v1964, 0
        %vm2181 = vcmp.ne.s32.totalorder %v1965, 0
        %vm2182 = vcmp.ne.s32.totalorder %v1966, 0
        %vm2183 = vcmp.ne.s32.totalorder %v1967, 0
        %vm2184 = vcmp.ne.s32.totalorder %v1968, 0
        %vm2185 = vcmp.ne.s32.totalorder %v1969, 0
        %vm2186 = vcmp.ne.s32.totalorder %v1970, 0
        %vm2187 = vcmp.ne.s32.totalorder %v1971, 0
        %vm2188 = vcmp.ne.s32.totalorder %v1972, 0
        %vm2189 = vcmp.ne.s32.totalorder %v1973, 0
        %vm2190 = vcmp.ne.s32.totalorder %v1974, 0
        %vm2191 = vcmp.ne.s32.totalorder %v1975, 0
        %vm2192 = vcmp.ne.s32.totalorder %v1976, 0
        %vm2193 = vcmp.ne.s32.totalorder %v1977, 0
        %vm2194 = vcmp.ne.s32.totalorder %v1978, 0
        %vm2195 = vcmp.ne.s32.totalorder %v1979, 0
        %vm2196 = vcmp.ne.s32.totalorder %v1980, 0
        %vm2197 = vcmp.ne.s32.totalorder %v1981, 0
        %vm2198 = vcmp.ne.s32.totalorder %v1982, 0
        %vm2199 = vcmp.ne.s32.totalorder %v1983, 0
        %vm2200 = vcmp.ne.s32.totalorder %v1984, 0
        %vm2201 = vcmp.ne.s32.totalorder %v1985, 0
        %vm2202 = vcmp.ne.s32.totalorder %v1986, 0
        %vm2203 = vcmp.ne.s32.totalorder %v1987, 0
        %vm2204 = vcmp.ne.s32.totalorder %v1988, 0
        %vm2205 = vcmp.ne.s32.totalorder %v1989, 0
        %vm2206 = vcmp.ne.s32.totalorder %v1990, 0
        %vm2207 = vcmp.ne.s32.totalorder %v1991, 0
        %vm2208 = vcmp.ne.s32.totalorder %v1992, 0
        %vm2209 = vcmp.ne.s32.totalorder %v1993, 0
        %vm2210 = vcmp.ne.s32.totalorder %v1994, 0
        %vm2211 = vcmp.ne.s32.totalorder %v1995, 0
        %vm2212 = vcmp.ne.s32.totalorder %v1996, 0
        %vm2213 = vcmp.ne.s32.totalorder %v1997, 0
        %vm2214 = vcmp.ne.s32.totalorder %v1998, 0
        %vm2215 = vcmp.ne.s32.totalorder %v1999, 0
        %vm2216 = vcmp.ne.s32.totalorder %v2000, 0
        %vm2217 = vcmp.ne.s32.totalorder %v2001, 0
        %vm2218 = vcmp.ne.s32.totalorder %v2002, 0
        %vm2219 = vcmp.ne.s32.totalorder %v2003, 0
        %vm2220 = vcmp.ne.s32.totalorder %v2004, 0
        %vm2221 = vcmp.ne.s32.totalorder %v2005, 0
        %vm2222 = vcmp.ne.s32.totalorder %v2006, 0
        %vm2223 = vcmp.ne.s32.totalorder %v2007, 0
        %vm2224 = vcmp.ne.s32.totalorder %v2008, 0
        %vm2225 = vcmp.ne.s32.totalorder %v2009, 0
        %vm2226 = vcmp.ne.s32.totalorder %v2010, 0
        %vm2227 = vcmp.ne.s32.totalorder %v2011, 0
        %vm2228 = vcmp.ne.s32.totalorder %v2012, 0
        %vm2229 = vcmp.ne.s32.totalorder %v2013, 0
        %vm2230 = vcmp.ne.s32.totalorder %v2014, 0
        %vm2231 = vcmp.ne.s32.totalorder %v2015, 0
        %vm2232 = vcmp.ne.s32.totalorder %v2016, 0
        %vm2233 = vcmp.ne.s32.totalorder %v2017, 0
        %vm2234 = vcmp.ne.s32.totalorder %v2018, 0
        %vm2235 = vcmp.ne.s32.totalorder %v2019, 0
        %vm2236 = vcmp.ne.s32.totalorder %v2020, 0
        %vm2237 = vcmp.ne.s32.totalorder %v2021, 0
        %vm2238 = vcmp.ne.s32.totalorder %v2022, 0
        %vm2239 = vcmp.ne.s32.totalorder %v2023, 0
        %vm2240 = vcmp.ne.s32.totalorder %v2024, 0
        %vm2241 = vcmp.ne.s32.totalorder %v2025, 0
        %vm2242 = vcmp.ne.s32.totalorder %v2026, 0
        %vm2243 = vcmp.ne.s32.totalorder %v2027, 0
        %vm2244 = vcmp.ne.s32.totalorder %v2028, 0
        %vm2245 = vcmp.ne.s32.totalorder %v2029, 0
        %vm2246 = vcmp.ne.s32.totalorder %v2030, 0
        %vm2247 = vcmp.ne.s32.totalorder %v2031, 0
        %vm2248 = vcmp.ne.s32.totalorder %v2032, 0
        %vm2249 = vcmp.ne.s32.totalorder %v2033, 0
        %vm2250 = vcmp.ne.s32.totalorder %v2034, 0
        %vm2251 = vcmp.ne.s32.totalorder %v2035, 0
        %vm2252 = vcmp.ne.s32.totalorder %v2036, 0
        %vm2253 = vcmp.ne.s32.totalorder %v2037, 0
        %vm2254 = vcmp.ne.s32.totalorder %v2038, 0
        %vm2255 = vcmp.ne.s32.totalorder %v2039, 0
        %vm2256 = vcmp.ne.s32.totalorder %v2040, 0
        %vm2257 = vcmp.ne.s32.totalorder %v2041, 0
        %vm2258 = vcmp.ne.s32.totalorder %v2042, 0
        %vm2259 = vcmp.ne.s32.totalorder %v2043, 0
        %vm2260 = vcmp.ne.s32.totalorder %v2044, 0
        %vm2261 = vcmp.ne.s32.totalorder %v2045, 0
        %vm2262 = vcmp.ne.s32.totalorder %v2046, 0
        %vm2263 = vcmp.ne.s32.totalorder %v2047, 0
        %vm2264 = vcmp.ne.s32.totalorder %v2048, 0
        %vm2265 = vcmp.ne.s32.totalorder %v2049, 0
        %vm2266 = vcmp.ne.s32.totalorder %v2050, 0
        %vm2267 = vcmp.ne.s32.totalorder %v2051, 0
        %vm2268 = vcmp.ne.s32.totalorder %v2052, 0
        %vm2269 = vcmp.ne.s32.totalorder %v2053, 0
        %vm2270 = vcmp.ne.s32.totalorder %v2054, 0
        %vm2271 = vcmp.ne.s32.totalorder %v2055, 0
        %v2272 = vsel %vm2056, 1, 0
        %v2273 = vsel %vm2057, 1, 0
        %v2274 = vsel %vm2058, 1, 0
        %v2275 = vsel %vm2059, 1, 0
        %v2276 = vsel %vm2060, 1, 0
        %v2277 = vsel %vm2061, 1, 0
        %v2278 = vsel %vm2062, 1, 0
        %v2279 = vsel %vm2063, 1, 0
        %v2280 = vsel %vm2064, 1, 0
        %v2281 = vsel %vm2065, 1, 0
        %v2282 = vsel %vm2066, 1, 0
        %v2283 = vsel %vm2067, 1, 0
        %v2284 = vsel %vm2068, 1, 0
        %v2285 = vsel %vm2069, 1, 0
        %v2286 = vsel %vm2070, 1, 0
        %v2287 = vsel %vm2071, 1, 0
        %v2288 = vsel %vm2072, 1, 0
        %v2289 = vsel %vm2073, 1, 0
        %v2290 = vsel %vm2074, 1, 0
        %v2291 = vsel %vm2075, 1, 0
        %v2292 = vsel %vm2076, 1, 0
        %v2293 = vsel %vm2077, 1, 0
        %v2294 = vsel %vm2078, 1, 0
        %v2295 = vsel %vm2079, 1, 0
        %v2296 = vsel %vm2080, 1, 0
        %v2297 = vsel %vm2081, 1, 0
        %v2298 = vsel %vm2082, 1, 0
        %v2299 = vsel %vm2083, 1, 0
        %v2300 = vsel %vm2084, 1, 0
        %v2301 = vsel %vm2085, 1, 0
        %v2302 = vsel %vm2086, 1, 0
        %v2303 = vsel %vm2087, 1, 0
        %v2304 = vsel %vm2088, 1, 0
        %v2305 = vsel %vm2089, 1, 0
        %v2306 = vsel %vm2090, 1, 0
        %v2307 = vsel %vm2091, 1, 0
        %v2308 = vsel %vm2092, 1, 0
        %v2309 = vsel %vm2093, 1, 0
        %v2310 = vsel %vm2094, 1, 0
        %v2311 = vsel %vm2095, 1, 0
        %v2312 = vsel %vm2096, 1, 0
        %v2313 = vsel %vm2097, 1, 0
        %v2314 = vsel %vm2098, 1, 0
        %v2315 = vsel %vm2099, 1, 0
        %v2316 = vsel %vm2100, 1, 0
        %v2317 = vsel %vm2101, 1, 0
        %v2318 = vsel %vm2102, 1, 0
        %v2319 = vsel %vm2103, 1, 0
        %v2320 = vsel %vm2104, 1, 0
        %v2321 = vsel %vm2105, 1, 0
        %v2322 = vsel %vm2106, 1, 0
        %v2323 = vsel %vm2107, 1, 0
        %v2324 = vsel %vm2108, 1, 0
        %v2325 = vsel %vm2109, 1, 0
        %v2326 = vsel %vm2110, 1, 0
        %v2327 = vsel %vm2111, 1, 0
        %v2328 = vsel %vm2112, 1, 0
        %v2329 = vsel %vm2113, 1, 0
        %v2330 = vsel %vm2114, 1, 0
        %v2331 = vsel %vm2115, 1, 0
        %v2332 = vsel %vm2116, 1, 0
        %v2333 = vsel %vm2117, 1, 0
        %v2334 = vsel %vm2118, 1, 0
        %v2335 = vsel %vm2119, 1, 0
        %v2336 = vsel %vm2120, 1, 0
        %v2337 = vsel %vm2121, 1, 0
        %v2338 = vsel %vm2122, 1, 0
        %v2339 = vsel %vm2123, 1, 0
        %v2340 = vsel %vm2124, 1, 0
        %v2341 = vsel %vm2125, 1, 0
        %v2342 = vsel %vm2126, 1, 0
        %v2343 = vsel %vm2127, 1, 0
        %v2344 = vsel %vm2128, 1, 0
        %v2345 = vsel %vm2129, 1, 0
        %v2346 = vsel %vm2130, 1, 0
        %v2347 = vsel %vm2131, 1, 0
        %v2348 = vsel %vm2132, 1, 0
        %v2349 = vsel %vm2133, 1, 0
        %v2350 = vsel %vm2134, 1, 0
        %v2351 = vsel %vm2135, 1, 0
        %v2352 = vsel %vm2136, 1, 0
        %v2353 = vsel %vm2137, 1, 0
        %v2354 = vsel %vm2138, 1, 0
        %v2355 = vsel %vm2139, 1, 0
        %v2356 = vsel %vm2140, 1, 0
        %v2357 = vsel %vm2141, 1, 0
        %v2358 = vsel %vm2142, 1, 0
        %v2359 = vsel %vm2143, 1, 0
        %v2360 = vsel %vm2144, 1, 0
        %v2361 = vsel %vm2145, 1, 0
        %v2362 = vsel %vm2146, 1, 0
        %v2363 = vsel %vm2147, 1, 0
        %v2364 = vsel %vm2148, 1, 0
        %v2365 = vsel %vm2149, 1, 0
        %v2366 = vsel %vm2150, 1, 0
        %v2367 = vsel %vm2151, 1, 0
        %v2368 = vsel %vm2152, 1, 0
        %v2369 = vsel %vm2153, 1, 0
        %v2370 = vsel %vm2154, 1, 0
        %v2371 = vsel %vm2155, 1, 0
        %v2372 = vsel %vm2156, 1, 0
        %v2373 = vsel %vm2157, 1, 0
        %v2374 = vsel %vm2158, 1, 0
        %v2375 = vsel %vm2159, 1, 0
        %v2376 = vsel %vm2160, 1, 0
        %v2377 = vsel %vm2161, 1, 0
        %v2378 = vsel %vm2162, 1, 0
        %v2379 = vsel %vm2163, 1, 0
        %v2380 = vsel %vm2164, 1, 0
        %v2381 = vsel %vm2165, 1, 0
        %v2382 = vsel %vm2166, 1, 0
        %v2383 = vsel %vm2167, 1, 0
        %v2384 = vsel %vm2168, 1, 0
        %v2385 = vsel %vm2169, 1, 0
        %v2386 = vsel %vm2170, 1, 0
        %v2387 = vsel %vm2171, 1, 0
        %v2388 = vsel %vm2172, 1, 0
        %v2389 = vsel %vm2173, 1, 0
        %v2390 = vsel %vm2174, 1, 0
        %v2391 = vsel %vm2175, 1, 0
        %v2392 = vsel %vm2176, 1, 0
        %v2393 = vsel %vm2177, 1, 0
        %v2394 = vsel %vm2178, 1, 0
        %v2395 = vsel %vm2179, 1, 0
        %v2396 = vsel %vm2180, 1, 0
        %v2397 = vsel %vm2181, 1, 0
        %v2398 = vsel %vm2182, 1, 0
        %v2399 = vsel %vm2183, 1, 0
        %v2400 = vsel %vm2184, 1, 0
        %v2401 = vsel %vm2185, 1, 0
        %v2402 = vsel %vm2186, 1, 0
        %v2403 = vsel %vm2187, 1, 0
        %v2404 = vsel %vm2188, 1, 0
        %v2405 = vsel %vm2189, 1, 0
        %v2406 = vsel %vm2190, 1, 0
        %v2407 = vsel %vm2191, 1, 0
        %v2408 = vsel %vm2192, 1, 0
        %v2409 = vsel %vm2193, 1, 0
        %v2410 = vsel %vm2194, 1, 0
        %v2411 = vsel %vm2195, 1, 0
        %v2412 = vsel %vm2196, 1, 0
        %v2413 = vsel %vm2197, 1, 0
        %v2414 = vsel %vm2198, 1, 0
        %v2415 = vsel %vm2199, 1, 0
        %v2416 = vsel %vm2200, 1, 0
        %v2417 = vsel %vm2201, 1, 0
        %v2418 = vsel %vm2202, 1, 0
        %v2419 = vsel %vm2203, 1, 0
        %v2420 = vsel %vm2204, 1, 0
        %v2421 = vsel %vm2205, 1, 0
        %v2422 = vsel %vm2206, 1, 0
        %v2423 = vsel %vm2207, 1, 0
        %v2424 = vsel %vm2208, 1, 0
        %v2425 = vsel %vm2209, 1, 0
        %v2426 = vsel %vm2210, 1, 0
        %v2427 = vsel %vm2211, 1, 0
        %v2428 = vsel %vm2212, 1, 0
        %v2429 = vsel %vm2213, 1, 0
        %v2430 = vsel %vm2214, 1, 0
        %v2431 = vsel %vm2215, 1, 0
        %v2432 = vsel %vm2216, 1, 0
        %v2433 = vsel %vm2217, 1, 0
        %v2434 = vsel %vm2218, 1, 0
        %v2435 = vsel %vm2219, 1, 0
        %v2436 = vsel %vm2220, 1, 0
        %v2437 = vsel %vm2221, 1, 0
        %v2438 = vsel %vm2222, 1, 0
        %v2439 = vsel %vm2223, 1, 0
        %v2440 = vsel %vm2224, 1, 0
        %v2441 = vsel %vm2225, 1, 0
        %v2442 = vsel %vm2226, 1, 0
        %v2443 = vsel %vm2227, 1, 0
        %v2444 = vsel %vm2228, 1, 0
        %v2445 = vsel %vm2229, 1, 0
        %v2446 = vsel %vm2230, 1, 0
        %v2447 = vsel %vm2231, 1, 0
        %v2448 = vsel %vm2232, 1, 0
        %v2449 = vsel %vm2233, 1, 0
        %v2450 = vsel %vm2234, 1, 0
        %v2451 = vsel %vm2235, 1, 0
        %v2452 = vsel %vm2236, 1, 0
        %v2453 = vsel %vm2237, 1, 0
        %v2454 = vsel %vm2238, 1, 0
        %v2455 = vsel %vm2239, 1, 0
        %v2456 = vsel %vm2240, 1, 0
        %v2457 = vsel %vm2241, 1, 0
        %v2458 = vsel %vm2242, 1, 0
        %v2459 = vsel %vm2243, 1, 0
        %v2460 = vsel %vm2244, 1, 0
        %v2461 = vsel %vm2245, 1, 0
        %v2462 = vsel %vm2246, 1, 0
        %v2463 = vsel %vm2247, 1, 0
        %v2464 = vsel %vm2248, 1, 0
        %v2465 = vsel %vm2249, 1, 0
        %v2466 = vsel %vm2250, 1, 0
        %v2467 = vsel %vm2251, 1, 0
        %v2468 = vsel %vm2252, 1, 0
        %v2469 = vsel %vm2253, 1, 0
        %v2470 = vsel %vm2254, 1, 0
        %v2471 = vsel %vm2255, 1, 0
        %v2472 = vsel %vm2256, 1, 0
        %v2473 = vsel %vm2257, 1, 0
        %v2474 = vsel %vm2258, 1, 0
        %v2475 = vsel %vm2259, 1, 0
        %v2476 = vsel %vm2260, 1, 0
        %v2477 = vsel %vm2261, 1, 0
        %v2478 = vsel %vm2262, 1, 0
        %v2479 = vsel %vm2263, 1, 0
        %v2480 = vsel %vm2264, 1, 0
        %v2481 = vsel %vm2265, 1, 0
        %v2482 = vsel %vm2266, 1, 0
        %v2483 = vsel %vm2267, 1, 0
        %v2484 = vsel %vm2268, 1, 0
        %v2485 = vsel %vm2269, 1, 0
        %v2486 = vsel %vm2270, 1, 0
        %v2487 = vsel %vm2271, 1, 0
        %v2488 = vcvt.s32.f32 %v2272
        %v2489 = vcvt.s32.f32 %v2273
        %v2490 = vcvt.s32.f32 %v2274
        %v2491 = vcvt.s32.f32 %v2275
        %v2492 = vcvt.s32.f32 %v2276
        %v2493 = vcvt.s32.f32 %v2277
        %v2494 = vcvt.s32.f32 %v2278
        %v2495 = vcvt.s32.f32 %v2279
        %v2496 = vcvt.s32.f32 %v2280
        %v2497 = vcvt.s32.f32 %v2281
        %v2498 = vcvt.s32.f32 %v2282
        %v2499 = vcvt.s32.f32 %v2283
        %v2500 = vcvt.s32.f32 %v2284
        %v2501 = vcvt.s32.f32 %v2285
        %v2502 = vcvt.s32.f32 %v2286
        %v2503 = vcvt.s32.f32 %v2287
        %v2504 = vcvt.s32.f32 %v2288
        %v2505 = vcvt.s32.f32 %v2289
        %v2506 = vcvt.s32.f32 %v2290
        %v2507 = vcvt.s32.f32 %v2291
        %v2508 = vcvt.s32.f32 %v2292
        %v2509 = vcvt.s32.f32 %v2293
        %v2510 = vcvt.s32.f32 %v2294
        %v2511 = vcvt.s32.f32 %v2295
        %v2512 = vcvt.s32.f32 %v2296
        %v2513 = vcvt.s32.f32 %v2297
        %v2514 = vcvt.s32.f32 %v2298
        %v2515 = vcvt.s32.f32 %v2299
        %v2516 = vcvt.s32.f32 %v2300
        %v2517 = vcvt.s32.f32 %v2301
        %v2518 = vcvt.s32.f32 %v2302
        %v2519 = vcvt.s32.f32 %v2303
        %v2520 = vcvt.s32.f32 %v2304
        %v2521 = vcvt.s32.f32 %v2305
        %v2522 = vcvt.s32.f32 %v2306
        %v2523 = vcvt.s32.f32 %v2307
        %v2524 = vcvt.s32.f32 %v2308
        %v2525 = vcvt.s32.f32 %v2309
        %v2526 = vcvt.s32.f32 %v2310
        %v2527 = vcvt.s32.f32 %v2311
        %v2528 = vcvt.s32.f32 %v2312
        %v2529 = vcvt.s32.f32 %v2313
        %v2530 = vcvt.s32.f32 %v2314
        %v2531 = vcvt.s32.f32 %v2315
        %v2532 = vcvt.s32.f32 %v2316
        %v2533 = vcvt.s32.f32 %v2317
        %v2534 = vcvt.s32.f32 %v2318
        %v2535 = vcvt.s32.f32 %v2319
        %v2536 = vcvt.s32.f32 %v2320
        %v2537 = vcvt.s32.f32 %v2321
        %v2538 = vcvt.s32.f32 %v2322
        %v2539 = vcvt.s32.f32 %v2323
        %v2540 = vcvt.s32.f32 %v2324
        %v2541 = vcvt.s32.f32 %v2325
        %v2542 = vcvt.s32.f32 %v2326
        %v2543 = vcvt.s32.f32 %v2327
        %v2544 = vcvt.s32.f32 %v2328
        %v2545 = vcvt.s32.f32 %v2329
        %v2546 = vcvt.s32.f32 %v2330
        %v2547 = vcvt.s32.f32 %v2331
        %v2548 = vcvt.s32.f32 %v2332
        %v2549 = vcvt.s32.f32 %v2333
        %v2550 = vcvt.s32.f32 %v2334
        %v2551 = vcvt.s32.f32 %v2335
        %v2552 = vcvt.s32.f32 %v2336
        %v2553 = vcvt.s32.f32 %v2337
        %v2554 = vcvt.s32.f32 %v2338
        %v2555 = vcvt.s32.f32 %v2339
        %v2556 = vcvt.s32.f32 %v2340
        %v2557 = vcvt.s32.f32 %v2341
        %v2558 = vcvt.s32.f32 %v2342
        %v2559 = vcvt.s32.f32 %v2343
        %v2560 = vcvt.s32.f32 %v2344
        %v2561 = vcvt.s32.f32 %v2345
        %v2562 = vcvt.s32.f32 %v2346
        %v2563 = vcvt.s32.f32 %v2347
        %v2564 = vcvt.s32.f32 %v2348
        %v2565 = vcvt.s32.f32 %v2349
        %v2566 = vcvt.s32.f32 %v2350
        %v2567 = vcvt.s32.f32 %v2351
        %v2568 = vcvt.s32.f32 %v2352
        %v2569 = vcvt.s32.f32 %v2353
        %v2570 = vcvt.s32.f32 %v2354
        %v2571 = vcvt.s32.f32 %v2355
        %v2572 = vcvt.s32.f32 %v2356
        %v2573 = vcvt.s32.f32 %v2357
        %v2574 = vcvt.s32.f32 %v2358
        %v2575 = vcvt.s32.f32 %v2359
        %v2576 = vcvt.s32.f32 %v2360
        %v2577 = vcvt.s32.f32 %v2361
        %v2578 = vcvt.s32.f32 %v2362
        %v2579 = vcvt.s32.f32 %v2363
        %v2580 = vcvt.s32.f32 %v2364
        %v2581 = vcvt.s32.f32 %v2365
        %v2582 = vcvt.s32.f32 %v2366
        %v2583 = vcvt.s32.f32 %v2367
        %v2584 = vcvt.s32.f32 %v2368
        %v2585 = vcvt.s32.f32 %v2369
        %v2586 = vcvt.s32.f32 %v2370
        %v2587 = vcvt.s32.f32 %v2371
        %v2588 = vcvt.s32.f32 %v2372
        %v2589 = vcvt.s32.f32 %v2373
        %v2590 = vcvt.s32.f32 %v2374
        %v2591 = vcvt.s32.f32 %v2375
        %v2592 = vcvt.s32.f32 %v2376
        %v2593 = vcvt.s32.f32 %v2377
        %v2594 = vcvt.s32.f32 %v2378
        %v2595 = vcvt.s32.f32 %v2379
        %v2596 = vcvt.s32.f32 %v2380
        %v2597 = vcvt.s32.f32 %v2381
        %v2598 = vcvt.s32.f32 %v2382
        %v2599 = vcvt.s32.f32 %v2383
        %v2600 = vcvt.s32.f32 %v2384
        %v2601 = vcvt.s32.f32 %v2385
        %v2602 = vcvt.s32.f32 %v2386
        %v2603 = vcvt.s32.f32 %v2387
        %v2604 = vcvt.s32.f32 %v2388
        %v2605 = vcvt.s32.f32 %v2389
        %v2606 = vcvt.s32.f32 %v2390
        %v2607 = vcvt.s32.f32 %v2391
        %v2608 = vcvt.s32.f32 %v2392
        %v2609 = vcvt.s32.f32 %v2393
        %v2610 = vcvt.s32.f32 %v2394
        %v2611 = vcvt.s32.f32 %v2395
        %v2612 = vcvt.s32.f32 %v2396
        %v2613 = vcvt.s32.f32 %v2397
        %v2614 = vcvt.s32.f32 %v2398
        %v2615 = vcvt.s32.f32 %v2399
        %v2616 = vcvt.s32.f32 %v2400
        %v2617 = vcvt.s32.f32 %v2401
        %v2618 = vcvt.s32.f32 %v2402
        %v2619 = vcvt.s32.f32 %v2403
        %v2620 = vcvt.s32.f32 %v2404
        %v2621 = vcvt.s32.f32 %v2405
        %v2622 = vcvt.s32.f32 %v2406
        %v2623 = vcvt.s32.f32 %v2407
        %v2624 = vcvt.s32.f32 %v2408
        %v2625 = vcvt.s32.f32 %v2409
        %v2626 = vcvt.s32.f32 %v2410
        %v2627 = vcvt.s32.f32 %v2411
        %v2628 = vcvt.s32.f32 %v2412
        %v2629 = vcvt.s32.f32 %v2413
        %v2630 = vcvt.s32.f32 %v2414
        %v2631 = vcvt.s32.f32 %v2415
        %v2632 = vcvt.s32.f32 %v2416
        %v2633 = vcvt.s32.f32 %v2417
        %v2634 = vcvt.s32.f32 %v2418
        %v2635 = vcvt.s32.f32 %v2419
        %v2636 = vcvt.s32.f32 %v2420
        %v2637 = vcvt.s32.f32 %v2421
        %v2638 = vcvt.s32.f32 %v2422
        %v2639 = vcvt.s32.f32 %v2423
        %v2640 = vcvt.s32.f32 %v2424
        %v2641 = vcvt.s32.f32 %v2425
        %v2642 = vcvt.s32.f32 %v2426
        %v2643 = vcvt.s32.f32 %v2427
        %v2644 = vcvt.s32.f32 %v2428
        %v2645 = vcvt.s32.f32 %v2429
        %v2646 = vcvt.s32.f32 %v2430
        %v2647 = vcvt.s32.f32 %v2431
        %v2648 = vcvt.s32.f32 %v2432
        %v2649 = vcvt.s32.f32 %v2433
        %v2650 = vcvt.s32.f32 %v2434
        %v2651 = vcvt.s32.f32 %v2435
        %v2652 = vcvt.s32.f32 %v2436
        %v2653 = vcvt.s32.f32 %v2437
        %v2654 = vcvt.s32.f32 %v2438
        %v2655 = vcvt.s32.f32 %v2439
        %v2656 = vcvt.s32.f32 %v2440
        %v2657 = vcvt.s32.f32 %v2441
        %v2658 = vcvt.s32.f32 %v2442
        %v2659 = vcvt.s32.f32 %v2443
        %v2660 = vcvt.s32.f32 %v2444
        %v2661 = vcvt.s32.f32 %v2445
        %v2662 = vcvt.s32.f32 %v2446
        %v2663 = vcvt.s32.f32 %v2447
        %v2664 = vcvt.s32.f32 %v2448
        %v2665 = vcvt.s32.f32 %v2449
        %v2666 = vcvt.s32.f32 %v2450
        %v2667 = vcvt.s32.f32 %v2451
        %v2668 = vcvt.s32.f32 %v2452
        %v2669 = vcvt.s32.f32 %v2453
        %v2670 = vcvt.s32.f32 %v2454
        %v2671 = vcvt.s32.f32 %v2455
        %v2672 = vcvt.s32.f32 %v2456
        %v2673 = vcvt.s32.f32 %v2457
        %v2674 = vcvt.s32.f32 %v2458
        %v2675 = vcvt.s32.f32 %v2459
        %v2676 = vcvt.s32.f32 %v2460
        %v2677 = vcvt.s32.f32 %v2461
        %v2678 = vcvt.s32.f32 %v2462
        %v2679 = vcvt.s32.f32 %v2463
        %v2680 = vcvt.s32.f32 %v2464
        %v2681 = vcvt.s32.f32 %v2465
        %v2682 = vcvt.s32.f32 %v2466
        %v2683 = vcvt.s32.f32 %v2467
        %v2684 = vcvt.s32.f32 %v2468
        %v2685 = vcvt.s32.f32 %v2469
        %v2686 = vcvt.s32.f32 %v2470
        %v2687 = vcvt.s32.f32 %v2471
        %v2688 = vcvt.s32.f32 %v2472
        %v2689 = vcvt.s32.f32 %v2473
        %v2690 = vcvt.s32.f32 %v2474
        %v2691 = vcvt.s32.f32 %v2475
        %v2692 = vcvt.s32.f32 %v2476
        %v2693 = vcvt.s32.f32 %v2477
        %v2694 = vcvt.s32.f32 %v2478
        %v2695 = vcvt.s32.f32 %v2479
        %v2696 = vcvt.s32.f32 %v2480
        %v2697 = vcvt.s32.f32 %v2481
        %v2698 = vcvt.s32.f32 %v2482
        %v2699 = vcvt.s32.f32 %v2483
        %v2700 = vcvt.s32.f32 %v2484
        %v2701 = vcvt.s32.f32 %v2485
        %v2702 = vcvt.s32.f32 %v2486
        %v2703 = vcvt.s32.f32 %v2487
        %2704 = vst [vmem:[%s54] sm:$0xff] %v2488
        %2705 = vst [vmem:[%s54 + $0x8] sm:$0xff] %v2489
        %2706 = vst [vmem:[%s54 + $0x10] sm:$0xff] %v2490
        %2707 = vst [vmem:[%s54 + $0x18] sm:$0xff] %v2491
        %2708 = vst [vmem:[%s54 + $0x20] sm:$0xff] %v2492
        %vm2709 = vcmask 654336
        %2710 = vst.msk [vmem:[%s54 + $0x28] sm:$0xff] %vm2709, %v2493
        %2711 = vst [vmem:[%s54 + $0x30] sm:$0xff] %v2494
        %2712 = vst [vmem:[%s54 + $0x38] sm:$0xff] %v2495
        %2713 = vst [vmem:[%s54 + $0x40] sm:$0xff] %v2496
        %2714 = vst [vmem:[%s54 + $0x48] sm:$0xff] %v2497
        %2715 = vst [vmem:[%s54 + $0x50] sm:$0xff] %v2498
        %2716 = vst.msk [vmem:[%s54 + $0x58] sm:$0xff] %vm2709, %v2499
        %2717 = vst [vmem:[%s54 + $0x60] sm:$0xff] %v2500
        %2718 = vst [vmem:[%s54 + $0x68] sm:$0xff] %v2501
        %2719 = vst [vmem:[%s54 + $0x70] sm:$0xff] %v2502
        %2720 = vst [vmem:[%s54 + $0x78] sm:$0xff] %v2503
        %2721 = vst [vmem:[%s54 + $0x80] sm:$0xff] %v2504
        %2722 = vst.msk [vmem:[%s54 + $0x88] sm:$0xff] %vm2709, %v2505
        %2723 = vst [vmem:[%s54 + $0x90] sm:$0xff] %v2506
        %2724 = vst [vmem:[%s54 + $0x98] sm:$0xff] %v2507
        %2725 = vst [vmem:[%s54 + $0xa0] sm:$0xff] %v2508
        %2726 = vst [vmem:[%s54 + $0xa8] sm:$0xff] %v2509
        %2727 = vst [vmem:[%s54 + $0xb0] sm:$0xff] %v2510
        %2728 = vst.msk [vmem:[%s54 + $0xb8] sm:$0xff] %vm2709, %v2511
        %2729 = vst [vmem:[%s54 + $0xc0] sm:$0xff] %v2512
        %2730 = vst [vmem:[%s54 + $0xc8] sm:$0xff] %v2513
        %2731 = vst [vmem:[%s54 + $0xd0] sm:$0xff] %v2514
        %2732 = vst [vmem:[%s54 + $0xd8] sm:$0xff] %v2515
        %2733 = vst [vmem:[%s54 + $0xe0] sm:$0xff] %v2516
        %2734 = vst.msk [vmem:[%s54 + $0xe8] sm:$0xff] %vm2709, %v2517
        %2735 = vst [vmem:[%s54 + $0xf0] sm:$0xff] %v2518
        %2736 = vst [vmem:[%s54 + $0xf8] sm:$0xff] %v2519
        %2737 = vst [vmem:[%s54 + $0x100] sm:$0xff] %v2520
        %2738 = vst [vmem:[%s54 + $0x108] sm:$0xff] %v2521
        %2739 = vst [vmem:[%s54 + $0x110] sm:$0xff] %v2522
        %2740 = vst.msk [vmem:[%s54 + $0x118] sm:$0xff] %vm2709, %v2523
        %2741 = vst [vmem:[%s54 + $0x120] sm:$0xff] %v2524
        %2742 = vst [vmem:[%s54 + $0x128] sm:$0xff] %v2525
        %2743 = vst [vmem:[%s54 + $0x130] sm:$0xff] %v2526
        %2744 = vst [vmem:[%s54 + $0x138] sm:$0xff] %v2527
        %2745 = vst [vmem:[%s54 + $0x140] sm:$0xff] %v2528
        %2746 = vst.msk [vmem:[%s54 + $0x148] sm:$0xff] %vm2709, %v2529
        %2747 = vst [vmem:[%s54 + $0x150] sm:$0xff] %v2530
        %2748 = vst [vmem:[%s54 + $0x158] sm:$0xff] %v2531
        %2749 = vst [vmem:[%s54 + $0x160] sm:$0xff] %v2532
        %2750 = vst [vmem:[%s54 + $0x168] sm:$0xff] %v2533
        %2751 = vst [vmem:[%s54 + $0x170] sm:$0xff] %v2534
        %2752 = vst.msk [vmem:[%s54 + $0x178] sm:$0xff] %vm2709, %v2535
        %2753 = vst [vmem:[%s54 + $0x180] sm:$0xff] %v2536
        %2754 = vst [vmem:[%s54 + $0x188] sm:$0xff] %v2537
        %2755 = vst [vmem:[%s54 + $0x190] sm:$0xff] %v2538
        %2756 = vst [vmem:[%s54 + $0x198] sm:$0xff] %v2539
        %2757 = vst [vmem:[%s54 + $0x1a0] sm:$0xff] %v2540
        %2758 = vst.msk [vmem:[%s54 + $0x1a8] sm:$0xff] %vm2709, %v2541
        %2759 = vst [vmem:[%s54 + $0x1b0] sm:$0xff] %v2542
        %2760 = vst [vmem:[%s54 + $0x1b8] sm:$0xff] %v2543
        %2761 = vst [vmem:[%s54 + $0x1c0] sm:$0xff] %v2544
        %2762 = vst [vmem:[%s54 + $0x1c8] sm:$0xff] %v2545
        %2763 = vst [vmem:[%s54 + $0x1d0] sm:$0xff] %v2546
        %2764 = vst.msk [vmem:[%s54 + $0x1d8] sm:$0xff] %vm2709, %v2547
        %2765 = vst [vmem:[%s54 + $0x1e0] sm:$0xff] %v2548
        %2766 = vst [vmem:[%s54 + $0x1e8] sm:$0xff] %v2549
        %2767 = vst [vmem:[%s54 + $0x1f0] sm:$0xff] %v2550
        %2768 = vst [vmem:[%s54 + $0x1f8] sm:$0xff] %v2551
        %2769 = vst [vmem:[%s54 + $0x200] sm:$0xff] %v2552
        %2770 = vst.msk [vmem:[%s54 + $0x208] sm:$0xff] %vm2709, %v2553
        %2771 = vst [vmem:[%s54 + $0x210] sm:$0xff] %v2554
        %2772 = vst [vmem:[%s54 + $0x218] sm:$0xff] %v2555
        %2773 = vst [vmem:[%s54 + $0x220] sm:$0xff] %v2556
        %2774 = vst [vmem:[%s54 + $0x228] sm:$0xff] %v2557
        %2775 = vst [vmem:[%s54 + $0x230] sm:$0xff] %v2558
        %2776 = vst.msk [vmem:[%s54 + $0x238] sm:$0xff] %vm2709, %v2559
        %2777 = vst [vmem:[%s54 + $0x240] sm:$0xff] %v2560
        %2778 = vst [vmem:[%s54 + $0x248] sm:$0xff] %v2561
        %2779 = vst [vmem:[%s54 + $0x250] sm:$0xff] %v2562
        %2780 = vst [vmem:[%s54 + $0x258] sm:$0xff] %v2563
        %2781 = vst [vmem:[%s54 + $0x260] sm:$0xff] %v2564
        %2782 = vst.msk [vmem:[%s54 + $0x268] sm:$0xff] %vm2709, %v2565
        %2783 = vst [vmem:[%s54 + $0x270] sm:$0xff] %v2566
        %2784 = vst [vmem:[%s54 + $0x278] sm:$0xff] %v2567
        %2785 = vst [vmem:[%s54 + $0x280] sm:$0xff] %v2568
        %2786 = vst [vmem:[%s54 + $0x288] sm:$0xff] %v2569
        %2787 = vst [vmem:[%s54 + $0x290] sm:$0xff] %v2570
        %2788 = vst.msk [vmem:[%s54 + $0x298] sm:$0xff] %vm2709, %v2571
        %2789 = vst [vmem:[%s54 + $0x2a0] sm:$0xff] %v2572
        %2790 = vst [vmem:[%s54 + $0x2a8] sm:$0xff] %v2573
        %2791 = vst [vmem:[%s54 + $0x2b0] sm:$0xff] %v2574
        %2792 = vst [vmem:[%s54 + $0x2b8] sm:$0xff] %v2575
        %2793 = vst [vmem:[%s54 + $0x2c0] sm:$0xff] %v2576
        %2794 = vst.msk [vmem:[%s54 + $0x2c8] sm:$0xff] %vm2709, %v2577
        %2795 = vst [vmem:[%s54 + $0x2d0] sm:$0xff] %v2578
        %2796 = vst [vmem:[%s54 + $0x2d8] sm:$0xff] %v2579
        %2797 = vst [vmem:[%s54 + $0x2e0] sm:$0xff] %v2580
        %2798 = vst [vmem:[%s54 + $0x2e8] sm:$0xff] %v2581
        %2799 = vst [vmem:[%s54 + $0x2f0] sm:$0xff] %v2582
        %2800 = vst.msk [vmem:[%s54 + $0x2f8] sm:$0xff] %vm2709, %v2583
        %2801 = vst [vmem:[%s54 + $0x300] sm:$0xff] %v2584
        %2802 = vst [vmem:[%s54 + $0x308] sm:$0xff] %v2585
        %2803 = vst [vmem:[%s54 + $0x310] sm:$0xff] %v2586
        %2804 = vst [vmem:[%s54 + $0x318] sm:$0xff] %v2587
        %2805 = vst [vmem:[%s54 + $0x320] sm:$0xff] %v2588
        %2806 = vst.msk [vmem:[%s54 + $0x328] sm:$0xff] %vm2709, %v2589
        %2807 = vst [vmem:[%s54 + $0x330] sm:$0xff] %v2590
        %2808 = vst [vmem:[%s54 + $0x338] sm:$0xff] %v2591
        %2809 = vst [vmem:[%s54 + $0x340] sm:$0xff] %v2592
        %2810 = vst [vmem:[%s54 + $0x348] sm:$0xff] %v2593
        %2811 = vst [vmem:[%s54 + $0x350] sm:$0xff] %v2594
        %2812 = vst.msk [vmem:[%s54 + $0x358] sm:$0xff] %vm2709, %v2595
        %2813 = vst [vmem:[%s54 + $0x360] sm:$0xff] %v2596
        %2814 = vst [vmem:[%s54 + $0x368] sm:$0xff] %v2597
        %2815 = vst [vmem:[%s54 + $0x370] sm:$0xff] %v2598
        %2816 = vst [vmem:[%s54 + $0x378] sm:$0xff] %v2599
        %2817 = vst [vmem:[%s54 + $0x380] sm:$0xff] %v2600
        %2818 = vst.msk [vmem:[%s54 + $0x388] sm:$0xff] %vm2709, %v2601
        %2819 = vst [vmem:[%s54 + $0x390] sm:$0xff] %v2602
        %2820 = vst [vmem:[%s54 + $0x398] sm:$0xff] %v2603
        %2821 = vst [vmem:[%s54 + $0x3a0] sm:$0xff] %v2604
        %2822 = vst [vmem:[%s54 + $0x3a8] sm:$0xff] %v2605
        %2823 = vst [vmem:[%s54 + $0x3b0] sm:$0xff] %v2606
        %2824 = vst.msk [vmem:[%s54 + $0x3b8] sm:$0xff] %vm2709, %v2607
        %2825 = vst [vmem:[%s54 + $0x3c0] sm:$0xff] %v2608
        %2826 = vst [vmem:[%s54 + $0x3c8] sm:$0xff] %v2609
        %2827 = vst [vmem:[%s54 + $0x3d0] sm:$0xff] %v2610
        %2828 = vst [vmem:[%s54 + $0x3d8] sm:$0xff] %v2611
        %2829 = vst [vmem:[%s54 + $0x3e0] sm:$0xff] %v2612
        %2830 = vst.msk [vmem:[%s54 + $0x3e8] sm:$0xff] %vm2709, %v2613
        %2831 = vst [vmem:[%s54 + $0x3f0] sm:$0xff] %v2614
        %2832 = vst [vmem:[%s54 + $0x3f8] sm:$0xff] %v2615
        %2833 = vst [vmem:[%s54 + $0x400] sm:$0xff] %v2616
        %2834 = vst [vmem:[%s54 + $0x408] sm:$0xff] %v2617
        %2835 = vst [vmem:[%s54 + $0x410] sm:$0xff] %v2618
        %2836 = vst.msk [vmem:[%s54 + $0x418] sm:$0xff] %vm2709, %v2619
        %2837 = vst [vmem:[%s54 + $0x420] sm:$0xff] %v2620
        %2838 = vst [vmem:[%s54 + $0x428] sm:$0xff] %v2621
        %2839 = vst [vmem:[%s54 + $0x430] sm:$0xff] %v2622
        %2840 = vst [vmem:[%s54 + $0x438] sm:$0xff] %v2623
        %2841 = vst [vmem:[%s54 + $0x440] sm:$0xff] %v2624
        %2842 = vst.msk [vmem:[%s54 + $0x448] sm:$0xff] %vm2709, %v2625
        %2843 = vst [vmem:[%s54 + $0x450] sm:$0xff] %v2626
        %2844 = vst [vmem:[%s54 + $0x458] sm:$0xff] %v2627
        %2845 = vst [vmem:[%s54 + $0x460] sm:$0xff] %v2628
        %2846 = vst [vmem:[%s54 + $0x468] sm:$0xff] %v2629
        %2847 = vst [vmem:[%s54 + $0x470] sm:$0xff] %v2630
        %2848 = vst.msk [vmem:[%s54 + $0x478] sm:$0xff] %vm2709, %v2631
        %2849 = vst [vmem:[%s54 + $0x480] sm:$0xff] %v2632
        %2850 = vst [vmem:[%s54 + $0x488] sm:$0xff] %v2633
        %2851 = vst [vmem:[%s54 + $0x490] sm:$0xff] %v2634
        %2852 = vst [vmem:[%s54 + $0x498] sm:$0xff] %v2635
        %2853 = vst [vmem:[%s54 + $0x4a0] sm:$0xff] %v2636
        %2854 = vst.msk [vmem:[%s54 + $0x4a8] sm:$0xff] %vm2709, %v2637
        %2855 = vst [vmem:[%s54 + $0x4b0] sm:$0xff] %v2638
        %2856 = vst [vmem:[%s54 + $0x4b8] sm:$0xff] %v2639
        %2857 = vst [vmem:[%s54 + $0x4c0] sm:$0xff] %v2640
        %2858 = vst [vmem:[%s54 + $0x4c8] sm:$0xff] %v2641
        %2859 = vst [vmem:[%s54 + $0x4d0] sm:$0xff] %v2642
        %2860 = vst.msk [vmem:[%s54 + $0x4d8] sm:$0xff] %vm2709, %v2643
        %2861 = vst [vmem:[%s54 + $0x4e0] sm:$0xff] %v2644
        %2862 = vst [vmem:[%s54 + $0x4e8] sm:$0xff] %v2645
        %2863 = vst [vmem:[%s54 + $0x4f0] sm:$0xff] %v2646
        %2864 = vst [vmem:[%s54 + $0x4f8] sm:$0xff] %v2647
        %2865 = vst [vmem:[%s54 + $0x500] sm:$0xff] %v2648
        %2866 = vst.msk [vmem:[%s54 + $0x508] sm:$0xff] %vm2709, %v2649
        %2867 = vst [vmem:[%s54 + $0x510] sm:$0xff] %v2650
        %2868 = vst [vmem:[%s54 + $0x518] sm:$0xff] %v2651
        %2869 = vst [vmem:[%s54 + $0x520] sm:$0xff] %v2652
        %2870 = vst [vmem:[%s54 + $0x528] sm:$0xff] %v2653
        %2871 = vst [vmem:[%s54 + $0x530] sm:$0xff] %v2654
        %2872 = vst.msk [vmem:[%s54 + $0x538] sm:$0xff] %vm2709, %v2655
        %2873 = vst [vmem:[%s54 + $0x540] sm:$0xff] %v2656
        %2874 = vst [vmem:[%s54 + $0x548] sm:$0xff] %v2657
        %2875 = vst [vmem:[%s54 + $0x550] sm:$0xff] %v2658
        %2876 = vst [vmem:[%s54 + $0x558] sm:$0xff] %v2659
        %2877 = vst [vmem:[%s54 + $0x560] sm:$0xff] %v2660
        %2878 = vst.msk [vmem:[%s54 + $0x568] sm:$0xff] %vm2709, %v2661
        %2879 = vst [vmem:[%s54 + $0x570] sm:$0xff] %v2662
        %2880 = vst [vmem:[%s54 + $0x578] sm:$0xff] %v2663
        %2881 = vst [vmem:[%s54 + $0x580] sm:$0xff] %v2664
        %2882 = vst [vmem:[%s54 + $0x588] sm:$0xff] %v2665
        %2883 = vst [vmem:[%s54 + $0x590] sm:$0xff] %v2666
        %2884 = vst.msk [vmem:[%s54 + $0x598] sm:$0xff] %vm2709, %v2667
        %2885 = vst [vmem:[%s54 + $0x5a0] sm:$0xff] %v2668
        %2886 = vst [vmem:[%s54 + $0x5a8] sm:$0xff] %v2669
        %2887 = vst [vmem:[%s54 + $0x5b0] sm:$0xff] %v2670
        %2888 = vst [vmem:[%s54 + $0x5b8] sm:$0xff] %v2671
        %2889 = vst [vmem:[%s54 + $0x5c0] sm:$0xff] %v2672
        %2890 = vst.msk [vmem:[%s54 + $0x5c8] sm:$0xff] %vm2709, %v2673
        %2891 = vst [vmem:[%s54 + $0x5d0] sm:$0xff] %v2674
        %2892 = vst [vmem:[%s54 + $0x5d8] sm:$0xff] %v2675
        %2893 = vst [vmem:[%s54 + $0x5e0] sm:$0xff] %v2676
        %2894 = vst [vmem:[%s54 + $0x5e8] sm:$0xff] %v2677
        %2895 = vst [vmem:[%s54 + $0x5f0] sm:$0xff] %v2678
        %2896 = vst.msk [vmem:[%s54 + $0x5f8] sm:$0xff] %vm2709, %v2679
        %2897 = vst [vmem:[%s54 + $0x600] sm:$0xff] %v2680
        %2898 = vst [vmem:[%s54 + $0x608] sm:$0xff] %v2681
        %2899 = vst [vmem:[%s54 + $0x610] sm:$0xff] %v2682
        %2900 = vst [vmem:[%s54 + $0x618] sm:$0xff] %v2683
        %2901 = vst [vmem:[%s54 + $0x620] sm:$0xff] %v2684
        %2902 = vst.msk [vmem:[%s54 + $0x628] sm:$0xff] %vm2709, %v2685
        %2903 = vst [vmem:[%s54 + $0x630] sm:$0xff] %v2686
        %2904 = vst [vmem:[%s54 + $0x638] sm:$0xff] %v2687
        %2905 = vst [vmem:[%s54 + $0x640] sm:$0xff] %v2688
        %2906 = vst [vmem:[%s54 + $0x648] sm:$0xff] %v2689
        %2907 = vst [vmem:[%s54 + $0x650] sm:$0xff] %v2690
        %2908 = vst.msk [vmem:[%s54 + $0x658] sm:$0xff] %vm2709, %v2691
        %2909 = vst [vmem:[%s54 + $0x660] sm:$0xff] %v2692
        %2910 = vst [vmem:[%s54 + $0x668] sm:$0xff] %v2693
        %2911 = vst [vmem:[%s54 + $0x670] sm:$0xff] %v2694
        %2912 = vst [vmem:[%s54 + $0x678] sm:$0xff] %v2695
        %2913 = vst [vmem:[%s54 + $0x680] sm:$0xff] %v2696
        %2914 = vst.msk [vmem:[%s54 + $0x688] sm:$0xff] %vm2709, %v2697
        %2915 = vst [vmem:[%s54 + $0x690] sm:$0xff] %v2698
        %2916 = vst [vmem:[%s54 + $0x698] sm:$0xff] %v2699
        %2917 = vst [vmem:[%s54 + $0x6a0] sm:$0xff] %v2700
        %2918 = vst [vmem:[%s54 + $0x6a8] sm:$0xff] %v2701
        %2919 = vst [vmem:[%s54 + $0x6b0] sm:$0xff] %v2702
        %2920 = vst.msk [vmem:[%s54 + $0x6b8] sm:$0xff] %vm2709, %v2703
        %s2921 = sand.u32 %s27, 1
        %s2922 = scalar_lea.sflag [#allocation5], %s2921
        %s2923 = sand.u32 %s27, 1
        %s2924 = smul.addr %s2923, 1728
        %s2925 = scalar_lea.vmem [#allocation4], %s2924
        // Predicated region
        $region13: #{lightmark_forward.1} parent=11 // pred_check
          %p2926 = pneg %p33
        $region14: #{lightmark_forward.1} parent=11 // pred_check_branch
          %2928 = sbr.rel (%p2926) target = $region16
        $region15: #{lightmark_forward.1} parent=11 // pred_region
          %s2929 = smul.u32 36, %s18
          %2931 = vsyncadd %s2922, 0
          %s2932 = smul.addr %s2929, 6
          %s2933 = smul.addr %s2932, 8
          %s2934 = scalar_lea.hbm %s1, %s2933
          %s2935 = sshll.u32 %s2925, 4
          %s2936 = int_to_ptr.vmem [resolvable:$true] %s2935
          %s2937 = sshll.u32 %s2934, 4
          %s2938 = int_to_ptr.hbm [resolvable:$true] %s2937
          %2943 = dma.vmem_to_hbm [thread:$0]  %s2936, 27648, %s2938, %s2922, 768, 768, 48
        $region16: #{lightmark_forward.1} parent=11 // pred_fallthru
          _
      $region12: #{lightmark_forward.1} parent=5 // pred_fallthru
        _
      %p2944 = scmp.le.s32.totalorder 1, %s18
      // Predicated region
      $region17: #{lightmark_forward.1} parent=5 // pred_check
        %p2945 = pneg %p2944
      $region18: #{lightmark_forward.1} parent=5 // pred_check_branch
        %2947 = sbr.rel (%p2945) target = $region20
      $region19: #{lightmark_forward.1} parent=5 // pred_region
        %s2948 = ssub.s32 %s18, 1
        // Predicated region
        $region21: #{lightmark_forward.1} parent=19 // pred_check
          %p2949 = pneg %p39
        $region22: #{lightmark_forward.1} parent=19 // pred_check_branch
          %2951 = sbr.rel (%p2949) target = $region24
        $region23: #{lightmark_forward.1} parent=19 // pred_region
          %s2952 = sand.u32 %s30, 1
          %s2953 = scalar_lea.sflag [#allocation5], %s2952
          %s2954 = sand.u32 %s30, 1
          %s2955 = smul.addr %s2954, 1728
          %s2956 = scalar_lea.vmem [#allocation4], %s2955
          %2958 = dma.done %s2953, 27648
        $region24: #{lightmark_forward.1} parent=19 // pred_fallthru
          _
      $region20: #{lightmark_forward.1} parent=5 // pred_fallthru
        _
    $region6: #{lightmark_forward.1} parent=1 // loop_footer
      %s22 = sadd.s32 1, %s18
    $region7: #{lightmark_forward.1} parent=1 // loop_footer_branch
      %17 = sbr.rel target = $region3
    $region8: #{lightmark_forward.1} parent=1 // loop_exit
      _
    %2959 = vsyncpa [#allocation5], 1
    %s2960 = scalar_lea.sflag [#allocation5], 1
    %2961 = vsyncpa %s2960, 1

</llo_original>
